<compile_context>
chip_gen: v6e
topology: v6e:2x2x1
jax: 0.10.0
libtpu: 0.0.40
codegen_flags: <defaults>
</compile_context>

<pallas_src>
import jax
import jax.numpy as jnp
from jax import lax
from jax.experimental import pallas as pl
from jax.experimental.pallas import tpu as pltpu


def _sigmoid(x):
    # logistic(x) == 0.5 * (tanh(x/2) + 1): tanh goes to the EUP (separate VLIW slot),
    # avoids an f32 divide on the VPU and inf intermediates for large |x|.
    return 0.5 * (jnp.tanh(0.5 * x) + 1.0)


def _make_encoder_kernel(num_layers: int, seq_len: int, batch: int, hidden_size: int):
    """Single-invocation kernel: all layers, all time steps."""
    H = hidden_size
    B = batch

    def kernel(emb_ref, h0_ref, c0_ref, *rest):
        n_param = 3 * num_layers
        param_refs = rest[:n_param]                    # (w_ihT, w_hhT, bias) per layer
        hiddens_ref = rest[n_param + 0]                # (num_layers, seq_len*batch, H)
        cells_ref = rest[n_param + 1]                  # (num_layers, seq_len*batch, H)
        gx_ref = rest[n_param + 2]                     # VMEM scratch (seq_len*batch, 4H)

        for l in range(num_layers):
            w_ihT = param_refs[3 * l + 0][...]         # (in_dim, 4H)  pre-transposed
            w_hhT = param_refs[3 * l + 1][...]         # (H, 4H)       pre-transposed
            bias = param_refs[3 * l + 2][...]          # (1, 4H)       b_ih + b_hh fused

            # Layer l's input for every time step: the embeddings (l == 0) or the previous
            # layer's per-step hidden states, already resident in the output block.
            x_all = emb_ref[...] if l == 0 else hiddens_ref[l - 1]   # (S*B, in_dim)

            # One MXU-friendly matmul for the input-to-hidden gates of ALL time steps,
            # bias folded in once (hoisted out of the recurrence).
            gx_ref[...] = (
                jnp.dot(x_all, w_ihT, preferred_element_type=jnp.float32) + bias
            )

            def step(t, carry, l=l, w_hhT=w_hhT):
                h_prev, c_prev = carry                 # (B, H) each, carried in vregs
                row = pl.multiple_of(t * B, B)
                gates = gx_ref[pl.ds(row, B), :] + jnp.dot(
                    h_prev, w_hhT, preferred_element_type=jnp.float32
                )                                      # (B, 4H)

                # PyTorch LSTM gate order: i, f, g, o.
                i_g = _sigmoid(gates[:, 0 * H:1 * H])
                f_g = _sigmoid(gates[:, 1 * H:2 * H])
                g_g = jnp.tanh(gates[:, 2 * H:3 * H])
                o_g = _sigmoid(gates[:, 3 * H:4 * H])

                c_new = f_g * c_prev + i_g * g_g
                h_new = o_g * jnp.tanh(c_new)

                hiddens_ref[l, pl.ds(row, B), :] = h_new
                cells_ref[l, pl.ds(row, B), :] = c_new
                return h_new, c_new

            lax.fori_loop(
                0, seq_len, step, (h0_ref[l], c0_ref[l]), unroll=True
            )
            # TODO(synk): nn.LSTM inter-layer dropout (and self.drop on the embedding) are
            # train-mode only; this kernel implements eval-mode (identity) dropout.

    return kernel


def encoder_forward(x_ids, embed_table, lstm_params, h0, c0):
    """Pallas-backed forward pass matching encoder.forward (eval mode).

    Args:
      x_ids       : (seq_len, batch) int32 token ids.
      embed_table : (vocab, embed) f32 embedding matrix.
      lstm_params : list of (w_ih, w_hh, b_ih, b_hh) per layer (PyTorch shapes).
      h0, c0      : (num_layers, batch, hidden) f32 initial state (torch.randn analog).

    Returns (outputs, hiddens, cells) with the same shapes as the PyTorch module.
    """
    seq_len, batch = x_ids.shape
    embed_size = embed_table.shape[1]
    num_layers = len(lstm_params)
    hidden_size = lstm_params[0][1].shape[1]           # w_hh: (4H, H)

    # Glue: embedding lookup (gather) + eval-mode dropout = identity.
    emb = embed_table[x_ids].astype(jnp.float32)       # (S, B, E)
    emb_flat = emb.reshape(seq_len * batch, embed_size)  # M = seq_len*batch for the matmul

    # Host-side weight prep: transpose + fuse biases (no in-kernel transposes / two adds).
    # NOTE: on v6e/v7x these could additionally be cast to bf16 for the matmuls.
    flat_params = []
    in_specs = [
        pl.BlockSpec((seq_len * batch, embed_size), lambda i: (0, 0)),
        pl.BlockSpec((num_layers, batch, hidden_size), lambda i: (0, 0, 0)),
        pl.BlockSpec((num_layers, batch, hidden_size), lambda i: (0, 0, 0)),
    ]
    for (w_ih, w_hh, b_ih, b_hh) in lstm_params:
        w_ihT = jnp.asarray(w_ih).T                    # (in_dim, 4H)
        w_hhT = jnp.asarray(w_hh).T                    # (H, 4H)
        bias = (jnp.asarray(b_ih) + jnp.asarray(b_hh)).reshape(1, -1)  # (1, 4H)
        flat_params += [w_ihT, w_hhT, bias]
        in_specs += [
            pl.BlockSpec(tuple(w_ihT.shape), lambda i: (0, 0)),
            pl.BlockSpec(tuple(w_hhT.shape), lambda i: (0, 0)),
            pl.BlockSpec((1, 4 * hidden_size), lambda i: (0, 0)),
        ]

    out_shape = (
        jax.ShapeDtypeStruct((num_layers, seq_len * batch, hidden_size), jnp.float32),
        jax.ShapeDtypeStruct((num_layers, seq_len * batch, hidden_size), jnp.float32),
    )
    out_specs = (
        pl.BlockSpec((num_layers, seq_len * batch, hidden_size), lambda i: (0, 0, 0)),
        pl.BlockSpec((num_layers, seq_len * batch, hidden_size), lambda i: (0, 0, 0)),
    )

    kernel = _make_encoder_kernel(num_layers, seq_len, batch, hidden_size)

    hiddens_flat, cells_flat = pl.pallas_call(
        kernel,
        out_shape=out_shape,
        grid_spec=pltpu.PrefetchScalarGridSpec(
            num_scalar_prefetch=0,
            grid=(1,),                                 # single step: everything VMEM-resident
            in_specs=in_specs,
            out_specs=out_specs,
            scratch_shapes=[
                pltpu.VMEM((seq_len * batch, 4 * hidden_size), jnp.float32),  # gates_x
            ],
        ),
        compiler_params=pltpu.CompilerParams(
            dimension_semantics=("arbitrary",),
        ),
    )(emb_flat, h0, c0, *flat_params)

    # (L, S*B, H) -> (S, L, B, H), matching the PyTorch module's layouts.
    hiddens = hiddens_flat.reshape(num_layers, seq_len, batch, hidden_size).transpose(
        1, 0, 2, 3
    )
    cells = cells_flat.reshape(num_layers, seq_len, batch, hidden_size).transpose(
        1, 0, 2, 3
    )
    # `outputs` is exactly the top layer's hidden state per step: slice, don't recompute.
    outputs = hiddens[:, num_layers - 1:num_layers]    # (S, 1, B, H)
    return outputs, hiddens, cells


def _init_params(key, vocab_size, embed_size, hidden_size, num_layers):
    """Deterministic parameter init mirroring nn.Embedding / nn.LSTM shapes."""
    keys = jax.random.split(key, 1 + 4 * num_layers)
    embed_table = jax.random.normal(keys[0], (vocab_size, embed_size), jnp.float32)
    k = 1.0 / jnp.sqrt(hidden_size)
    params = []
    for l in range(num_layers):
        in_dim = embed_size if l == 0 else hidden_size
        kw = keys[1 + 4 * l:1 + 4 * (l + 1)]
        w_ih = jax.random.uniform(kw[0], (4 * hidden_size, in_dim), jnp.float32, -k, k)
        w_hh = jax.random.uniform(kw[1], (4 * hidden_size, hidden_size), jnp.float32, -k, k)
        b_ih = jax.random.uniform(kw[2], (4 * hidden_size,), jnp.float32, -k, k)
        b_hh = jax.random.uniform(kw[3], (4 * hidden_size,), jnp.float32, -k, k)
        params.append((w_ih, w_hh, b_ih, b_hh))
    return embed_table, params


if __name__ == "__main__":
    vocab_size, embed_size, hidden_size, num_layers = 50, 32, 32, 2
    seq_len, batch = 8, 4

    root = jax.random.PRNGKey(0)
    k_param, k_x, k_h, k_c = jax.random.split(root, 4)

    embed_table, lstm_params = _init_params(
        k_param, vocab_size, embed_size, hidden_size, num_layers)

    x_ids = jax.random.randint(k_x, (seq_len, batch), 0, vocab_size, dtype=jnp.int32)
    # torch.randn initial hidden / cell (generated deterministically host-side).
    h0 = jax.random.normal(k_h, (num_layers, batch, hidden_size), jnp.float32)
    c0 = jax.random.normal(k_c, (num_layers, batch, hidden_size), jnp.float32)

    outputs, hiddens, cells = encoder_forward(x_ids, embed_table, lstm_params, h0, c0)
    jax.block_until_ready((outputs, hiddens, cells))

    assert outputs.shape == (seq_len, 1, batch, hidden_size)
    assert hiddens.shape == (seq_len, num_layers, batch, hidden_size)
    assert cells.shape == (seq_len, num_layers, batch, hidden_size)
    print("KERNEL_OK")
</pallas_src>

<mosaic_0001>
module attributes {stable_mosaic.version = 11 : i64} {
  func.func @kernel(%arg0: i32, %arg1: memref<32x32xf32, #tpu.memory_space<vmem>>, %arg2: memref<2x4x32xf32, #tpu.memory_space<vmem>>, %arg3: memref<2x4x32xf32, #tpu.memory_space<vmem>>, %arg4: memref<32x128xf32, #tpu.memory_space<vmem>>, %arg5: memref<32x128xf32, #tpu.memory_space<vmem>>, %arg6: memref<1x128xf32, #tpu.memory_space<vmem>>, %arg7: memref<32x128xf32, #tpu.memory_space<vmem>>, %arg8: memref<32x128xf32, #tpu.memory_space<vmem>>, %arg9: memref<1x128xf32, #tpu.memory_space<vmem>>, %arg10: memref<2x32x32xf32, #tpu.memory_space<vmem>>, %arg11: memref<2x32x32xf32, #tpu.memory_space<vmem>>, %arg12: memref<32x128xf32, #tpu.memory_space<vmem>>) attributes {dimension_semantics = [#tpu.dimension_semantics<arbitrary>], iteration_bounds = array<i64: 1>, scalar_prefetch = 0 : i64, scratch_operands = 1 : i64, tpu.core_type = #tpu.core_type<tc>, window_params = [{pipeline_mode = #tpu.pipeline_mode<synchronous>, transform_indices = @transform_0, window_bounds = array<i64: 32, 32>}, {pipeline_mode = #tpu.pipeline_mode<synchronous>, transform_indices = @transform_1, window_bounds = array<i64: 2, 4, 32>}, {pipeline_mode = #tpu.pipeline_mode<synchronous>, transform_indices = @transform_2, window_bounds = array<i64: 2, 4, 32>}, {pipeline_mode = #tpu.pipeline_mode<synchronous>, transform_indices = @transform_3, window_bounds = array<i64: 32, 128>}, {pipeline_mode = #tpu.pipeline_mode<synchronous>, transform_indices = @transform_4, window_bounds = array<i64: 32, 128>}, {pipeline_mode = #tpu.pipeline_mode<synchronous>, transform_indices = @transform_5, window_bounds = array<i64: 1, 128>}, {pipeline_mode = #tpu.pipeline_mode<synchronous>, transform_indices = @transform_6, window_bounds = array<i64: 32, 128>}, {pipeline_mode = #tpu.pipeline_mode<synchronous>, transform_indices = @transform_7, window_bounds = array<i64: 32, 128>}, {pipeline_mode = #tpu.pipeline_mode<synchronous>, transform_indices = @transform_8, window_bounds = array<i64: 1, 128>}, {pipeline_mode = #tpu.pipeline_mode<synchronous>, transform_indices = @transform_9, window_bounds = array<i64: 2, 32, 32>}, {pipeline_mode = #tpu.pipeline_mode<synchronous>, transform_indices = @transform_10, window_bounds = array<i64: 2, 32, 32>}]} {
    %c0 = arith.constant 0 : index
    %c0_0 = arith.constant 0 : index
    %0 = vector.load %arg4[%c0, %c0_0] : memref<32x128xf32, #tpu.memory_space<vmem>>, vector<32x128xf32>
    %c0_1 = arith.constant 0 : index
    %c0_2 = arith.constant 0 : index
    %1 = vector.load %arg5[%c0_1, %c0_2] : memref<32x128xf32, #tpu.memory_space<vmem>>, vector<32x128xf32>
    %c0_3 = arith.constant 0 : index
    %c0_4 = arith.constant 0 : index
    %2 = vector.load %arg6[%c0_3, %c0_4] : memref<1x128xf32, #tpu.memory_space<vmem>>, vector<1x128xf32>
    %c0_5 = arith.constant 0 : index
    %c0_6 = arith.constant 0 : index
    %3 = vector.load %arg1[%c0_5, %c0_6] : memref<32x32xf32, #tpu.memory_space<vmem>>, vector<32x32xf32>
    %cst = arith.constant dense<0.000000e+00> : vector<32x128xf32>
    %4 = tpu.matmul %3, %0, %cst {dimension_numbers = #tpu.dot_dimension_numbers<[1], [0], [0], [1], [0, 0, 1, 1], [], []>} : vector<32x32xf32>, vector<32x128xf32>, vector<32x128xf32> -> vector<32x128xf32>
    %5 = vector.broadcast %2 : vector<1x128xf32> to vector<32x128xf32>
    %6 = arith.addf %4, %5 : vector<32x128xf32>
    %c0_7 = arith.constant 0 : index
    %c0_8 = arith.constant 0 : index
    %7 = vector.load %arg12[%c0_7, %c0_8] : memref<32x128xf32, #tpu.memory_space<vmem>>, vector<32x128xf32>
    tpu.vector_store %arg12[%c0_7, %c0_8], %6 {strides = array<i32>} : memref<32x128xf32, #tpu.memory_space<vmem>>, vector<32x128xf32>,
    %c0_9 = arith.constant 0 : index
    %c0_10 = arith.constant 0 : index
    %c0_11 = arith.constant 0 : index
    %8 = vector.load %arg2[%c0_9, %c0_10, %c0_11] : memref<2x4x32xf32, #tpu.memory_space<vmem>>, vector<1x4x32xf32>
    %9 = vector.shape_cast %8 : vector<1x4x32xf32> to vector<4x32xf32>
    %c0_12 = arith.constant 0 : index
    %c0_13 = arith.constant 0 : index
    %c0_14 = arith.constant 0 : index
    %10 = vector.load %arg3[%c0_12, %c0_13, %c0_14] : memref<2x4x32xf32, #tpu.memory_space<vmem>>, vector<1x4x32xf32>
    %11 = vector.shape_cast %10 : vector<1x4x32xf32> to vector<4x32xf32>
    %c0_i32 = arith.constant 0 : i32
    %c4_i32 = arith.constant 4 : i32
    %12 = arith.muli %c0_i32, %c4_i32 : i32
    %13 = tpu.assume_multiple %12, 4 : i32
    %14 = arith.index_cast %13 : i32 to index
    %c0_15 = arith.constant 0 : index
    %15 = vector.load %arg12[%14, %c0_15] : memref<32x128xf32, #tpu.memory_space<vmem>>, vector<4x128xf32>
    %cst_16 = arith.constant dense<0.000000e+00> : vector<4x128xf32>
    %16 = tpu.matmul %9, %1, %cst_16 {dimension_numbers = #tpu.dot_dimension_numbers<[1], [0], [0], [1], [0, 0, 1, 1], [], []>} : vector<4x32xf32>, vector<32x128xf32>, vector<4x128xf32> -> vector<4x128xf32>
    %17 = arith.addf %15, %16 : vector<4x128xf32>
    %18 = vector.extract_strided_slice %17 {offsets = [0, 0], sizes = [4, 32], strides = [1, 1]} : vector<4x128xf32> to vector<4x32xf32>
    %cst_17 = arith.constant 5.000000e-01 : f32
    %19 = vector.broadcast %cst_17 : f32 to vector<4x32xf32>
    %20 = arith.mulf %19, %18 : vector<4x32xf32>
    %21 = math.tanh %20 : vector<4x32xf32>
    %cst_18 = arith.constant 1.000000e+00 : f32
    %22 = vector.broadcast %cst_18 : f32 to vector<4x32xf32>
    %23 = arith.addf %21, %22 : vector<4x32xf32>
    %cst_19 = arith.constant 5.000000e-01 : f32
    %24 = vector.broadcast %cst_19 : f32 to vector<4x32xf32>
    %25 = arith.mulf %24, %23 : vector<4x32xf32>
    %26 = vector.extract_strided_slice %17 {offsets = [0, 32], sizes = [4, 32], strides = [1, 1]} : vector<4x128xf32> to vector<4x32xf32>
    %cst_20 = arith.constant 5.000000e-01 : f32
    %27 = vector.broadcast %cst_20 : f32 to vector<4x32xf32>
    %28 = arith.mulf %27, %26 : vector<4x32xf32>
    %29 = math.tanh %28 : vector<4x32xf32>
    %cst_21 = arith.constant 1.000000e+00 : f32
    %30 = vector.broadcast %cst_21 : f32 to vector<4x32xf32>
    %31 = arith.addf %29, %30 : vector<4x32xf32>
    %cst_22 = arith.constant 5.000000e-01 : f32
    %32 = vector.broadcast %cst_22 : f32 to vector<4x32xf32>
    %33 = arith.mulf %32, %31 : vector<4x32xf32>
    %34 = vector.extract_strided_slice %17 {offsets = [0, 64], sizes = [4, 32], strides = [1, 1]} : vector<4x128xf32> to vector<4x32xf32>
    %35 = math.tanh %34 : vector<4x32xf32>
    %36 = vector.extract_strided_slice %17 {offsets = [0, 96], sizes = [4, 32], strides = [1, 1]} : vector<4x128xf32> to vector<4x32xf32>
    %cst_23 = arith.constant 5.000000e-01 : f32
    %37 = vector.broadcast %cst_23 : f32 to vector<4x32xf32>
    %38 = arith.mulf %37, %36 : vector<4x32xf32>
    %39 = math.tanh %38 : vector<4x32xf32>
    %cst_24 = arith.constant 1.000000e+00 : f32
    %40 = vector.broadcast %cst_24 : f32 to vector<4x32xf32>
    %41 = arith.addf %39, %40 : vector<4x32xf32>
    %cst_25 = arith.constant 5.000000e-01 : f32
    %42 = vector.broadcast %cst_25 : f32 to vector<4x32xf32>
    %43 = arith.mulf %42, %41 : vector<4x32xf32>
    %44 = arith.mulf %33, %11 : vector<4x32xf32>
    %45 = arith.mulf %25, %35 : vector<4x32xf32>
    %46 = arith.addf %44, %45 : vector<4x32xf32>
    %47 = math.tanh %46 : vector<4x32xf32>
    %48 = arith.mulf %43, %47 : vector<4x32xf32>
    %c0_26 = arith.constant 0 : index
    %49 = arith.index_cast %13 : i32 to index
    %c0_27 = arith.constant 0 : index
    %50 = vector.load %arg10[%c0_26, %49, %c0_27] : memref<2x32x32xf32, #tpu.memory_space<vmem>>, vector<1x4x32xf32>
    %51 = vector.shape_cast %50 : vector<1x4x32xf32> to vector<4x32xf32>
    %52 = vector.shape_cast %48 : vector<4x32xf32> to vector<1x4x32xf32>
    tpu.vector_store %arg10[%c0_26, %49, %c0_27], %52 {strides = array<i32>} : memref<2x32x32xf32, #tpu.memory_space<vmem>>, vector<1x4x32xf32>,
    %c0_28 = arith.constant 0 : index
    %53 = arith.index_cast %13 : i32 to index
    %c0_29 = arith.constant 0 : index
    %54 = vector.load %arg11[%c0_28, %53, %c0_29] : memref<2x32x32xf32, #tpu.memory_space<vmem>>, vector<1x4x32xf32>
    %55 = vector.shape_cast %54 : vector<1x4x32xf32> to vector<4x32xf32>
    %56 = vector.shape_cast %46 : vector<4x32xf32> to vector<1x4x32xf32>
    tpu.vector_store %arg11[%c0_28, %53, %c0_29], %56 {strides = array<i32>} : memref<2x32x32xf32, #tpu.memory_space<vmem>>, vector<1x4x32xf32>,
    %c1_i32 = arith.constant 1 : i32
    %c4_i32_30 = arith.constant 4 : i32
    %57 = arith.muli %c1_i32, %c4_i32_30 : i32
    %58 = tpu.assume_multiple %57, 4 : i32
    %59 = arith.index_cast %58 : i32 to index
    %c0_31 = arith.constant 0 : index
    %60 = vector.load %arg12[%59, %c0_31] : memref<32x128xf32, #tpu.memory_space<vmem>>, vector<4x128xf32>
    %cst_32 = arith.constant dense<0.000000e+00> : vector<4x128xf32>
    %61 = tpu.matmul %48, %1, %cst_32 {dimension_numbers = #tpu.dot_dimension_numbers<[1], [0], [0], [1], [0, 0, 1, 1], [], []>} : vector<4x32xf32>, vector<32x128xf32>, vector<4x128xf32> -> vector<4x128xf32>
    %62 = arith.addf %60, %61 : vector<4x128xf32>
    %63 = vector.extract_strided_slice %62 {offsets = [0, 0], sizes = [4, 32], strides = [1, 1]} : vector<4x128xf32> to vector<4x32xf32>
    %cst_33 = arith.constant 5.000000e-01 : f32
    %64 = vector.broadcast %cst_33 : f32 to vector<4x32xf32>
    %65 = arith.mulf %64, %63 : vector<4x32xf32>
    %66 = math.tanh %65 : vector<4x32xf32>
    %cst_34 = arith.constant 1.000000e+00 : f32
    %67 = vector.broadcast %cst_34 : f32 to vector<4x32xf32>
    %68 = arith.addf %66, %67 : vector<4x32xf32>
    %cst_35 = arith.constant 5.000000e-01 : f32
    %69 = vector.broadcast %cst_35 : f32 to vector<4x32xf32>
    %70 = arith.mulf %69, %68 : vector<4x32xf32>
    %71 = vector.extract_strided_slice %62 {offsets = [0, 32], sizes = [4, 32], strides = [1, 1]} : vector<4x128xf32> to vector<4x32xf32>
    %cst_36 = arith.constant 5.000000e-01 : f32
    %72 = vector.broadcast %cst_36 : f32 to vector<4x32xf32>
    %73 = arith.mulf %72, %71 : vector<4x32xf32>
    %74 = math.tanh %73 : vector<4x32xf32>
    %cst_37 = arith.constant 1.000000e+00 : f32
    %75 = vector.broadcast %cst_37 : f32 to vector<4x32xf32>
    %76 = arith.addf %74, %75 : vector<4x32xf32>
    %cst_38 = arith.constant 5.000000e-01 : f32
    %77 = vector.broadcast %cst_38 : f32 to vector<4x32xf32>
    %78 = arith.mulf %77, %76 : vector<4x32xf32>
    %79 = vector.extract_strided_slice %62 {offsets = [0, 64], sizes = [4, 32], strides = [1, 1]} : vector<4x128xf32> to vector<4x32xf32>
    %80 = math.tanh %79 : vector<4x32xf32>
    %81 = vector.extract_strided_slice %62 {offsets = [0, 96], sizes = [4, 32], strides = [1, 1]} : vector<4x128xf32> to vector<4x32xf32>
    %cst_39 = arith.constant 5.000000e-01 : f32
    %82 = vector.broadcast %cst_39 : f32 to vector<4x32xf32>
    %83 = arith.mulf %82, %81 : vector<4x32xf32>
    %84 = math.tanh %83 : vector<4x32xf32>
    %cst_40 = arith.constant 1.000000e+00 : f32
    %85 = vector.broadcast %cst_40 : f32 to vector<4x32xf32>
    %86 = arith.addf %84, %85 : vector<4x32xf32>
    %cst_41 = arith.constant 5.000000e-01 : f32
    %87 = vector.broadcast %cst_41 : f32 to vector<4x32xf32>
    %88 = arith.mulf %87, %86 : vector<4x32xf32>
    %89 = arith.mulf %78, %46 : vector<4x32xf32>
    %90 = arith.mulf %70, %80 : vector<4x32xf32>
    %91 = arith.addf %89, %90 : vector<4x32xf32>
    %92 = math.tanh %91 : vector<4x32xf32>
    %93 = arith.mulf %88, %92 : vector<4x32xf32>
    %c0_42 = arith.constant 0 : index
    %94 = arith.index_cast %58 : i32 to index
    %c0_43 = arith.constant 0 : index
    %95 = vector.load %arg10[%c0_42, %94, %c0_43] : memref<2x32x32xf32, #tpu.memory_space<vmem>>, vector<1x4x32xf32>
    %96 = vector.shape_cast %95 : vector<1x4x32xf32> to vector<4x32xf32>
    %97 = vector.shape_cast %93 : vector<4x32xf32> to vector<1x4x32xf32>
    tpu.vector_store %arg10[%c0_42, %94, %c0_43], %97 {strides = array<i32>} : memref<2x32x32xf32, #tpu.memory_space<vmem>>, vector<1x4x32xf32>,
    %c0_44 = arith.constant 0 : index
    %98 = arith.index_cast %58 : i32 to index
    %c0_45 = arith.constant 0 : index
    %99 = vector.load %arg11[%c0_44, %98, %c0_45] : memref<2x32x32xf32, #tpu.memory_space<vmem>>, vector<1x4x32xf32>
    %100 = vector.shape_cast %99 : vector<1x4x32xf32> to vector<4x32xf32>
    %101 = vector.shape_cast %91 : vector<4x32xf32> to vector<1x4x32xf32>
    tpu.vector_store %arg11[%c0_44, %98, %c0_45], %101 {strides = array<i32>} : memref<2x32x32xf32, #tpu.memory_space<vmem>>, vector<1x4x32xf32>,
    %c2_i32 = arith.constant 2 : i32
    %c4_i32_46 = arith.constant 4 : i32
    %102 = arith.muli %c2_i32, %c4_i32_46 : i32
    %103 = tpu.assume_multiple %102, 4 : i32
    %104 = arith.index_cast %103 : i32 to index
    %c0_47 = arith.constant 0 : index
    %105 = vector.load %arg12[%104, %c0_47] : memref<32x128xf32, #tpu.memory_space<vmem>>, vector<4x128xf32>
    %cst_48 = arith.constant dense<0.000000e+00> : vector<4x128xf32>
    %106 = tpu.matmul %93, %1, %cst_48 {dimension_numbers = #tpu.dot_dimension_numbers<[1], [0], [0], [1], [0, 0, 1, 1], [], []>} : vector<4x32xf32>, vector<32x128xf32>, vector<4x128xf32> -> vector<4x128xf32>
    %107 = arith.addf %105, %106 : vector<4x128xf32>
    %108 = vector.extract_strided_slice %107 {offsets = [0, 0], sizes = [4, 32], strides = [1, 1]} : vector<4x128xf32> to vector<4x32xf32>
    %cst_49 = arith.constant 5.000000e-01 : f32
    %109 = vector.broadcast %cst_49 : f32 to vector<4x32xf32>
    %110 = arith.mulf %109, %108 : vector<4x32xf32>
    %111 = math.tanh %110 : vector<4x32xf32>
    %cst_50 = arith.constant 1.000000e+00 : f32
    %112 = vector.broadcast %cst_50 : f32 to vector<4x32xf32>
    %113 = arith.addf %111, %112 : vector<4x32xf32>
    %cst_51 = arith.constant 5.000000e-01 : f32
    %114 = vector.broadcast %cst_51 : f32 to vector<4x32xf32>
    %115 = arith.mulf %114, %113 : vector<4x32xf32>
    %116 = vector.extract_strided_slice %107 {offsets = [0, 32], sizes = [4, 32], strides = [1, 1]} : vector<4x128xf32> to vector<4x32xf32>
    %cst_52 = arith.constant 5.000000e-01 : f32
    %117 = vector.broadcast %cst_52 : f32 to vector<4x32xf32>
    %118 = arith.mulf %117, %116 : vector<4x32xf32>
    %119 = math.tanh %118 : vector<4x32xf32>
    %cst_53 = arith.constant 1.000000e+00 : f32
    %120 = vector.broadcast %cst_53 : f32 to vector<4x32xf32>
    %121 = arith.addf %119, %120 : vector<4x32xf32>
    %cst_54 = arith.constant 5.000000e-01 : f32
    %122 = vector.broadcast %cst_54 : f32 to vector<4x32xf32>
    %123 = arith.mulf %122, %121 : vector<4x32xf32>
    %124 = vector.extract_strided_slice %107 {offsets = [0, 64], sizes = [4, 32], strides = [1, 1]} : vector<4x128xf32> to vector<4x32xf32>
    %125 = math.tanh %124 : vector<4x32xf32>
    %126 = vector.extract_strided_slice %107 {offsets = [0, 96], sizes = [4, 32], strides = [1, 1]} : vector<4x128xf32> to vector<4x32xf32>
    %cst_55 = arith.constant 5.000000e-01 : f32
    %127 = vector.broadcast %cst_55 : f32 to vector<4x32xf32>
    %128 = arith.mulf %127, %126 : vector<4x32xf32>
    %129 = math.tanh %128 : vector<4x32xf32>
    %cst_56 = arith.constant 1.000000e+00 : f32
    %130 = vector.broadcast %cst_56 : f32 to vector<4x32xf32>
    %131 = arith.addf %129, %130 : vector<4x32xf32>
    %cst_57 = arith.constant 5.000000e-01 : f32
    %132 = vector.broadcast %cst_57 : f32 to vector<4x32xf32>
    %133 = arith.mulf %132, %131 : vector<4x32xf32>
    %134 = arith.mulf %123, %91 : vector<4x32xf32>
    %135 = arith.mulf %115, %125 : vector<4x32xf32>
    %136 = arith.addf %134, %135 : vector<4x32xf32>
    %137 = math.tanh %136 : vector<4x32xf32>
    %138 = arith.mulf %133, %137 : vector<4x32xf32>
    %c0_58 = arith.constant 0 : index
    %139 = arith.index_cast %103 : i32 to index
    %c0_59 = arith.constant 0 : index
    %140 = vector.load %arg10[%c0_58, %139, %c0_59] : memref<2x32x32xf32, #tpu.memory_space<vmem>>, vector<1x4x32xf32>
    %141 = vector.shape_cast %140 : vector<1x4x32xf32> to vector<4x32xf32>
    %142 = vector.shape_cast %138 : vector<4x32xf32> to vector<1x4x32xf32>
    tpu.vector_store %arg10[%c0_58, %139, %c0_59], %142 {strides = array<i32>} : memref<2x32x32xf32, #tpu.memory_space<vmem>>, vector<1x4x32xf32>,
    %c0_60 = arith.constant 0 : index
    %143 = arith.index_cast %103 : i32 to index
    %c0_61 = arith.constant 0 : index
    %144 = vector.load %arg11[%c0_60, %143, %c0_61] : memref<2x32x32xf32, #tpu.memory_space<vmem>>, vector<1x4x32xf32>
    %145 = vector.shape_cast %144 : vector<1x4x32xf32> to vector<4x32xf32>
    %146 = vector.shape_cast %136 : vector<4x32xf32> to vector<1x4x32xf32>
    tpu.vector_store %arg11[%c0_60, %143, %c0_61], %146 {strides = array<i32>} : memref<2x32x32xf32, #tpu.memory_space<vmem>>, vector<1x4x32xf32>,
    %c3_i32 = arith.constant 3 : i32
    %c4_i32_62 = arith.constant 4 : i32
    %147 = arith.muli %c3_i32, %c4_i32_62 : i32
    %148 = tpu.assume_multiple %147, 4 : i32
    %149 = arith.index_cast %148 : i32 to index
    %c0_63 = arith.constant 0 : index
    %150 = vector.load %arg12[%149, %c0_63] : memref<32x128xf32, #tpu.memory_space<vmem>>, vector<4x128xf32>
    %cst_64 = arith.constant dense<0.000000e+00> : vector<4x128xf32>
    %151 = tpu.matmul %138, %1, %cst_64 {dimension_numbers = #tpu.dot_dimension_numbers<[1], [0], [0], [1], [0, 0, 1, 1], [], []>} : vector<4x32xf32>, vector<32x128xf32>, vector<4x128xf32> -> vector<4x128xf32>
    %152 = arith.addf %150, %151 : vector<4x128xf32>
    %153 = vector.extract_strided_slice %152 {offsets = [0, 0], sizes = [4, 32], strides = [1, 1]} : vector<4x128xf32> to vector<4x32xf32>
    %cst_65 = arith.constant 5.000000e-01 : f32
    %154 = vector.broadcast %cst_65 : f32 to vector<4x32xf32>
    %155 = arith.mulf %154, %153 : vector<4x32xf32>
    %156 = math.tanh %155 : vector<4x32xf32>
    %cst_66 = arith.constant 1.000000e+00 : f32
    %157 = vector.broadcast %cst_66 : f32 to vector<4x32xf32>
    %158 = arith.addf %156, %157 : vector<4x32xf32>
    %cst_67 = arith.constant 5.000000e-01 : f32
    %159 = vector.broadcast %cst_67 : f32 to vector<4x32xf32>
    %160 = arith.mulf %159, %158 : vector<4x32xf32>
    %161 = vector.extract_strided_slice %152 {offsets = [0, 32], sizes = [4, 32], strides = [1, 1]} : vector<4x128xf32> to vector<4x32xf32>
    %cst_68 = arith.constant 5.000000e-01 : f32
    %162 = vector.broadcast %cst_68 : f32 to vector<4x32xf32>
    %163 = arith.mulf %162, %161 : vector<4x32xf32>
    %164 = math.tanh %163 : vector<4x32xf32>
    %cst_69 = arith.constant 1.000000e+00 : f32
    %165 = vector.broadcast %cst_69 : f32 to vector<4x32xf32>
    %166 = arith.addf %164, %165 : vector<4x32xf32>
    %cst_70 = arith.constant 5.000000e-01 : f32
    %167 = vector.broadcast %cst_70 : f32 to vector<4x32xf32>
    %168 = arith.mulf %167, %166 : vector<4x32xf32>
    %169 = vector.extract_strided_slice %152 {offsets = [0, 64], sizes = [4, 32], strides = [1, 1]} : vector<4x128xf32> to vector<4x32xf32>
    %170 = math.tanh %169 : vector<4x32xf32>
    %171 = vector.extract_strided_slice %152 {offsets = [0, 96], sizes = [4, 32], strides = [1, 1]} : vector<4x128xf32> to vector<4x32xf32>
    %cst_71 = arith.constant 5.000000e-01 : f32
    %172 = vector.broadcast %cst_71 : f32 to vector<4x32xf32>
    %173 = arith.mulf %172, %171 : vector<4x32xf32>
    %174 = math.tanh %173 : vector<4x32xf32>
    %cst_72 = arith.constant 1.000000e+00 : f32
    %175 = vector.broadcast %cst_72 : f32 to vector<4x32xf32>
    %176 = arith.addf %174, %175 : vector<4x32xf32>
    %cst_73 = arith.constant 5.000000e-01 : f32
    %177 = vector.broadcast %cst_73 : f32 to vector<4x32xf32>
    %178 = arith.mulf %177, %176 : vector<4x32xf32>
    %179 = arith.mulf %168, %136 : vector<4x32xf32>
    %180 = arith.mulf %160, %170 : vector<4x32xf32>
    %181 = arith.addf %179, %180 : vector<4x32xf32>
    %182 = math.tanh %181 : vector<4x32xf32>
    %183 = arith.mulf %178, %182 : vector<4x32xf32>
    %c0_74 = arith.constant 0 : index
    %184 = arith.index_cast %148 : i32 to index
    %c0_75 = arith.constant 0 : index
    %185 = vector.load %arg10[%c0_74, %184, %c0_75] : memref<2x32x32xf32, #tpu.memory_space<vmem>>, vector<1x4x32xf32>
    %186 = vector.shape_cast %185 : vector<1x4x32xf32> to vector<4x32xf32>
    %187 = vector.shape_cast %183 : vector<4x32xf32> to vector<1x4x32xf32>
    tpu.vector_store %arg10[%c0_74, %184, %c0_75], %187 {strides = array<i32>} : memref<2x32x32xf32, #tpu.memory_space<vmem>>, vector<1x4x32xf32>,
    %c0_76 = arith.constant 0 : index
    %188 = arith.index_cast %148 : i32 to index
    %c0_77 = arith.constant 0 : index
    %189 = vector.load %arg11[%c0_76, %188, %c0_77] : memref<2x32x32xf32, #tpu.memory_space<vmem>>, vector<1x4x32xf32>
    %190 = vector.shape_cast %189 : vector<1x4x32xf32> to vector<4x32xf32>
    %191 = vector.shape_cast %181 : vector<4x32xf32> to vector<1x4x32xf32>
    tpu.vector_store %arg11[%c0_76, %188, %c0_77], %191 {strides = array<i32>} : memref<2x32x32xf32, #tpu.memory_space<vmem>>, vector<1x4x32xf32>,
    %c4_i32_78 = arith.constant 4 : i32
    %c4_i32_79 = arith.constant 4 : i32
    %192 = arith.muli %c4_i32_78, %c4_i32_79 : i32
    %193 = tpu.assume_multiple %192, 4 : i32
    %194 = arith.index_cast %193 : i32 to index
    %c0_80 = arith.constant 0 : index
    %195 = vector.load %arg12[%194, %c0_80] : memref<32x128xf32, #tpu.memory_space<vmem>>, vector<4x128xf32>
    %cst_81 = arith.constant dense<0.000000e+00> : vector<4x128xf32>
    %196 = tpu.matmul %183, %1, %cst_81 {dimension_numbers = #tpu.dot_dimension_numbers<[1], [0], [0], [1], [0, 0, 1, 1], [], []>} : vector<4x32xf32>, vector<32x128xf32>, vector<4x128xf32> -> vector<4x128xf32>
    %197 = arith.addf %195, %196 : vector<4x128xf32>
    %198 = vector.extract_strided_slice %197 {offsets = [0, 0], sizes = [4, 32], strides = [1, 1]} : vector<4x128xf32> to vector<4x32xf32>
    %cst_82 = arith.constant 5.000000e-01 : f32
    %199 = vector.broadcast %cst_82 : f32 to vector<4x32xf32>
    %200 = arith.mulf %199, %198 : vector<4x32xf32>
    %201 = math.tanh %200 : vector<4x32xf32>
    %cst_83 = arith.constant 1.000000e+00 : f32
    %202 = vector.broadcast %cst_83 : f32 to vector<4x32xf32>
    %203 = arith.addf %201, %202 : vector<4x32xf32>
    %cst_84 = arith.constant 5.000000e-01 : f32
    %204 = vector.broadcast %cst_84 : f32 to vector<4x32xf32>
    %205 = arith.mulf %204, %203 : vector<4x32xf32>
    %206 = vector.extract_strided_slice %197 {offsets = [0, 32], sizes = [4, 32], strides = [1, 1]} : vector<4x128xf32> to vector<4x32xf32>
    %cst_85 = arith.constant 5.000000e-01 : f32
    %207 = vector.broadcast %cst_85 : f32 to vector<4x32xf32>
    %208 = arith.mulf %207, %206 : vector<4x32xf32>
    %209 = math.tanh %208 : vector<4x32xf32>
    %cst_86 = arith.constant 1.000000e+00 : f32
    %210 = vector.broadcast %cst_86 : f32 to vector<4x32xf32>
    %211 = arith.addf %209, %210 : vector<4x32xf32>
    %cst_87 = arith.constant 5.000000e-01 : f32
    %212 = vector.broadcast %cst_87 : f32 to vector<4x32xf32>
    %213 = arith.mulf %212, %211 : vector<4x32xf32>
    %214 = vector.extract_strided_slice %197 {offsets = [0, 64], sizes = [4, 32], strides = [1, 1]} : vector<4x128xf32> to vector<4x32xf32>
    %215 = math.tanh %214 : vector<4x32xf32>
    %216 = vector.extract_strided_slice %197 {offsets = [0, 96], sizes = [4, 32], strides = [1, 1]} : vector<4x128xf32> to vector<4x32xf32>
    %cst_88 = arith.constant 5.000000e-01 : f32
    %217 = vector.broadcast %cst_88 : f32 to vector<4x32xf32>
    %218 = arith.mulf %217, %216 : vector<4x32xf32>
    %219 = math.tanh %218 : vector<4x32xf32>
    %cst_89 = arith.constant 1.000000e+00 : f32
    %220 = vector.broadcast %cst_89 : f32 to vector<4x32xf32>
    %221 = arith.addf %219, %220 : vector<4x32xf32>
    %cst_90 = arith.constant 5.000000e-01 : f32
    %222 = vector.broadcast %cst_90 : f32 to vector<4x32xf32>
    %223 = arith.mulf %222, %221 : vector<4x32xf32>
    %224 = arith.mulf %213, %181 : vector<4x32xf32>
    %225 = arith.mulf %205, %215 : vector<4x32xf32>
    %226 = arith.addf %224, %225 : vector<4x32xf32>
    %227 = math.tanh %226 : vector<4x32xf32>
    %228 = arith.mulf %223, %227 : vector<4x32xf32>
    %c0_91 = arith.constant 0 : index
    %229 = arith.index_cast %193 : i32 to index
    %c0_92 = arith.constant 0 : index
    %230 = vector.load %arg10[%c0_91, %229, %c0_92] : memref<2x32x32xf32, #tpu.memory_space<vmem>>, vector<1x4x32xf32>
    %231 = vector.shape_cast %230 : vector<1x4x32xf32> to vector<4x32xf32>
    %232 = vector.shape_cast %228 : vector<4x32xf32> to vector<1x4x32xf32>
    tpu.vector_store %arg10[%c0_91, %229, %c0_92], %232 {strides = array<i32>} : memref<2x32x32xf32, #tpu.memory_space<vmem>>, vector<1x4x32xf32>,
    %c0_93 = arith.constant 0 : index
    %233 = arith.index_cast %193 : i32 to index
    %c0_94 = arith.constant 0 : index
    %234 = vector.load %arg11[%c0_93, %233, %c0_94] : memref<2x32x32xf32, #tpu.memory_space<vmem>>, vector<1x4x32xf32>
    %235 = vector.shape_cast %234 : vector<1x4x32xf32> to vector<4x32xf32>
    %236 = vector.shape_cast %226 : vector<4x32xf32> to vector<1x4x32xf32>
    tpu.vector_store %arg11[%c0_93, %233, %c0_94], %236 {strides = array<i32>} : memref<2x32x32xf32, #tpu.memory_space<vmem>>, vector<1x4x32xf32>,
    %c5_i32 = arith.constant 5 : i32
    %c4_i32_95 = arith.constant 4 : i32
    %237 = arith.muli %c5_i32, %c4_i32_95 : i32
    %238 = tpu.assume_multiple %237, 4 : i32
    %239 = arith.index_cast %238 : i32 to index
    %c0_96 = arith.constant 0 : index
    %240 = vector.load %arg12[%239, %c0_96] : memref<32x128xf32, #tpu.memory_space<vmem>>, vector<4x128xf32>
    %cst_97 = arith.constant dense<0.000000e+00> : vector<4x128xf32>
    %241 = tpu.matmul %228, %1, %cst_97 {dimension_numbers = #tpu.dot_dimension_numbers<[1], [0], [0], [1], [0, 0, 1, 1], [], []>} : vector<4x32xf32>, vector<32x128xf32>, vector<4x128xf32> -> vector<4x128xf32>
    %242 = arith.addf %240, %241 : vector<4x128xf32>
    %243 = vector.extract_strided_slice %242 {offsets = [0, 0], sizes = [4, 32], strides = [1, 1]} : vector<4x128xf32> to vector<4x32xf32>
    %cst_98 = arith.constant 5.000000e-01 : f32
    %244 = vector.broadcast %cst_98 : f32 to vector<4x32xf32>
    %245 = arith.mulf %244, %243 : vector<4x32xf32>
    %246 = math.tanh %245 : vector<4x32xf32>
    %cst_99 = arith.constant 1.000000e+00 : f32
    %247 = vector.broadcast %cst_99 : f32 to vector<4x32xf32>
    %248 = arith.addf %246, %247 : vector<4x32xf32>
    %cst_100 = arith.constant 5.000000e-01 : f32
    %249 = vector.broadcast %cst_100 : f32 to vector<4x32xf32>
    %250 = arith.mulf %249, %248 : vector<4x32xf32>
    %251 = vector.extract_strided_slice %242 {offsets = [0, 32], sizes = [4, 32], strides = [1, 1]} : vector<4x128xf32> to vector<4x32xf32>
    %cst_101 = arith.constant 5.000000e-01 : f32
    %252 = vector.broadcast %cst_101 : f32 to vector<4x32xf32>
    %253 = arith.mulf %252, %251 : vector<4x32xf32>
    %254 = math.tanh %253 : vector<4x32xf32>
    %cst_102 = arith.constant 1.000000e+00 : f32
    %255 = vector.broadcast %cst_102 : f32 to vector<4x32xf32>
    %256 = arith.addf %254, %255 : vector<4x32xf32>
    %cst_103 = arith.constant 5.000000e-01 : f32
    %257 = vector.broadcast %cst_103 : f32 to vector<4x32xf32>
    %258 = arith.mulf %257, %256 : vector<4x32xf32>
    %259 = vector.extract_strided_slice %242 {offsets = [0, 64], sizes = [4, 32], strides = [1, 1]} : vector<4x128xf32> to vector<4x32xf32>
    %260 = math.tanh %259 : vector<4x32xf32>
    %261 = vector.extract_strided_slice %242 {offsets = [0, 96], sizes = [4, 32], strides = [1, 1]} : vector<4x128xf32> to vector<4x32xf32>
    %cst_104 = arith.constant 5.000000e-01 : f32
    %262 = vector.broadcast %cst_104 : f32 to vector<4x32xf32>
    %263 = arith.mulf %262, %261 : vector<4x32xf32>
    %264 = math.tanh %263 : vector<4x32xf32>
    %cst_105 = arith.constant 1.000000e+00 : f32
    %265 = vector.broadcast %cst_105 : f32 to vector<4x32xf32>
    %266 = arith.addf %264, %265 : vector<4x32xf32>
    %cst_106 = arith.constant 5.000000e-01 : f32
    %267 = vector.broadcast %cst_106 : f32 to vector<4x32xf32>
    %268 = arith.mulf %267, %266 : vector<4x32xf32>
    %269 = arith.mulf %258, %226 : vector<4x32xf32>
    %270 = arith.mulf %250, %260 : vector<4x32xf32>
    %271 = arith.addf %269, %270 : vector<4x32xf32>
    %272 = math.tanh %271 : vector<4x32xf32>
    %273 = arith.mulf %268, %272 : vector<4x32xf32>
    %c0_107 = arith.constant 0 : index
    %274 = arith.index_cast %238 : i32 to index
    %c0_108 = arith.constant 0 : index
    %275 = vector.load %arg10[%c0_107, %274, %c0_108] : memref<2x32x32xf32, #tpu.memory_space<vmem>>, vector<1x4x32xf32>
    %276 = vector.shape_cast %275 : vector<1x4x32xf32> to vector<4x32xf32>
    %277 = vector.shape_cast %273 : vector<4x32xf32> to vector<1x4x32xf32>
    tpu.vector_store %arg10[%c0_107, %274, %c0_108], %277 {strides = array<i32>} : memref<2x32x32xf32, #tpu.memory_space<vmem>>, vector<1x4x32xf32>,
    %c0_109 = arith.constant 0 : index
    %278 = arith.index_cast %238 : i32 to index
    %c0_110 = arith.constant 0 : index
    %279 = vector.load %arg11[%c0_109, %278, %c0_110] : memref<2x32x32xf32, #tpu.memory_space<vmem>>, vector<1x4x32xf32>
    %280 = vector.shape_cast %279 : vector<1x4x32xf32> to vector<4x32xf32>
    %281 = vector.shape_cast %271 : vector<4x32xf32> to vector<1x4x32xf32>
    tpu.vector_store %arg11[%c0_109, %278, %c0_110], %281 {strides = array<i32>} : memref<2x32x32xf32, #tpu.memory_space<vmem>>, vector<1x4x32xf32>,
    %c6_i32 = arith.constant 6 : i32
    %c4_i32_111 = arith.constant 4 : i32
    %282 = arith.muli %c6_i32, %c4_i32_111 : i32
    %283 = tpu.assume_multiple %282, 4 : i32
    %284 = arith.index_cast %283 : i32 to index
    %c0_112 = arith.constant 0 : index
    %285 = vector.load %arg12[%284, %c0_112] : memref<32x128xf32, #tpu.memory_space<vmem>>, vector<4x128xf32>
    %cst_113 = arith.constant dense<0.000000e+00> : vector<4x128xf32>
    %286 = tpu.matmul %273, %1, %cst_113 {dimension_numbers = #tpu.dot_dimension_numbers<[1], [0], [0], [1], [0, 0, 1, 1], [], []>} : vector<4x32xf32>, vector<32x128xf32>, vector<4x128xf32> -> vector<4x128xf32>
    %287 = arith.addf %285, %286 : vector<4x128xf32>
    %288 = vector.extract_strided_slice %287 {offsets = [0, 0], sizes = [4, 32], strides = [1, 1]} : vector<4x128xf32> to vector<4x32xf32>
    %cst_114 = arith.constant 5.000000e-01 : f32
    %289 = vector.broadcast %cst_114 : f32 to vector<4x32xf32>
    %290 = arith.mulf %289, %288 : vector<4x32xf32>
    %291 = math.tanh %290 : vector<4x32xf32>
    %cst_115 = arith.constant 1.000000e+00 : f32
    %292 = vector.broadcast %cst_115 : f32 to vector<4x32xf32>
    %293 = arith.addf %291, %292 : vector<4x32xf32>
    %cst_116 = arith.constant 5.000000e-01 : f32
    %294 = vector.broadcast %cst_116 : f32 to vector<4x32xf32>
    %295 = arith.mulf %294, %293 : vector<4x32xf32>
    %296 = vector.extract_strided_slice %287 {offsets = [0, 32], sizes = [4, 32], strides = [1, 1]} : vector<4x128xf32> to vector<4x32xf32>
    %cst_117 = arith.constant 5.000000e-01 : f32
    %297 = vector.broadcast %cst_117 : f32 to vector<4x32xf32>
    %298 = arith.mulf %297, %296 : vector<4x32xf32>
    %299 = math.tanh %298 : vector<4x32xf32>
    %cst_118 = arith.constant 1.000000e+00 : f32
    %300 = vector.broadcast %cst_118 : f32 to vector<4x32xf32>
    %301 = arith.addf %299, %300 : vector<4x32xf32>
    %cst_119 = arith.constant 5.000000e-01 : f32
    %302 = vector.broadcast %cst_119 : f32 to vector<4x32xf32>
    %303 = arith.mulf %302, %301 : vector<4x32xf32>
    %304 = vector.extract_strided_slice %287 {offsets = [0, 64], sizes = [4, 32], strides = [1, 1]} : vector<4x128xf32> to vector<4x32xf32>
    %305 = math.tanh %304 : vector<4x32xf32>
    %306 = vector.extract_strided_slice %287 {offsets = [0, 96], sizes = [4, 32], strides = [1, 1]} : vector<4x128xf32> to vector<4x32xf32>
    %cst_120 = arith.constant 5.000000e-01 : f32
    %307 = vector.broadcast %cst_120 : f32 to vector<4x32xf32>
    %308 = arith.mulf %307, %306 : vector<4x32xf32>
    %309 = math.tanh %308 : vector<4x32xf32>
    %cst_121 = arith.constant 1.000000e+00 : f32
    %310 = vector.broadcast %cst_121 : f32 to vector<4x32xf32>
    %311 = arith.addf %309, %310 : vector<4x32xf32>
    %cst_122 = arith.constant 5.000000e-01 : f32
    %312 = vector.broadcast %cst_122 : f32 to vector<4x32xf32>
    %313 = arith.mulf %312, %311 : vector<4x32xf32>
    %314 = arith.mulf %303, %271 : vector<4x32xf32>
    %315 = arith.mulf %295, %305 : vector<4x32xf32>
    %316 = arith.addf %314, %315 : vector<4x32xf32>
    %317 = math.tanh %316 : vector<4x32xf32>
    %318 = arith.mulf %313, %317 : vector<4x32xf32>
    %c0_123 = arith.constant 0 : index
    %319 = arith.index_cast %283 : i32 to index
    %c0_124 = arith.constant 0 : index
    %320 = vector.load %arg10[%c0_123, %319, %c0_124] : memref<2x32x32xf32, #tpu.memory_space<vmem>>, vector<1x4x32xf32>
    %321 = vector.shape_cast %320 : vector<1x4x32xf32> to vector<4x32xf32>
    %322 = vector.shape_cast %318 : vector<4x32xf32> to vector<1x4x32xf32>
    tpu.vector_store %arg10[%c0_123, %319, %c0_124], %322 {strides = array<i32>} : memref<2x32x32xf32, #tpu.memory_space<vmem>>, vector<1x4x32xf32>,
    %c0_125 = arith.constant 0 : index
    %323 = arith.index_cast %283 : i32 to index
    %c0_126 = arith.constant 0 : index
    %324 = vector.load %arg11[%c0_125, %323, %c0_126] : memref<2x32x32xf32, #tpu.memory_space<vmem>>, vector<1x4x32xf32>
    %325 = vector.shape_cast %324 : vector<1x4x32xf32> to vector<4x32xf32>
    %326 = vector.shape_cast %316 : vector<4x32xf32> to vector<1x4x32xf32>
    tpu.vector_store %arg11[%c0_125, %323, %c0_126], %326 {strides = array<i32>} : memref<2x32x32xf32, #tpu.memory_space<vmem>>, vector<1x4x32xf32>,
    %c7_i32 = arith.constant 7 : i32
    %c4_i32_127 = arith.constant 4 : i32
    %327 = arith.muli %c7_i32, %c4_i32_127 : i32
    %328 = tpu.assume_multiple %327, 4 : i32
    %329 = arith.index_cast %328 : i32 to index
    %c0_128 = arith.constant 0 : index
    %330 = vector.load %arg12[%329, %c0_128] : memref<32x128xf32, #tpu.memory_space<vmem>>, vector<4x128xf32>
    %cst_129 = arith.constant dense<0.000000e+00> : vector<4x128xf32>
    %331 = tpu.matmul %318, %1, %cst_129 {dimension_numbers = #tpu.dot_dimension_numbers<[1], [0], [0], [1], [0, 0, 1, 1], [], []>} : vector<4x32xf32>, vector<32x128xf32>, vector<4x128xf32> -> vector<4x128xf32>
    %332 = arith.addf %330, %331 : vector<4x128xf32>
    %333 = vector.extract_strided_slice %332 {offsets = [0, 0], sizes = [4, 32], strides = [1, 1]} : vector<4x128xf32> to vector<4x32xf32>
    %cst_130 = arith.constant 5.000000e-01 : f32
    %334 = vector.broadcast %cst_130 : f32 to vector<4x32xf32>
    %335 = arith.mulf %334, %333 : vector<4x32xf32>
    %336 = math.tanh %335 : vector<4x32xf32>
    %cst_131 = arith.constant 1.000000e+00 : f32
    %337 = vector.broadcast %cst_131 : f32 to vector<4x32xf32>
    %338 = arith.addf %336, %337 : vector<4x32xf32>
    %cst_132 = arith.constant 5.000000e-01 : f32
    %339 = vector.broadcast %cst_132 : f32 to vector<4x32xf32>
    %340 = arith.mulf %339, %338 : vector<4x32xf32>
    %341 = vector.extract_strided_slice %332 {offsets = [0, 32], sizes = [4, 32], strides = [1, 1]} : vector<4x128xf32> to vector<4x32xf32>
    %cst_133 = arith.constant 5.000000e-01 : f32
    %342 = vector.broadcast %cst_133 : f32 to vector<4x32xf32>
    %343 = arith.mulf %342, %341 : vector<4x32xf32>
    %344 = math.tanh %343 : vector<4x32xf32>
    %cst_134 = arith.constant 1.000000e+00 : f32
    %345 = vector.broadcast %cst_134 : f32 to vector<4x32xf32>
    %346 = arith.addf %344, %345 : vector<4x32xf32>
    %cst_135 = arith.constant 5.000000e-01 : f32
    %347 = vector.broadcast %cst_135 : f32 to vector<4x32xf32>
    %348 = arith.mulf %347, %346 : vector<4x32xf32>
    %349 = vector.extract_strided_slice %332 {offsets = [0, 64], sizes = [4, 32], strides = [1, 1]} : vector<4x128xf32> to vector<4x32xf32>
    %350 = math.tanh %349 : vector<4x32xf32>
    %351 = vector.extract_strided_slice %332 {offsets = [0, 96], sizes = [4, 32], strides = [1, 1]} : vector<4x128xf32> to vector<4x32xf32>
    %cst_136 = arith.constant 5.000000e-01 : f32
    %352 = vector.broadcast %cst_136 : f32 to vector<4x32xf32>
    %353 = arith.mulf %352, %351 : vector<4x32xf32>
    %354 = math.tanh %353 : vector<4x32xf32>
    %cst_137 = arith.constant 1.000000e+00 : f32
    %355 = vector.broadcast %cst_137 : f32 to vector<4x32xf32>
    %356 = arith.addf %354, %355 : vector<4x32xf32>
    %cst_138 = arith.constant 5.000000e-01 : f32
    %357 = vector.broadcast %cst_138 : f32 to vector<4x32xf32>
    %358 = arith.mulf %357, %356 : vector<4x32xf32>
    %359 = arith.mulf %348, %316 : vector<4x32xf32>
    %360 = arith.mulf %340, %350 : vector<4x32xf32>
    %361 = arith.addf %359, %360 : vector<4x32xf32>
    %362 = math.tanh %361 : vector<4x32xf32>
    %363 = arith.mulf %358, %362 : vector<4x32xf32>
    %c0_139 = arith.constant 0 : index
    %364 = arith.index_cast %328 : i32 to index
    %c0_140 = arith.constant 0 : index
    %365 = vector.load %arg10[%c0_139, %364, %c0_140] : memref<2x32x32xf32, #tpu.memory_space<vmem>>, vector<1x4x32xf32>
    %366 = vector.shape_cast %365 : vector<1x4x32xf32> to vector<4x32xf32>
    %367 = vector.shape_cast %363 : vector<4x32xf32> to vector<1x4x32xf32>
    tpu.vector_store %arg10[%c0_139, %364, %c0_140], %367 {strides = array<i32>} : memref<2x32x32xf32, #tpu.memory_space<vmem>>, vector<1x4x32xf32>,
    %c0_141 = arith.constant 0 : index
    %368 = arith.index_cast %328 : i32 to index
    %c0_142 = arith.constant 0 : index
    %369 = vector.load %arg11[%c0_141, %368, %c0_142] : memref<2x32x32xf32, #tpu.memory_space<vmem>>, vector<1x4x32xf32>
    %370 = vector.shape_cast %369 : vector<1x4x32xf32> to vector<4x32xf32>
    %371 = vector.shape_cast %361 : vector<4x32xf32> to vector<1x4x32xf32>
    tpu.vector_store %arg11[%c0_141, %368, %c0_142], %371 {strides = array<i32>} : memref<2x32x32xf32, #tpu.memory_space<vmem>>, vector<1x4x32xf32>,
    %c8_i32 = arith.constant 8 : i32
    %c0_143 = arith.constant 0 : index
    %c0_144 = arith.constant 0 : index
    %372 = vector.load %arg7[%c0_143, %c0_144] : memref<32x128xf32, #tpu.memory_space<vmem>>, vector<32x128xf32>
    %c0_145 = arith.constant 0 : index
    %c0_146 = arith.constant 0 : index
    %373 = vector.load %arg8[%c0_145, %c0_146] : memref<32x128xf32, #tpu.memory_space<vmem>>, vector<32x128xf32>
    %c0_147 = arith.constant 0 : index
    %c0_148 = arith.constant 0 : index
    %374 = vector.load %arg9[%c0_147, %c0_148] : memref<1x128xf32, #tpu.memory_space<vmem>>, vector<1x128xf32>
    %c0_149 = arith.constant 0 : index
    %c0_150 = arith.constant 0 : index
    %c0_151 = arith.constant 0 : index
    %375 = vector.load %arg10[%c0_149, %c0_150, %c0_151] : memref<2x32x32xf32, #tpu.memory_space<vmem>>, vector<1x32x32xf32>
    %376 = vector.shape_cast %375 : vector<1x32x32xf32> to vector<32x32xf32>
    %cst_152 = arith.constant dense<0.000000e+00> : vector<32x128xf32>
    %377 = tpu.matmul %376, %372, %cst_152 {dimension_numbers = #tpu.dot_dimension_numbers<[1], [0], [0], [1], [0, 0, 1, 1], [], []>} : vector<32x32xf32>, vector<32x128xf32>, vector<32x128xf32> -> vector<32x128xf32>
    %378 = vector.broadcast %374 : vector<1x128xf32> to vector<32x128xf32>
    %379 = arith.addf %377, %378 : vector<32x128xf32>
    %c0_153 = arith.constant 0 : index
    %c0_154 = arith.constant 0 : index
    %380 = vector.load %arg12[%c0_153, %c0_154] : memref<32x128xf32, #tpu.memory_space<vmem>>, vector<32x128xf32>
    tpu.vector_store %arg12[%c0_153, %c0_154], %379 {strides = array<i32>} : memref<32x128xf32, #tpu.memory_space<vmem>>, vector<32x128xf32>,
    %c1 = arith.constant 1 : index
    %c0_155 = arith.constant 0 : index
    %c0_156 = arith.constant 0 : index
    %381 = vector.load %arg2[%c1, %c0_155, %c0_156] : memref<2x4x32xf32, #tpu.memory_space<vmem>>, vector<1x4x32xf32>
    %382 = vector.shape_cast %381 : vector<1x4x32xf32> to vector<4x32xf32>
    %c1_157 = arith.constant 1 : index
    %c0_158 = arith.constant 0 : index
    %c0_159 = arith.constant 0 : index
    %383 = vector.load %arg3[%c1_157, %c0_158, %c0_159] : memref<2x4x32xf32, #tpu.memory_space<vmem>>, vector<1x4x32xf32>
    %384 = vector.shape_cast %383 : vector<1x4x32xf32> to vector<4x32xf32>
    %c0_i32_160 = arith.constant 0 : i32
    %c4_i32_161 = arith.constant 4 : i32
    %385 = arith.muli %c0_i32_160, %c4_i32_161 : i32
    %386 = tpu.assume_multiple %385, 4 : i32
    %387 = arith.index_cast %386 : i32 to index
    %c0_162 = arith.constant 0 : index
    %388 = vector.load %arg12[%387, %c0_162] : memref<32x128xf32, #tpu.memory_space<vmem>>, vector<4x128xf32>
    %cst_163 = arith.constant dense<0.000000e+00> : vector<4x128xf32>
    %389 = tpu.matmul %382, %373, %cst_163 {dimension_numbers = #tpu.dot_dimension_numbers<[1], [0], [0], [1], [0, 0, 1, 1], [], []>} : vector<4x32xf32>, vector<32x128xf32>, vector<4x128xf32> -> vector<4x128xf32>
    %390 = arith.addf %388, %389 : vector<4x128xf32>
    %391 = vector.extract_strided_slice %390 {offsets = [0, 0], sizes = [4, 32], strides = [1, 1]} : vector<4x128xf32> to vector<4x32xf32>
    %cst_164 = arith.constant 5.000000e-01 : f32
    %392 = vector.broadcast %cst_164 : f32 to vector<4x32xf32>
    %393 = arith.mulf %392, %391 : vector<4x32xf32>
    %394 = math.tanh %393 : vector<4x32xf32>
    %cst_165 = arith.constant 1.000000e+00 : f32
    %395 = vector.broadcast %cst_165 : f32 to vector<4x32xf32>
    %396 = arith.addf %394, %395 : vector<4x32xf32>
    %cst_166 = arith.constant 5.000000e-01 : f32
    %397 = vector.broadcast %cst_166 : f32 to vector<4x32xf32>
    %398 = arith.mulf %397, %396 : vector<4x32xf32>
    %399 = vector.extract_strided_slice %390 {offsets = [0, 32], sizes = [4, 32], strides = [1, 1]} : vector<4x128xf32> to vector<4x32xf32>
    %cst_167 = arith.constant 5.000000e-01 : f32
    %400 = vector.broadcast %cst_167 : f32 to vector<4x32xf32>
    %401 = arith.mulf %400, %399 : vector<4x32xf32>
    %402 = math.tanh %401 : vector<4x32xf32>
    %cst_168 = arith.constant 1.000000e+00 : f32
    %403 = vector.broadcast %cst_168 : f32 to vector<4x32xf32>
    %404 = arith.addf %402, %403 : vector<4x32xf32>
    %cst_169 = arith.constant 5.000000e-01 : f32
    %405 = vector.broadcast %cst_169 : f32 to vector<4x32xf32>
    %406 = arith.mulf %405, %404 : vector<4x32xf32>
    %407 = vector.extract_strided_slice %390 {offsets = [0, 64], sizes = [4, 32], strides = [1, 1]} : vector<4x128xf32> to vector<4x32xf32>
    %408 = math.tanh %407 : vector<4x32xf32>
    %409 = vector.extract_strided_slice %390 {offsets = [0, 96], sizes = [4, 32], strides = [1, 1]} : vector<4x128xf32> to vector<4x32xf32>
    %cst_170 = arith.constant 5.000000e-01 : f32
    %410 = vector.broadcast %cst_170 : f32 to vector<4x32xf32>
    %411 = arith.mulf %410, %409 : vector<4x32xf32>
    %412 = math.tanh %411 : vector<4x32xf32>
    %cst_171 = arith.constant 1.000000e+00 : f32
    %413 = vector.broadcast %cst_171 : f32 to vector<4x32xf32>
    %414 = arith.addf %412, %413 : vector<4x32xf32>
    %cst_172 = arith.constant 5.000000e-01 : f32
    %415 = vector.broadcast %cst_172 : f32 to vector<4x32xf32>
    %416 = arith.mulf %415, %414 : vector<4x32xf32>
    %417 = arith.mulf %406, %384 : vector<4x32xf32>
    %418 = arith.mulf %398, %408 : vector<4x32xf32>
    %419 = arith.addf %417, %418 : vector<4x32xf32>
    %420 = math.tanh %419 : vector<4x32xf32>
    %421 = arith.mulf %416, %420 : vector<4x32xf32>
    %c1_173 = arith.constant 1 : index
    %422 = arith.index_cast %386 : i32 to index
    %c0_174 = arith.constant 0 : index
    %423 = vector.load %arg10[%c1_173, %422, %c0_174] : memref<2x32x32xf32, #tpu.memory_space<vmem>>, vector<1x4x32xf32>
    %424 = vector.shape_cast %423 : vector<1x4x32xf32> to vector<4x32xf32>
    %425 = vector.shape_cast %421 : vector<4x32xf32> to vector<1x4x32xf32>
    tpu.vector_store %arg10[%c1_173, %422, %c0_174], %425 {strides = array<i32>} : memref<2x32x32xf32, #tpu.memory_space<vmem>>, vector<1x4x32xf32>,
    %c1_175 = arith.constant 1 : index
    %426 = arith.index_cast %386 : i32 to index
    %c0_176 = arith.constant 0 : index
    %427 = vector.load %arg11[%c1_175, %426, %c0_176] : memref<2x32x32xf32, #tpu.memory_space<vmem>>, vector<1x4x32xf32>
    %428 = vector.shape_cast %427 : vector<1x4x32xf32> to vector<4x32xf32>
    %429 = vector.shape_cast %419 : vector<4x32xf32> to vector<1x4x32xf32>
    tpu.vector_store %arg11[%c1_175, %426, %c0_176], %429 {strides = array<i32>} : memref<2x32x32xf32, #tpu.memory_space<vmem>>, vector<1x4x32xf32>,
    %c1_i32_177 = arith.constant 1 : i32
    %c4_i32_178 = arith.constant 4 : i32
    %430 = arith.muli %c1_i32_177, %c4_i32_178 : i32
    %431 = tpu.assume_multiple %430, 4 : i32
    %432 = arith.index_cast %431 : i32 to index
    %c0_179 = arith.constant 0 : index
    %433 = vector.load %arg12[%432, %c0_179] : memref<32x128xf32, #tpu.memory_space<vmem>>, vector<4x128xf32>
    %cst_180 = arith.constant dense<0.000000e+00> : vector<4x128xf32>
    %434 = tpu.matmul %421, %373, %cst_180 {dimension_numbers = #tpu.dot_dimension_numbers<[1], [0], [0], [1], [0, 0, 1, 1], [], []>} : vector<4x32xf32>, vector<32x128xf32>, vector<4x128xf32> -> vector<4x128xf32>
    %435 = arith.addf %433, %434 : vector<4x128xf32>
    %436 = vector.extract_strided_slice %435 {offsets = [0, 0], sizes = [4, 32], strides = [1, 1]} : vector<4x128xf32> to vector<4x32xf32>
    %cst_181 = arith.constant 5.000000e-01 : f32
    %437 = vector.broadcast %cst_181 : f32 to vector<4x32xf32>
    %438 = arith.mulf %437, %436 : vector<4x32xf32>
    %439 = math.tanh %438 : vector<4x32xf32>
    %cst_182 = arith.constant 1.000000e+00 : f32
    %440 = vector.broadcast %cst_182 : f32 to vector<4x32xf32>
    %441 = arith.addf %439, %440 : vector<4x32xf32>
    %cst_183 = arith.constant 5.000000e-01 : f32
    %442 = vector.broadcast %cst_183 : f32 to vector<4x32xf32>
    %443 = arith.mulf %442, %441 : vector<4x32xf32>
    %444 = vector.extract_strided_slice %435 {offsets = [0, 32], sizes = [4, 32], strides = [1, 1]} : vector<4x128xf32> to vector<4x32xf32>
    %cst_184 = arith.constant 5.000000e-01 : f32
    %445 = vector.broadcast %cst_184 : f32 to vector<4x32xf32>
    %446 = arith.mulf %445, %444 : vector<4x32xf32>
    %447 = math.tanh %446 : vector<4x32xf32>
    %cst_185 = arith.constant 1.000000e+00 : f32
    %448 = vector.broadcast %cst_185 : f32 to vector<4x32xf32>
    %449 = arith.addf %447, %448 : vector<4x32xf32>
    %cst_186 = arith.constant 5.000000e-01 : f32
    %450 = vector.broadcast %cst_186 : f32 to vector<4x32xf32>
    %451 = arith.mulf %450, %449 : vector<4x32xf32>
    %452 = vector.extract_strided_slice %435 {offsets = [0, 64], sizes = [4, 32], strides = [1, 1]} : vector<4x128xf32> to vector<4x32xf32>
    %453 = math.tanh %452 : vector<4x32xf32>
    %454 = vector.extract_strided_slice %435 {offsets = [0, 96], sizes = [4, 32], strides = [1, 1]} : vector<4x128xf32> to vector<4x32xf32>
    %cst_187 = arith.constant 5.000000e-01 : f32
    %455 = vector.broadcast %cst_187 : f32 to vector<4x32xf32>
    %456 = arith.mulf %455, %454 : vector<4x32xf32>
    %457 = math.tanh %456 : vector<4x32xf32>
    %cst_188 = arith.constant 1.000000e+00 : f32
    %458 = vector.broadcast %cst_188 : f32 to vector<4x32xf32>
    %459 = arith.addf %457, %458 : vector<4x32xf32>
    %cst_189 = arith.constant 5.000000e-01 : f32
    %460 = vector.broadcast %cst_189 : f32 to vector<4x32xf32>
    %461 = arith.mulf %460, %459 : vector<4x32xf32>
    %462 = arith.mulf %451, %419 : vector<4x32xf32>
    %463 = arith.mulf %443, %453 : vector<4x32xf32>
    %464 = arith.addf %462, %463 : vector<4x32xf32>
    %465 = math.tanh %464 : vector<4x32xf32>
    %466 = arith.mulf %461, %465 : vector<4x32xf32>
    %c1_190 = arith.constant 1 : index
    %467 = arith.index_cast %431 : i32 to index
    %c0_191 = arith.constant 0 : index
    %468 = vector.load %arg10[%c1_190, %467, %c0_191] : memref<2x32x32xf32, #tpu.memory_space<vmem>>, vector<1x4x32xf32>
    %469 = vector.shape_cast %468 : vector<1x4x32xf32> to vector<4x32xf32>
    %470 = vector.shape_cast %466 : vector<4x32xf32> to vector<1x4x32xf32>
    tpu.vector_store %arg10[%c1_190, %467, %c0_191], %470 {strides = array<i32>} : memref<2x32x32xf32, #tpu.memory_space<vmem>>, vector<1x4x32xf32>,
    %c1_192 = arith.constant 1 : index
    %471 = arith.index_cast %431 : i32 to index
    %c0_193 = arith.constant 0 : index
    %472 = vector.load %arg11[%c1_192, %471, %c0_193] : memref<2x32x32xf32, #tpu.memory_space<vmem>>, vector<1x4x32xf32>
    %473 = vector.shape_cast %472 : vector<1x4x32xf32> to vector<4x32xf32>
    %474 = vector.shape_cast %464 : vector<4x32xf32> to vector<1x4x32xf32>
    tpu.vector_store %arg11[%c1_192, %471, %c0_193], %474 {strides = array<i32>} : memref<2x32x32xf32, #tpu.memory_space<vmem>>, vector<1x4x32xf32>,
    %c2_i32_194 = arith.constant 2 : i32
    %c4_i32_195 = arith.constant 4 : i32
    %475 = arith.muli %c2_i32_194, %c4_i32_195 : i32
    %476 = tpu.assume_multiple %475, 4 : i32
    %477 = arith.index_cast %476 : i32 to index
    %c0_196 = arith.constant 0 : index
    %478 = vector.load %arg12[%477, %c0_196] : memref<32x128xf32, #tpu.memory_space<vmem>>, vector<4x128xf32>
    %cst_197 = arith.constant dense<0.000000e+00> : vector<4x128xf32>
    %479 = tpu.matmul %466, %373, %cst_197 {dimension_numbers = #tpu.dot_dimension_numbers<[1], [0], [0], [1], [0, 0, 1, 1], [], []>} : vector<4x32xf32>, vector<32x128xf32>, vector<4x128xf32> -> vector<4x128xf32>
    %480 = arith.addf %478, %479 : vector<4x128xf32>
    %481 = vector.extract_strided_slice %480 {offsets = [0, 0], sizes = [4, 32], strides = [1, 1]} : vector<4x128xf32> to vector<4x32xf32>
    %cst_198 = arith.constant 5.000000e-01 : f32
    %482 = vector.broadcast %cst_198 : f32 to vector<4x32xf32>
    %483 = arith.mulf %482, %481 : vector<4x32xf32>
    %484 = math.tanh %483 : vector<4x32xf32>
    %cst_199 = arith.constant 1.000000e+00 : f32
    %485 = vector.broadcast %cst_199 : f32 to vector<4x32xf32>
    %486 = arith.addf %484, %485 : vector<4x32xf32>
    %cst_200 = arith.constant 5.000000e-01 : f32
    %487 = vector.broadcast %cst_200 : f32 to vector<4x32xf32>
    %488 = arith.mulf %487, %486 : vector<4x32xf32>
    %489 = vector.extract_strided_slice %480 {offsets = [0, 32], sizes = [4, 32], strides = [1, 1]} : vector<4x128xf32> to vector<4x32xf32>
    %cst_201 = arith.constant 5.000000e-01 : f32
    %490 = vector.broadcast %cst_201 : f32 to vector<4x32xf32>
    %491 = arith.mulf %490, %489 : vector<4x32xf32>
    %492 = math.tanh %491 : vector<4x32xf32>
    %cst_202 = arith.constant 1.000000e+00 : f32
    %493 = vector.broadcast %cst_202 : f32 to vector<4x32xf32>
    %494 = arith.addf %492, %493 : vector<4x32xf32>
    %cst_203 = arith.constant 5.000000e-01 : f32
    %495 = vector.broadcast %cst_203 : f32 to vector<4x32xf32>
    %496 = arith.mulf %495, %494 : vector<4x32xf32>
    %497 = vector.extract_strided_slice %480 {offsets = [0, 64], sizes = [4, 32], strides = [1, 1]} : vector<4x128xf32> to vector<4x32xf32>
    %498 = math.tanh %497 : vector<4x32xf32>
    %499 = vector.extract_strided_slice %480 {offsets = [0, 96], sizes = [4, 32], strides = [1, 1]} : vector<4x128xf32> to vector<4x32xf32>
    %cst_204 = arith.constant 5.000000e-01 : f32
    %500 = vector.broadcast %cst_204 : f32 to vector<4x32xf32>
    %501 = arith.mulf %500, %499 : vector<4x32xf32>
    %502 = math.tanh %501 : vector<4x32xf32>
    %cst_205 = arith.constant 1.000000e+00 : f32
    %503 = vector.broadcast %cst_205 : f32 to vector<4x32xf32>
    %504 = arith.addf %502, %503 : vector<4x32xf32>
    %cst_206 = arith.constant 5.000000e-01 : f32
    %505 = vector.broadcast %cst_206 : f32 to vector<4x32xf32>
    %506 = arith.mulf %505, %504 : vector<4x32xf32>
    %507 = arith.mulf %496, %464 : vector<4x32xf32>
    %508 = arith.mulf %488, %498 : vector<4x32xf32>
    %509 = arith.addf %507, %508 : vector<4x32xf32>
    %510 = math.tanh %509 : vector<4x32xf32>
    %511 = arith.mulf %506, %510 : vector<4x32xf32>
    %c1_207 = arith.constant 1 : index
    %512 = arith.index_cast %476 : i32 to index
    %c0_208 = arith.constant 0 : index
    %513 = vector.load %arg10[%c1_207, %512, %c0_208] : memref<2x32x32xf32, #tpu.memory_space<vmem>>, vector<1x4x32xf32>
    %514 = vector.shape_cast %513 : vector<1x4x32xf32> to vector<4x32xf32>
    %515 = vector.shape_cast %511 : vector<4x32xf32> to vector<1x4x32xf32>
    tpu.vector_store %arg10[%c1_207, %512, %c0_208], %515 {strides = array<i32>} : memref<2x32x32xf32, #tpu.memory_space<vmem>>, vector<1x4x32xf32>,
    %c1_209 = arith.constant 1 : index
    %516 = arith.index_cast %476 : i32 to index
    %c0_210 = arith.constant 0 : index
    %517 = vector.load %arg11[%c1_209, %516, %c0_210] : memref<2x32x32xf32, #tpu.memory_space<vmem>>, vector<1x4x32xf32>
    %518 = vector.shape_cast %517 : vector<1x4x32xf32> to vector<4x32xf32>
    %519 = vector.shape_cast %509 : vector<4x32xf32> to vector<1x4x32xf32>
    tpu.vector_store %arg11[%c1_209, %516, %c0_210], %519 {strides = array<i32>} : memref<2x32x32xf32, #tpu.memory_space<vmem>>, vector<1x4x32xf32>,
    %c3_i32_211 = arith.constant 3 : i32
    %c4_i32_212 = arith.constant 4 : i32
    %520 = arith.muli %c3_i32_211, %c4_i32_212 : i32
    %521 = tpu.assume_multiple %520, 4 : i32
    %522 = arith.index_cast %521 : i32 to index
    %c0_213 = arith.constant 0 : index
    %523 = vector.load %arg12[%522, %c0_213] : memref<32x128xf32, #tpu.memory_space<vmem>>, vector<4x128xf32>
    %cst_214 = arith.constant dense<0.000000e+00> : vector<4x128xf32>
    %524 = tpu.matmul %511, %373, %cst_214 {dimension_numbers = #tpu.dot_dimension_numbers<[1], [0], [0], [1], [0, 0, 1, 1], [], []>} : vector<4x32xf32>, vector<32x128xf32>, vector<4x128xf32> -> vector<4x128xf32>
    %525 = arith.addf %523, %524 : vector<4x128xf32>
    %526 = vector.extract_strided_slice %525 {offsets = [0, 0], sizes = [4, 32], strides = [1, 1]} : vector<4x128xf32> to vector<4x32xf32>
    %cst_215 = arith.constant 5.000000e-01 : f32
    %527 = vector.broadcast %cst_215 : f32 to vector<4x32xf32>
    %528 = arith.mulf %527, %526 : vector<4x32xf32>
    %529 = math.tanh %528 : vector<4x32xf32>
    %cst_216 = arith.constant 1.000000e+00 : f32
    %530 = vector.broadcast %cst_216 : f32 to vector<4x32xf32>
    %531 = arith.addf %529, %530 : vector<4x32xf32>
    %cst_217 = arith.constant 5.000000e-01 : f32
    %532 = vector.broadcast %cst_217 : f32 to vector<4x32xf32>
    %533 = arith.mulf %532, %531 : vector<4x32xf32>
    %534 = vector.extract_strided_slice %525 {offsets = [0, 32], sizes = [4, 32], strides = [1, 1]} : vector<4x128xf32> to vector<4x32xf32>
    %cst_218 = arith.constant 5.000000e-01 : f32
    %535 = vector.broadcast %cst_218 : f32 to vector<4x32xf32>
    %536 = arith.mulf %535, %534 : vector<4x32xf32>
    %537 = math.tanh %536 : vector<4x32xf32>
    %cst_219 = arith.constant 1.000000e+00 : f32
    %538 = vector.broadcast %cst_219 : f32 to vector<4x32xf32>
    %539 = arith.addf %537, %538 : vector<4x32xf32>
    %cst_220 = arith.constant 5.000000e-01 : f32
    %540 = vector.broadcast %cst_220 : f32 to vector<4x32xf32>
    %541 = arith.mulf %540, %539 : vector<4x32xf32>
    %542 = vector.extract_strided_slice %525 {offsets = [0, 64], sizes = [4, 32], strides = [1, 1]} : vector<4x128xf32> to vector<4x32xf32>
    %543 = math.tanh %542 : vector<4x32xf32>
    %544 = vector.extract_strided_slice %525 {offsets = [0, 96], sizes = [4, 32], strides = [1, 1]} : vector<4x128xf32> to vector<4x32xf32>
    %cst_221 = arith.constant 5.000000e-01 : f32
    %545 = vector.broadcast %cst_221 : f32 to vector<4x32xf32>
    %546 = arith.mulf %545, %544 : vector<4x32xf32>
    %547 = math.tanh %546 : vector<4x32xf32>
    %cst_222 = arith.constant 1.000000e+00 : f32
    %548 = vector.broadcast %cst_222 : f32 to vector<4x32xf32>
    %549 = arith.addf %547, %548 : vector<4x32xf32>
    %cst_223 = arith.constant 5.000000e-01 : f32
    %550 = vector.broadcast %cst_223 : f32 to vector<4x32xf32>
    %551 = arith.mulf %550, %549 : vector<4x32xf32>
    %552 = arith.mulf %541, %509 : vector<4x32xf32>
    %553 = arith.mulf %533, %543 : vector<4x32xf32>
    %554 = arith.addf %552, %553 : vector<4x32xf32>
    %555 = math.tanh %554 : vector<4x32xf32>
    %556 = arith.mulf %551, %555 : vector<4x32xf32>
    %c1_224 = arith.constant 1 : index
    %557 = arith.index_cast %521 : i32 to index
    %c0_225 = arith.constant 0 : index
    %558 = vector.load %arg10[%c1_224, %557, %c0_225] : memref<2x32x32xf32, #tpu.memory_space<vmem>>, vector<1x4x32xf32>
    %559 = vector.shape_cast %558 : vector<1x4x32xf32> to vector<4x32xf32>
    %560 = vector.shape_cast %556 : vector<4x32xf32> to vector<1x4x32xf32>
    tpu.vector_store %arg10[%c1_224, %557, %c0_225], %560 {strides = array<i32>} : memref<2x32x32xf32, #tpu.memory_space<vmem>>, vector<1x4x32xf32>,
    %c1_226 = arith.constant 1 : index
    %561 = arith.index_cast %521 : i32 to index
    %c0_227 = arith.constant 0 : index
    %562 = vector.load %arg11[%c1_226, %561, %c0_227] : memref<2x32x32xf32, #tpu.memory_space<vmem>>, vector<1x4x32xf32>
    %563 = vector.shape_cast %562 : vector<1x4x32xf32> to vector<4x32xf32>
    %564 = vector.shape_cast %554 : vector<4x32xf32> to vector<1x4x32xf32>
    tpu.vector_store %arg11[%c1_226, %561, %c0_227], %564 {strides = array<i32>} : memref<2x32x32xf32, #tpu.memory_space<vmem>>, vector<1x4x32xf32>,
    %c4_i32_228 = arith.constant 4 : i32
    %c4_i32_229 = arith.constant 4 : i32
    %565 = arith.muli %c4_i32_228, %c4_i32_229 : i32
    %566 = tpu.assume_multiple %565, 4 : i32
    %567 = arith.index_cast %566 : i32 to index
    %c0_230 = arith.constant 0 : index
    %568 = vector.load %arg12[%567, %c0_230] : memref<32x128xf32, #tpu.memory_space<vmem>>, vector<4x128xf32>
    %cst_231 = arith.constant dense<0.000000e+00> : vector<4x128xf32>
    %569 = tpu.matmul %556, %373, %cst_231 {dimension_numbers = #tpu.dot_dimension_numbers<[1], [0], [0], [1], [0, 0, 1, 1], [], []>} : vector<4x32xf32>, vector<32x128xf32>, vector<4x128xf32> -> vector<4x128xf32>
    %570 = arith.addf %568, %569 : vector<4x128xf32>
    %571 = vector.extract_strided_slice %570 {offsets = [0, 0], sizes = [4, 32], strides = [1, 1]} : vector<4x128xf32> to vector<4x32xf32>
    %cst_232 = arith.constant 5.000000e-01 : f32
    %572 = vector.broadcast %cst_232 : f32 to vector<4x32xf32>
    %573 = arith.mulf %572, %571 : vector<4x32xf32>
    %574 = math.tanh %573 : vector<4x32xf32>
    %cst_233 = arith.constant 1.000000e+00 : f32
    %575 = vector.broadcast %cst_233 : f32 to vector<4x32xf32>
    %576 = arith.addf %574, %575 : vector<4x32xf32>
    %cst_234 = arith.constant 5.000000e-01 : f32
    %577 = vector.broadcast %cst_234 : f32 to vector<4x32xf32>
    %578 = arith.mulf %577, %576 : vector<4x32xf32>
    %579 = vector.extract_strided_slice %570 {offsets = [0, 32], sizes = [4, 32], strides = [1, 1]} : vector<4x128xf32> to vector<4x32xf32>
    %cst_235 = arith.constant 5.000000e-01 : f32
    %580 = vector.broadcast %cst_235 : f32 to vector<4x32xf32>
    %581 = arith.mulf %580, %579 : vector<4x32xf32>
    %582 = math.tanh %581 : vector<4x32xf32>
    %cst_236 = arith.constant 1.000000e+00 : f32
    %583 = vector.broadcast %cst_236 : f32 to vector<4x32xf32>
    %584 = arith.addf %582, %583 : vector<4x32xf32>
    %cst_237 = arith.constant 5.000000e-01 : f32
    %585 = vector.broadcast %cst_237 : f32 to vector<4x32xf32>
    %586 = arith.mulf %585, %584 : vector<4x32xf32>
    %587 = vector.extract_strided_slice %570 {offsets = [0, 64], sizes = [4, 32], strides = [1, 1]} : vector<4x128xf32> to vector<4x32xf32>
    %588 = math.tanh %587 : vector<4x32xf32>
    %589 = vector.extract_strided_slice %570 {offsets = [0, 96], sizes = [4, 32], strides = [1, 1]} : vector<4x128xf32> to vector<4x32xf32>
    %cst_238 = arith.constant 5.000000e-01 : f32
    %590 = vector.broadcast %cst_238 : f32 to vector<4x32xf32>
    %591 = arith.mulf %590, %589 : vector<4x32xf32>
    %592 = math.tanh %591 : vector<4x32xf32>
    %cst_239 = arith.constant 1.000000e+00 : f32
    %593 = vector.broadcast %cst_239 : f32 to vector<4x32xf32>
    %594 = arith.addf %592, %593 : vector<4x32xf32>
    %cst_240 = arith.constant 5.000000e-01 : f32
    %595 = vector.broadcast %cst_240 : f32 to vector<4x32xf32>
    %596 = arith.mulf %595, %594 : vector<4x32xf32>
    %597 = arith.mulf %586, %554 : vector<4x32xf32>
    %598 = arith.mulf %578, %588 : vector<4x32xf32>
    %599 = arith.addf %597, %598 : vector<4x32xf32>
    %600 = math.tanh %599 : vector<4x32xf32>
    %601 = arith.mulf %596, %600 : vector<4x32xf32>
    %c1_241 = arith.constant 1 : index
    %602 = arith.index_cast %566 : i32 to index
    %c0_242 = arith.constant 0 : index
    %603 = vector.load %arg10[%c1_241, %602, %c0_242] : memref<2x32x32xf32, #tpu.memory_space<vmem>>, vector<1x4x32xf32>
    %604 = vector.shape_cast %603 : vector<1x4x32xf32> to vector<4x32xf32>
    %605 = vector.shape_cast %601 : vector<4x32xf32> to vector<1x4x32xf32>
    tpu.vector_store %arg10[%c1_241, %602, %c0_242], %605 {strides = array<i32>} : memref<2x32x32xf32, #tpu.memory_space<vmem>>, vector<1x4x32xf32>,
    %c1_243 = arith.constant 1 : index
    %606 = arith.index_cast %566 : i32 to index
    %c0_244 = arith.constant 0 : index
    %607 = vector.load %arg11[%c1_243, %606, %c0_244] : memref<2x32x32xf32, #tpu.memory_space<vmem>>, vector<1x4x32xf32>
    %608 = vector.shape_cast %607 : vector<1x4x32xf32> to vector<4x32xf32>
    %609 = vector.shape_cast %599 : vector<4x32xf32> to vector<1x4x32xf32>
    tpu.vector_store %arg11[%c1_243, %606, %c0_244], %609 {strides = array<i32>} : memref<2x32x32xf32, #tpu.memory_space<vmem>>, vector<1x4x32xf32>,
    %c5_i32_245 = arith.constant 5 : i32
    %c4_i32_246 = arith.constant 4 : i32
    %610 = arith.muli %c5_i32_245, %c4_i32_246 : i32
    %611 = tpu.assume_multiple %610, 4 : i32
    %612 = arith.index_cast %611 : i32 to index
    %c0_247 = arith.constant 0 : index
    %613 = vector.load %arg12[%612, %c0_247] : memref<32x128xf32, #tpu.memory_space<vmem>>, vector<4x128xf32>
    %cst_248 = arith.constant dense<0.000000e+00> : vector<4x128xf32>
    %614 = tpu.matmul %601, %373, %cst_248 {dimension_numbers = #tpu.dot_dimension_numbers<[1], [0], [0], [1], [0, 0, 1, 1], [], []>} : vector<4x32xf32>, vector<32x128xf32>, vector<4x128xf32> -> vector<4x128xf32>
    %615 = arith.addf %613, %614 : vector<4x128xf32>
    %616 = vector.extract_strided_slice %615 {offsets = [0, 0], sizes = [4, 32], strides = [1, 1]} : vector<4x128xf32> to vector<4x32xf32>
    %cst_249 = arith.constant 5.000000e-01 : f32
    %617 = vector.broadcast %cst_249 : f32 to vector<4x32xf32>
    %618 = arith.mulf %617, %616 : vector<4x32xf32>
    %619 = math.tanh %618 : vector<4x32xf32>
    %cst_250 = arith.constant 1.000000e+00 : f32
    %620 = vector.broadcast %cst_250 : f32 to vector<4x32xf32>
    %621 = arith.addf %619, %620 : vector<4x32xf32>
    %cst_251 = arith.constant 5.000000e-01 : f32
    %622 = vector.broadcast %cst_251 : f32 to vector<4x32xf32>
    %623 = arith.mulf %622, %621 : vector<4x32xf32>
    %624 = vector.extract_strided_slice %615 {offsets = [0, 32], sizes = [4, 32], strides = [1, 1]} : vector<4x128xf32> to vector<4x32xf32>
    %cst_252 = arith.constant 5.000000e-01 : f32
    %625 = vector.broadcast %cst_252 : f32 to vector<4x32xf32>
    %626 = arith.mulf %625, %624 : vector<4x32xf32>
    %627 = math.tanh %626 : vector<4x32xf32>
    %cst_253 = arith.constant 1.000000e+00 : f32
    %628 = vector.broadcast %cst_253 : f32 to vector<4x32xf32>
    %629 = arith.addf %627, %628 : vector<4x32xf32>
    %cst_254 = arith.constant 5.000000e-01 : f32
    %630 = vector.broadcast %cst_254 : f32 to vector<4x32xf32>
    %631 = arith.mulf %630, %629 : vector<4x32xf32>
    %632 = vector.extract_strided_slice %615 {offsets = [0, 64], sizes = [4, 32], strides = [1, 1]} : vector<4x128xf32> to vector<4x32xf32>
    %633 = math.tanh %632 : vector<4x32xf32>
    %634 = vector.extract_strided_slice %615 {offsets = [0, 96], sizes = [4, 32], strides = [1, 1]} : vector<4x128xf32> to vector<4x32xf32>
    %cst_255 = arith.constant 5.000000e-01 : f32
    %635 = vector.broadcast %cst_255 : f32 to vector<4x32xf32>
    %636 = arith.mulf %635, %634 : vector<4x32xf32>
    %637 = math.tanh %636 : vector<4x32xf32>
    %cst_256 = arith.constant 1.000000e+00 : f32
    %638 = vector.broadcast %cst_256 : f32 to vector<4x32xf32>
    %639 = arith.addf %637, %638 : vector<4x32xf32>
    %cst_257 = arith.constant 5.000000e-01 : f32
    %640 = vector.broadcast %cst_257 : f32 to vector<4x32xf32>
    %641 = arith.mulf %640, %639 : vector<4x32xf32>
    %642 = arith.mulf %631, %599 : vector<4x32xf32>
    %643 = arith.mulf %623, %633 : vector<4x32xf32>
    %644 = arith.addf %642, %643 : vector<4x32xf32>
    %645 = math.tanh %644 : vector<4x32xf32>
    %646 = arith.mulf %641, %645 : vector<4x32xf32>
    %c1_258 = arith.constant 1 : index
    %647 = arith.index_cast %611 : i32 to index
    %c0_259 = arith.constant 0 : index
    %648 = vector.load %arg10[%c1_258, %647, %c0_259] : memref<2x32x32xf32, #tpu.memory_space<vmem>>, vector<1x4x32xf32>
    %649 = vector.shape_cast %648 : vector<1x4x32xf32> to vector<4x32xf32>
    %650 = vector.shape_cast %646 : vector<4x32xf32> to vector<1x4x32xf32>
    tpu.vector_store %arg10[%c1_258, %647, %c0_259], %650 {strides = array<i32>} : memref<2x32x32xf32, #tpu.memory_space<vmem>>, vector<1x4x32xf32>,
    %c1_260 = arith.constant 1 : index
    %651 = arith.index_cast %611 : i32 to index
    %c0_261 = arith.constant 0 : index
    %652 = vector.load %arg11[%c1_260, %651, %c0_261] : memref<2x32x32xf32, #tpu.memory_space<vmem>>, vector<1x4x32xf32>
    %653 = vector.shape_cast %652 : vector<1x4x32xf32> to vector<4x32xf32>
    %654 = vector.shape_cast %644 : vector<4x32xf32> to vector<1x4x32xf32>
    tpu.vector_store %arg11[%c1_260, %651, %c0_261], %654 {strides = array<i32>} : memref<2x32x32xf32, #tpu.memory_space<vmem>>, vector<1x4x32xf32>,
    %c6_i32_262 = arith.constant 6 : i32
    %c4_i32_263 = arith.constant 4 : i32
    %655 = arith.muli %c6_i32_262, %c4_i32_263 : i32
    %656 = tpu.assume_multiple %655, 4 : i32
    %657 = arith.index_cast %656 : i32 to index
    %c0_264 = arith.constant 0 : index
    %658 = vector.load %arg12[%657, %c0_264] : memref<32x128xf32, #tpu.memory_space<vmem>>, vector<4x128xf32>
    %cst_265 = arith.constant dense<0.000000e+00> : vector<4x128xf32>
    %659 = tpu.matmul %646, %373, %cst_265 {dimension_numbers = #tpu.dot_dimension_numbers<[1], [0], [0], [1], [0, 0, 1, 1], [], []>} : vector<4x32xf32>, vector<32x128xf32>, vector<4x128xf32> -> vector<4x128xf32>
    %660 = arith.addf %658, %659 : vector<4x128xf32>
    %661 = vector.extract_strided_slice %660 {offsets = [0, 0], sizes = [4, 32], strides = [1, 1]} : vector<4x128xf32> to vector<4x32xf32>
    %cst_266 = arith.constant 5.000000e-01 : f32
    %662 = vector.broadcast %cst_266 : f32 to vector<4x32xf32>
    %663 = arith.mulf %662, %661 : vector<4x32xf32>
    %664 = math.tanh %663 : vector<4x32xf32>
    %cst_267 = arith.constant 1.000000e+00 : f32
    %665 = vector.broadcast %cst_267 : f32 to vector<4x32xf32>
    %666 = arith.addf %664, %665 : vector<4x32xf32>
    %cst_268 = arith.constant 5.000000e-01 : f32
    %667 = vector.broadcast %cst_268 : f32 to vector<4x32xf32>
    %668 = arith.mulf %667, %666 : vector<4x32xf32>
    %669 = vector.extract_strided_slice %660 {offsets = [0, 32], sizes = [4, 32], strides = [1, 1]} : vector<4x128xf32> to vector<4x32xf32>
    %cst_269 = arith.constant 5.000000e-01 : f32
    %670 = vector.broadcast %cst_269 : f32 to vector<4x32xf32>
    %671 = arith.mulf %670, %669 : vector<4x32xf32>
    %672 = math.tanh %671 : vector<4x32xf32>
    %cst_270 = arith.constant 1.000000e+00 : f32
    %673 = vector.broadcast %cst_270 : f32 to vector<4x32xf32>
    %674 = arith.addf %672, %673 : vector<4x32xf32>
    %cst_271 = arith.constant 5.000000e-01 : f32
    %675 = vector.broadcast %cst_271 : f32 to vector<4x32xf32>
    %676 = arith.mulf %675, %674 : vector<4x32xf32>
    %677 = vector.extract_strided_slice %660 {offsets = [0, 64], sizes = [4, 32], strides = [1, 1]} : vector<4x128xf32> to vector<4x32xf32>
    %678 = math.tanh %677 : vector<4x32xf32>
    %679 = vector.extract_strided_slice %660 {offsets = [0, 96], sizes = [4, 32], strides = [1, 1]} : vector<4x128xf32> to vector<4x32xf32>
    %cst_272 = arith.constant 5.000000e-01 : f32
    %680 = vector.broadcast %cst_272 : f32 to vector<4x32xf32>
    %681 = arith.mulf %680, %679 : vector<4x32xf32>
    %682 = math.tanh %681 : vector<4x32xf32>
    %cst_273 = arith.constant 1.000000e+00 : f32
    %683 = vector.broadcast %cst_273 : f32 to vector<4x32xf32>
    %684 = arith.addf %682, %683 : vector<4x32xf32>
    %cst_274 = arith.constant 5.000000e-01 : f32
    %685 = vector.broadcast %cst_274 : f32 to vector<4x32xf32>
    %686 = arith.mulf %685, %684 : vector<4x32xf32>
    %687 = arith.mulf %676, %644 : vector<4x32xf32>
    %688 = arith.mulf %668, %678 : vector<4x32xf32>
    %689 = arith.addf %687, %688 : vector<4x32xf32>
    %690 = math.tanh %689 : vector<4x32xf32>
    %691 = arith.mulf %686, %690 : vector<4x32xf32>
    %c1_275 = arith.constant 1 : index
    %692 = arith.index_cast %656 : i32 to index
    %c0_276 = arith.constant 0 : index
    %693 = vector.load %arg10[%c1_275, %692, %c0_276] : memref<2x32x32xf32, #tpu.memory_space<vmem>>, vector<1x4x32xf32>
    %694 = vector.shape_cast %693 : vector<1x4x32xf32> to vector<4x32xf32>
    %695 = vector.shape_cast %691 : vector<4x32xf32> to vector<1x4x32xf32>
    tpu.vector_store %arg10[%c1_275, %692, %c0_276], %695 {strides = array<i32>} : memref<2x32x32xf32, #tpu.memory_space<vmem>>, vector<1x4x32xf32>,
    %c1_277 = arith.constant 1 : index
    %696 = arith.index_cast %656 : i32 to index
    %c0_278 = arith.constant 0 : index
    %697 = vector.load %arg11[%c1_277, %696, %c0_278] : memref<2x32x32xf32, #tpu.memory_space<vmem>>, vector<1x4x32xf32>
    %698 = vector.shape_cast %697 : vector<1x4x32xf32> to vector<4x32xf32>
    %699 = vector.shape_cast %689 : vector<4x32xf32> to vector<1x4x32xf32>
    tpu.vector_store %arg11[%c1_277, %696, %c0_278], %699 {strides = array<i32>} : memref<2x32x32xf32, #tpu.memory_space<vmem>>, vector<1x4x32xf32>,
    %c7_i32_279 = arith.constant 7 : i32
    %c4_i32_280 = arith.constant 4 : i32
    %700 = arith.muli %c7_i32_279, %c4_i32_280 : i32
    %701 = tpu.assume_multiple %700, 4 : i32
    %702 = arith.index_cast %701 : i32 to index
    %c0_281 = arith.constant 0 : index
    %703 = vector.load %arg12[%702, %c0_281] : memref<32x128xf32, #tpu.memory_space<vmem>>, vector<4x128xf32>
    %cst_282 = arith.constant dense<0.000000e+00> : vector<4x128xf32>
    %704 = tpu.matmul %691, %373, %cst_282 {dimension_numbers = #tpu.dot_dimension_numbers<[1], [0], [0], [1], [0, 0, 1, 1], [], []>} : vector<4x32xf32>, vector<32x128xf32>, vector<4x128xf32> -> vector<4x128xf32>
    %705 = arith.addf %703, %704 : vector<4x128xf32>
    %706 = vector.extract_strided_slice %705 {offsets = [0, 0], sizes = [4, 32], strides = [1, 1]} : vector<4x128xf32> to vector<4x32xf32>
    %cst_283 = arith.constant 5.000000e-01 : f32
    %707 = vector.broadcast %cst_283 : f32 to vector<4x32xf32>
    %708 = arith.mulf %707, %706 : vector<4x32xf32>
    %709 = math.tanh %708 : vector<4x32xf32>
    %cst_284 = arith.constant 1.000000e+00 : f32
    %710 = vector.broadcast %cst_284 : f32 to vector<4x32xf32>
    %711 = arith.addf %709, %710 : vector<4x32xf32>
    %cst_285 = arith.constant 5.000000e-01 : f32
    %712 = vector.broadcast %cst_285 : f32 to vector<4x32xf32>
    %713 = arith.mulf %712, %711 : vector<4x32xf32>
    %714 = vector.extract_strided_slice %705 {offsets = [0, 32], sizes = [4, 32], strides = [1, 1]} : vector<4x128xf32> to vector<4x32xf32>
    %cst_286 = arith.constant 5.000000e-01 : f32
    %715 = vector.broadcast %cst_286 : f32 to vector<4x32xf32>
    %716 = arith.mulf %715, %714 : vector<4x32xf32>
    %717 = math.tanh %716 : vector<4x32xf32>
    %cst_287 = arith.constant 1.000000e+00 : f32
    %718 = vector.broadcast %cst_287 : f32 to vector<4x32xf32>
    %719 = arith.addf %717, %718 : vector<4x32xf32>
    %cst_288 = arith.constant 5.000000e-01 : f32
    %720 = vector.broadcast %cst_288 : f32 to vector<4x32xf32>
    %721 = arith.mulf %720, %719 : vector<4x32xf32>
    %722 = vector.extract_strided_slice %705 {offsets = [0, 64], sizes = [4, 32], strides = [1, 1]} : vector<4x128xf32> to vector<4x32xf32>
    %723 = math.tanh %722 : vector<4x32xf32>
    %724 = vector.extract_strided_slice %705 {offsets = [0, 96], sizes = [4, 32], strides = [1, 1]} : vector<4x128xf32> to vector<4x32xf32>
    %cst_289 = arith.constant 5.000000e-01 : f32
    %725 = vector.broadcast %cst_289 : f32 to vector<4x32xf32>
    %726 = arith.mulf %725, %724 : vector<4x32xf32>
    %727 = math.tanh %726 : vector<4x32xf32>
    %cst_290 = arith.constant 1.000000e+00 : f32
    %728 = vector.broadcast %cst_290 : f32 to vector<4x32xf32>
    %729 = arith.addf %727, %728 : vector<4x32xf32>
    %cst_291 = arith.constant 5.000000e-01 : f32
    %730 = vector.broadcast %cst_291 : f32 to vector<4x32xf32>
    %731 = arith.mulf %730, %729 : vector<4x32xf32>
    %732 = arith.mulf %721, %689 : vector<4x32xf32>
    %733 = arith.mulf %713, %723 : vector<4x32xf32>
    %734 = arith.addf %732, %733 : vector<4x32xf32>
    %735 = math.tanh %734 : vector<4x32xf32>
    %736 = arith.mulf %731, %735 : vector<4x32xf32>
    %c1_292 = arith.constant 1 : index
    %737 = arith.index_cast %701 : i32 to index
    %c0_293 = arith.constant 0 : index
    %738 = vector.load %arg10[%c1_292, %737, %c0_293] : memref<2x32x32xf32, #tpu.memory_space<vmem>>, vector<1x4x32xf32>
    %739 = vector.shape_cast %738 : vector<1x4x32xf32> to vector<4x32xf32>
    %740 = vector.shape_cast %736 : vector<4x32xf32> to vector<1x4x32xf32>
    tpu.vector_store %arg10[%c1_292, %737, %c0_293], %740 {strides = array<i32>} : memref<2x32x32xf32, #tpu.memory_space<vmem>>, vector<1x4x32xf32>,
    %c1_294 = arith.constant 1 : index
    %741 = arith.index_cast %701 : i32 to index
    %c0_295 = arith.constant 0 : index
    %742 = vector.load %arg11[%c1_294, %741, %c0_295] : memref<2x32x32xf32, #tpu.memory_space<vmem>>, vector<1x4x32xf32>
    %743 = vector.shape_cast %742 : vector<1x4x32xf32> to vector<4x32xf32>
    %744 = vector.shape_cast %734 : vector<4x32xf32> to vector<1x4x32xf32>
    tpu.vector_store %arg11[%c1_294, %741, %c0_295], %744 {strides = array<i32>} : memref<2x32x32xf32, #tpu.memory_space<vmem>>, vector<1x4x32xf32>,
    %c8_i32_296 = arith.constant 8 : i32
    return
  }
  func.func @transform_0(%arg0: i32) -> (i32, i32) {
    %c0_i32 = arith.constant 0 : i32
    %c0_i32_0 = arith.constant 0 : i32
    %c0_i32_1 = arith.constant 0 : i32
    return %c0_i32, %c0_i32_0 : i32, i32
  }
  func.func @transform_1(%arg0: i32) -> (i32, i32, i32) {
    %c0_i32 = arith.constant 0 : i32
    %c0_i32_0 = arith.constant 0 : i32
    %c0_i32_1 = arith.constant 0 : i32
    %c0_i32_2 = arith.constant 0 : i32
    return %c0_i32, %c0_i32_0, %c0_i32_1 : i32, i32, i32
  }
  func.func @transform_2(%arg0: i32) -> (i32, i32, i32) {
    %c0_i32 = arith.constant 0 : i32
    %c0_i32_0 = arith.constant 0 : i32
    %c0_i32_1 = arith.constant 0 : i32
    %c0_i32_2 = arith.constant 0 : i32
    return %c0_i32, %c0_i32_0, %c0_i32_1 : i32, i32, i32
  }
  func.func @transform_3(%arg0: i32) -> (i32, i32) {
    %c0_i32 = arith.constant 0 : i32
    %c0_i32_0 = arith.constant 0 : i32
    %c0_i32_1 = arith.constant 0 : i32
    return %c0_i32, %c0_i32_0 : i32, i32
  }
  func.func @transform_4(%arg0: i32) -> (i32, i32) {
    %c0_i32 = arith.constant 0 : i32
    %c0_i32_0 = arith.constant 0 : i32
    %c0_i32_1 = arith.constant 0 : i32
    return %c0_i32, %c0_i32_0 : i32, i32
  }
  func.func @transform_5(%arg0: i32) -> (i32, i32) {
    %c0_i32 = arith.constant 0 : i32
    %c0_i32_0 = arith.constant 0 : i32
    %c0_i32_1 = arith.constant 0 : i32
    return %c0_i32, %c0_i32_0 : i32, i32
  }
  func.func @transform_6(%arg0: i32) -> (i32, i32) {
    %c0_i32 = arith.constant 0 : i32
    %c0_i32_0 = arith.constant 0 : i32
    %c0_i32_1 = arith.constant 0 : i32
    return %c0_i32, %c0_i32_0 : i32, i32
  }
  func.func @transform_7(%arg0: i32) -> (i32, i32) {
    %c0_i32 = arith.constant 0 : i32
    %c0_i32_0 = arith.constant 0 : i32
    %c0_i32_1 = arith.constant 0 : i32
    return %c0_i32, %c0_i32_0 : i32, i32
  }
  func.func @transform_8(%arg0: i32) -> (i32, i32) {
    %c0_i32 = arith.constant 0 : i32
    %c0_i32_0 = arith.constant 0 : i32
    %c0_i32_1 = arith.constant 0 : i32
    return %c0_i32, %c0_i32_0 : i32, i32
  }
  func.func @transform_9(%arg0: i32) -> (i32, i32, i32) {
    %c0_i32 = arith.constant 0 : i32
    %c0_i32_0 = arith.constant 0 : i32
    %c0_i32_1 = arith.constant 0 : i32
    %c0_i32_2 = arith.constant 0 : i32
    return %c0_i32, %c0_i32_0, %c0_i32_1 : i32, i32, i32
  }
  func.func @transform_10(%arg0: i32) -> (i32, i32, i32) {
    %c0_i32 = arith.constant 0 : i32
    %c0_i32_0 = arith.constant 0 : i32
    %c0_i32_1 = arith.constant 0 : i32
    %c0_i32_2 = arith.constant 0 : i32
    return %c0_i32, %c0_i32_0, %c0_i32_1 : i32, i32, i32
  }
}

</mosaic_0001>

<llo_original>
// kernel: tpu_custom_call.1
$region0: #{tpu_custom_call.1}
  #allocation0 [shape = 'u32[]', space=smem, size = 0x4, offset = 0x4, fixed_abs, tag = 'smem constant byte address 0x4 - core index']
  #allocation1 [shape = 'u32[144,128]{1,0:T(1,128)}', space=vmem, size = 0x12000, scoped, tag = 'internal scratch']
  #allocation2 [shape = 'f32[32,128]{1,0:T(8,128)}', space=vmem, size = 0x4000, scoped, tag = 'scratch operand']
  %s0 = inlined_call_operand.hbm [shape: f32[32,32], index: 0, kind: input, shape index: {}]
  %s1 = inlined_call_operand.hbm [shape: f32[2,4,32], index: 1, kind: input, shape index: {}]
  %s2 = inlined_call_operand.hbm [shape: f32[2,4,32], index: 2, kind: input, shape index: {}]
  %s3 = inlined_call_operand.hbm [shape: f32[32,128], index: 3, kind: input, shape index: {}]
  %s4 = inlined_call_operand.hbm [shape: f32[32,128], index: 4, kind: input, shape index: {}]
  %s5 = inlined_call_operand.vmem [shape: f32[1,128], index: 5, kind: input, shape index: {}]
  %s6 = inlined_call_operand.hbm [shape: f32[32,128], index: 6, kind: input, shape index: {}]
  %s7 = inlined_call_operand.hbm [shape: f32[32,128], index: 7, kind: input, shape index: {}]
  %s8 = inlined_call_operand.vmem [shape: f32[1,128], index: 8, kind: input, shape index: {}]
  %s9 = inlined_call_operand.hbm [shape: f32[2,32,32], index: 9, kind: output, shape index: {0}]
  %s10 = inlined_call_operand.hbm [shape: f32[2,32,32], index: 10, kind: output, shape index: {1}]
  %11 = xla_tuple %s9, %s10
  %s12 = sld [smem:[#allocation0]]
  $region82: #{tpu_custom_call.1} parent=0
    _
  %s14 = ssub.s32 1, %s12
  %s15 = scalar_select 0, %s14, %s12
  $region1: #{tpu_custom_call.1} parent=0
    #allocation3 [shape = 'u8[16384]{0}', space=vmem, size = 0x4000, scoped, tag = 'input window, operand 0, single buffered']
    #allocation4 [shape = 's32[1]{0}', space=sflag, size = 0x4, scoped, tag = 'scoped memory for tpu_custom_call.1']
    #allocation5 [shape = 's32[1]{0}', space=sflag, size = 0x4, scoped, tag = 'scoped memory for tpu_custom_call.1']
    #allocation6 [shape = 'u8[4096]{0}', space=vmem, size = 0x1000, scoped, tag = 'input window, operand 1, single buffered']
    #allocation7 [shape = 's32[1]{0}', space=sflag, size = 0x4, scoped, tag = 'scoped memory for tpu_custom_call.1']
    #allocation8 [shape = 'u8[4096]{0}', space=vmem, size = 0x1000, scoped, tag = 'input window, operand 2, single buffered']
    #allocation9 [shape = 'u8[16384]{0}', space=vmem, size = 0x4000, scoped, tag = 'input window, operand 3, single buffered']
    #allocation10 [shape = 's32[1]{0}', space=sflag, size = 0x4, scoped, tag = 'scoped memory for tpu_custom_call.1']
    #allocation11 [shape = 'u8[16384]{0}', space=vmem, size = 0x4000, scoped, tag = 'input window, operand 4, single buffered']
    #allocation12 [shape = 'u8[16384]{0}', space=vmem, size = 0x4000, scoped, tag = 'input window, operand 6, single buffered']
    #allocation13 [shape = 's32[1]{0}', space=sflag, size = 0x4, scoped, tag = 'scoped memory for tpu_custom_call.1']
    #allocation14 [shape = 'u8[16384]{0}', space=vmem, size = 0x4000, scoped, tag = 'input window, operand 7, single buffered']
    #allocation15 [shape = 'u8[32768]{0}', space=vmem, size = 0x8000, scoped, tag = 'output window, operand 0, single buffered']
    #allocation16 [shape = 'u8[32768]{0}', space=vmem, size = 0x8000, scoped, tag = 'output window, operand 1, single buffered']
    #allocation17 [shape = 's32[1]{0}', space=sflag, size = 0x4, scoped, tag = 'scoped memory for tpu_custom_call.1']
    %16 = vsyncpa [#allocation4], 0
    %17 = vsyncpa [#allocation7], 0
    %18 = vsyncpa [#allocation10], 0
    %19 = vsyncpa [#allocation13], 0
    %20 = vsyncpa [#allocation5], 0
    %21 = vsyncpa [#allocation17], 0
    // Predicated region
    $region2: #{tpu_custom_call.1} parent=1 // pred_check
      _
    $region3: #{tpu_custom_call.1} parent=1 // pred_check_branch
      %23 = sbr.rel (0) target = $region5
    $region4: #{tpu_custom_call.1} parent=1 // pred_region
      %s25 = ssub.s32 512, 512
      %26 = vsyncadd [#allocation4], %s25
      %s27 = sshll.u32 [#allocation3], 4
      %s28 = int_to_ptr.vmem [resolvable:$true] %s27
      %33 = dma.hbm_to_vmem [thread:$0]  %s0, 512, %s28, [#allocation4], 128, 128, 8
    $region5: #{tpu_custom_call.1} parent=1 // pred_fallthru
      _
    // Predicated region
    $region6: #{tpu_custom_call.1} parent=1 // pred_check
      _
    $region7: #{tpu_custom_call.1} parent=1 // pred_check_branch
      %35 = sbr.rel (0) target = $region9
    $region8: #{tpu_custom_call.1} parent=1 // pred_region
      %s37 = ssub.s32 128, 128
      %38 = vsyncadd [#allocation7], %s37
      %s39 = sshll.u32 [#allocation6], 4
      %s40 = int_to_ptr.vmem [resolvable:$true] %s39
      %45 = dma.hbm_to_vmem [thread:$0]  %s1, 128, %s40, [#allocation7], 64, 64, 4
    $region9: #{tpu_custom_call.1} parent=1 // pred_fallthru
      _
    // Predicated region
    $region10: #{tpu_custom_call.1} parent=1 // pred_check
      _
    $region11: #{tpu_custom_call.1} parent=1 // pred_check_branch
      %47 = sbr.rel (0) target = $region13
    $region12: #{tpu_custom_call.1} parent=1 // pred_region
      %s49 = ssub.s32 128, 128
      %50 = vsyncadd [#allocation7], %s49
      %s51 = sshll.u32 [#allocation8], 4
      %s52 = int_to_ptr.vmem [resolvable:$true] %s51
      %57 = dma.hbm_to_vmem [thread:$0]  %s2, 128, %s52, [#allocation7], 64, 64, 4
    $region13: #{tpu_custom_call.1} parent=1 // pred_fallthru
      _
    // Predicated region
    $region14: #{tpu_custom_call.1} parent=1 // pred_check
      _
    $region15: #{tpu_custom_call.1} parent=1 // pred_check_branch
      %59 = sbr.rel (0) target = $region17
    $region16: #{tpu_custom_call.1} parent=1 // pred_region
      %s61 = ssub.s32 512, 512
      %62 = vsyncadd [#allocation10], %s61
      %s63 = sshll.u32 [#allocation9], 4
      %s64 = int_to_ptr.vmem [resolvable:$true] %s63
      %69 = dma.hbm_to_vmem [thread:$0]  %s3, 512, %s64, [#allocation10], 128, 128, 8
    $region17: #{tpu_custom_call.1} parent=1 // pred_fallthru
      _
    // Predicated region
    $region18: #{tpu_custom_call.1} parent=1 // pred_check
      _
    $region19: #{tpu_custom_call.1} parent=1 // pred_check_branch
      %71 = sbr.rel (0) target = $region21
    $region20: #{tpu_custom_call.1} parent=1 // pred_region
      %s73 = ssub.s32 512, 512
      %74 = vsyncadd [#allocation10], %s73
      %s75 = sshll.u32 [#allocation11], 4
      %s76 = int_to_ptr.vmem [resolvable:$true] %s75
      %81 = dma.hbm_to_vmem [thread:$0]  %s4, 512, %s76, [#allocation10], 128, 128, 8
    $region21: #{tpu_custom_call.1} parent=1 // pred_fallthru
      _
    // Predicated region
    $region22: #{tpu_custom_call.1} parent=1 // pred_check
      _
    $region23: #{tpu_custom_call.1} parent=1 // pred_check_branch
      %83 = sbr.rel (0) target = $region25
    $region24: #{tpu_custom_call.1} parent=1 // pred_region
      _
    $region25: #{tpu_custom_call.1} parent=1 // pred_fallthru
      _
    // Predicated region
    $region26: #{tpu_custom_call.1} parent=1 // pred_check
      _
    $region27: #{tpu_custom_call.1} parent=1 // pred_check_branch
      %85 = sbr.rel (0) target = $region29
    $region28: #{tpu_custom_call.1} parent=1 // pred_region
      %s87 = ssub.s32 512, 512
      %88 = vsyncadd [#allocation13], %s87
      %s89 = sshll.u32 [#allocation12], 4
      %s90 = int_to_ptr.vmem [resolvable:$true] %s89
      %95 = dma.hbm_to_vmem [thread:$0]  %s6, 512, %s90, [#allocation13], 128, 128, 8
    $region29: #{tpu_custom_call.1} parent=1 // pred_fallthru
      _
    // Predicated region
    $region30: #{tpu_custom_call.1} parent=1 // pred_check
      _
    $region31: #{tpu_custom_call.1} parent=1 // pred_check_branch
      %97 = sbr.rel (0) target = $region33
    $region32: #{tpu_custom_call.1} parent=1 // pred_region
      %s99 = ssub.s32 512, 512
      %100 = vsyncadd [#allocation13], %s99
      %s101 = sshll.u32 [#allocation14], 4
      %s102 = int_to_ptr.vmem [resolvable:$true] %s101
      %107 = dma.hbm_to_vmem [thread:$0]  %s7, 512, %s102, [#allocation13], 128, 128, 8
    $region33: #{tpu_custom_call.1} parent=1 // pred_fallthru
      _
    // Predicated region
    $region34: #{tpu_custom_call.1} parent=1 // pred_check
      _
    $region35: #{tpu_custom_call.1} parent=1 // pred_check_branch
      %109 = sbr.rel (0) target = $region37
    $region36: #{tpu_custom_call.1} parent=1 // pred_region
      _
    $region37: #{tpu_custom_call.1} parent=1 // pred_fallthru
      _
    // Predicated region
    $region38: #{tpu_custom_call.1} parent=1 // pred_check
      _
    $region39: #{tpu_custom_call.1} parent=1 // pred_check_branch
      %111 = sbr.rel (0) target = $region41
    $region40: #{tpu_custom_call.1} parent=1 // pred_region
      %112 = dma.done [#allocation4], 512
    $region41: #{tpu_custom_call.1} parent=1 // pred_fallthru
      _
    // Predicated region
    $region42: #{tpu_custom_call.1} parent=1 // pred_check
      _
    $region43: #{tpu_custom_call.1} parent=1 // pred_check_branch
      %114 = sbr.rel (0) target = $region45
    $region44: #{tpu_custom_call.1} parent=1 // pred_region
      %115 = dma.done [#allocation7], 128
    $region45: #{tpu_custom_call.1} parent=1 // pred_fallthru
      _
    // Predicated region
    $region46: #{tpu_custom_call.1} parent=1 // pred_check
      _
    $region47: #{tpu_custom_call.1} parent=1 // pred_check_branch
      %117 = sbr.rel (0) target = $region49
    $region48: #{tpu_custom_call.1} parent=1 // pred_region
      %118 = dma.done [#allocation7], 128
    $region49: #{tpu_custom_call.1} parent=1 // pred_fallthru
      _
    // Predicated region
    $region50: #{tpu_custom_call.1} parent=1 // pred_check
      _
    $region51: #{tpu_custom_call.1} parent=1 // pred_check_branch
      %120 = sbr.rel (0) target = $region53
    $region52: #{tpu_custom_call.1} parent=1 // pred_region
      %121 = dma.done [#allocation10], 512
    $region53: #{tpu_custom_call.1} parent=1 // pred_fallthru
      _
    // Predicated region
    $region54: #{tpu_custom_call.1} parent=1 // pred_check
      _
    $region55: #{tpu_custom_call.1} parent=1 // pred_check_branch
      %123 = sbr.rel (0) target = $region57
    $region56: #{tpu_custom_call.1} parent=1 // pred_region
      %124 = dma.done [#allocation10], 512
    $region57: #{tpu_custom_call.1} parent=1 // pred_fallthru
      _
    // Predicated region
    $region58: #{tpu_custom_call.1} parent=1 // pred_check
      _
    $region59: #{tpu_custom_call.1} parent=1 // pred_check_branch
      %126 = sbr.rel (0) target = $region61
    $region60: #{tpu_custom_call.1} parent=1 // pred_region
      %127 = dma.done [#allocation13], 512
    $region61: #{tpu_custom_call.1} parent=1 // pred_fallthru
      _
    // Predicated region
    $region62: #{tpu_custom_call.1} parent=1 // pred_check
      _
    $region63: #{tpu_custom_call.1} parent=1 // pred_check_branch
      %129 = sbr.rel (0) target = $region65
    $region64: #{tpu_custom_call.1} parent=1 // pred_region
      %130 = dma.done [#allocation13], 512
    $region65: #{tpu_custom_call.1} parent=1 // pred_fallthru
      _
    %v131 = vld [vmem:[#allocation9] sm:$0xff]
    %v132 = vld [vmem:[#allocation9 + $0x8] sm:$0xff]
    %v133 = vld [vmem:[#allocation9 + $0x10] sm:$0xff]
    %v134 = vld [vmem:[#allocation9 + $0x18] sm:$0xff]
    %v135 = vld [vmem:[#allocation11] sm:$0xff]
    %v136 = vld [vmem:[#allocation11 + $0x8] sm:$0xff]
    %v137 = vld [vmem:[#allocation11 + $0x10] sm:$0xff]
    %v138 = vld [vmem:[#allocation11 + $0x18] sm:$0xff]
    %v139 = vld [vmem:[%s5] sm:$0x1]
    %v140 = vld [vmem:[#allocation3] sm:$0xff]
    %v141 = vld [vmem:[#allocation3 + $0x8] sm:$0xff]
    %v142 = vld [vmem:[#allocation3 + $0x10] sm:$0xff]
    %v143 = vld [vmem:[#allocation3 + $0x18] sm:$0xff]
    %v145 = vlaneseq
    %v146 = vshrl.u32 %v145, 7
    %v147 = vsub.s32 0, %v146
    %v148 = vrot.slane %v139, %v147
    %vm150 = vcmask 261120
    %v152 = vsel %vm150, %v140, 0
    %v155 = vsel %vm150, %v141, 0
    %v158 = vsel %vm150, %v142, 0
    %v161 = vsel %vm150, %v143, 0
    %163 = vmatprep.subr.mxu0 0.0
    %164 = vmatpush1.msra.mxu0 0.0
    %165 = vmatprep.subr.mxu0 0.0
    %166 = vmatpush1.msra.mxu0 0.0
    %167 = vmatprep.subr.mxu0 0.0
    %168 = vmatpush1.msra.mxu0 0.0
    %169 = vmatprep.subr.mxu0 0.0
    %170 = vmatpush1.msra.mxu0 0.0
    %171 = vmatprep.subr.mxu0 0.0
    %172 = vmatpush1.msra.mxu0 0.0
    %173 = vmatprep.subr.mxu0 0.0
    %174 = vmatpush1.msra.mxu0 0.0
    %175 = vmatprep.subr.mxu0 0.0
    %176 = vmatpush1.msra.mxu0 0.0
    %177 = vmatprep.subr.mxu0 0.0
    %178 = vmatpush1.msra.mxu0 0.0
    %179 = vmatprep.subr.mxu0 0.0
    %180 = vmatpush1.msra.mxu0 0.0
    %181 = vmatprep.subr.mxu0 0.0
    %182 = vmatpush1.msra.mxu0 0.0
    %183 = vmatprep.subr.mxu0 0.0
    %184 = vmatpush1.msra.mxu0 0.0
    %185 = vmatprep.subr.mxu0 0.0
    %186 = vmatpush1.msra.mxu0 0.0
    %187 = vmatprep.subr.mxu0 0.0
    %188 = vmatpush1.msra.mxu0 %v134
    %189 = vmatprep.subr.mxu0 0.0
    %190 = vmatpush1.msra.mxu0 %v133
    %191 = vmatprep.subr.mxu0 0.0
    %192 = vmatpush1.msra.mxu0 %v132
    %193 = vmatprep.subr.mxu0 0.0
    %194 = vmatpush1.msra.mxu0 %v131
    %195 = vmatprep.subr.mxu0 0.0
    %196 = vmatpush2.msra.mxu0 0.0
    %197 = vmatprep.subr.mxu0 0.0
    %198 = vmatpush2.msra.mxu0 0.0
    %199 = vmatprep.subr.mxu0 0.0
    %200 = vmatpush2.msra.mxu0 0.0
    %201 = vmatprep.subr.mxu0 0.0
    %202 = vmatpush2.msra.mxu0 0.0
    %203 = vmatprep.subr.mxu0 0.0
    %204 = vmatpush2.msra.mxu0 0.0
    %205 = vmatprep.subr.mxu0 0.0
    %206 = vmatpush2.msra.mxu0 0.0
    %207 = vmatprep.subr.mxu0 0.0
    %208 = vmatpush2.msra.mxu0 0.0
    %209 = vmatprep.subr.mxu0 0.0
    %210 = vmatpush2.msra.mxu0 0.0
    %211 = vmatprep.subr.mxu0 0.0
    %212 = vmatpush2.msra.mxu0 0.0
    %213 = vmatprep.subr.mxu0 0.0
    %214 = vmatpush2.msra.mxu0 0.0
    %215 = vmatprep.subr.mxu0 0.0
    %216 = vmatpush2.msra.mxu0 0.0
    %217 = vmatprep.subr.mxu0 0.0
    %218 = vmatpush2.msra.mxu0 0.0
    %219 = vmatprep.subr.mxu0 0.0
    %220 = vmatpush2.msra.mxu0 0.0
    %221 = vmatprep.subr.mxu0 0.0
    %222 = vmatpush2.msra.mxu0 0.0
    %223 = vmatprep.subr.mxu0 0.0
    %224 = vmatpush2.msra.mxu0 0.0
    %225 = vmatprep.subr.mxu0 0.0
    %226 = vmatpush2.msra.mxu0 0.0
    %227 = vmatprep.mubr.f32.mxu0 0.0
    %228 = vmatmul.mubr.f32.gmra.mxu0 %v152
    %v229 = vpop.f32.mrf.mxu0
    %v230 = vadd.f32 %v148, %v229
    %v231 = vpop.f32.mrf.mxu0
    %232 = vmatprep.mubr.f32.mxu0 0.0
    %233 = vmatmul.mubr.f32.gmra.mxu0 %v155
    %v234 = vpop.f32.mrf.mxu0
    %v235 = vadd.f32 %v148, %v234
    %v236 = vpop.f32.mrf.mxu0
    %237 = vmatprep.mubr.f32.mxu0 0.0
    %238 = vmatmul.mubr.f32.gmra.mxu0 %v158
    %v239 = vpop.f32.mrf.mxu0
    %v240 = vadd.f32 %v148, %v239
    %v241 = vpop.f32.mrf.mxu0
    %242 = vmatprep.mubr.f32.mxu0 0.0
    %243 = vmatmul.mubr.f32.gmra.mxu0 %v161
    %v244 = vpop.f32.mrf.mxu0
    %v245 = vadd.f32 %v148, %v244
    %v246 = vpop.f32.mrf.mxu0
    %247 = vdwg.mxu0
    %248 = vst [vmem:[#allocation2] sm:$0xff] %v230
    %249 = vst [vmem:[#allocation2 + $0x8] sm:$0xff] %v235
    %250 = vst [vmem:[#allocation2 + $0x10] sm:$0xff] %v240
    %251 = vst [vmem:[#allocation2 + $0x18] sm:$0xff] %v245
    %v252 = vld [vmem:[#allocation6] sm:$0xf]
    %v253 = vld [vmem:[#allocation8] sm:$0xf]
    %v254 = vld [vmem:[#allocation2] sm:$0xf]
    %v256 = vsel %vm150, %v252, 0
    %258 = vmatprep.subr.mxu0 0.0
    %259 = vmatpush1.msra.mxu0 0.0
    %260 = vmatprep.subr.mxu0 0.0
    %261 = vmatpush1.msra.mxu0 0.0
    %262 = vmatprep.subr.mxu0 0.0
    %263 = vmatpush1.msra.mxu0 0.0
    %264 = vmatprep.subr.mxu0 0.0
    %265 = vmatpush1.msra.mxu0 0.0
    %266 = vmatprep.subr.mxu0 0.0
    %267 = vmatpush1.msra.mxu0 0.0
    %268 = vmatprep.subr.mxu0 0.0
    %269 = vmatpush1.msra.mxu0 0.0
    %270 = vmatprep.subr.mxu0 0.0
    %271 = vmatpush1.msra.mxu0 0.0
    %272 = vmatprep.subr.mxu0 0.0
    %273 = vmatpush1.msra.mxu0 0.0
    %274 = vmatprep.subr.mxu0 0.0
    %275 = vmatpush1.msra.mxu0 0.0
    %276 = vmatprep.subr.mxu0 0.0
    %277 = vmatpush1.msra.mxu0 0.0
    %278 = vmatprep.subr.mxu0 0.0
    %279 = vmatpush1.msra.mxu0 0.0
    %280 = vmatprep.subr.mxu0 0.0
    %281 = vmatpush1.msra.mxu0 0.0
    %282 = vmatprep.subr.mxu0 0.0
    %283 = vmatpush1.msra.mxu0 %v138
    %284 = vmatprep.subr.mxu0 0.0
    %285 = vmatpush1.msra.mxu0 %v137
    %286 = vmatprep.subr.mxu0 0.0
    %287 = vmatpush1.msra.mxu0 %v136
    %288 = vmatprep.subr.mxu0 0.0
    %289 = vmatpush1.msra.mxu0 %v135
    %290 = vmatprep.subr.mxu0 0.0
    %291 = vmatpush2.msra.mxu0 0.0
    %292 = vmatprep.subr.mxu0 0.0
    %293 = vmatpush2.msra.mxu0 0.0
    %294 = vmatprep.subr.mxu0 0.0
    %295 = vmatpush2.msra.mxu0 0.0
    %296 = vmatprep.subr.mxu0 0.0
    %297 = vmatpush2.msra.mxu0 0.0
    %298 = vmatprep.subr.mxu0 0.0
    %299 = vmatpush2.msra.mxu0 0.0
    %300 = vmatprep.subr.mxu0 0.0
    %301 = vmatpush2.msra.mxu0 0.0
    %302 = vmatprep.subr.mxu0 0.0
    %303 = vmatpush2.msra.mxu0 0.0
    %304 = vmatprep.subr.mxu0 0.0
    %305 = vmatpush2.msra.mxu0 0.0
    %306 = vmatprep.subr.mxu0 0.0
    %307 = vmatpush2.msra.mxu0 0.0
    %308 = vmatprep.subr.mxu0 0.0
    %309 = vmatpush2.msra.mxu0 0.0
    %310 = vmatprep.subr.mxu0 0.0
    %311 = vmatpush2.msra.mxu0 0.0
    %312 = vmatprep.subr.mxu0 0.0
    %313 = vmatpush2.msra.mxu0 0.0
    %314 = vmatprep.subr.mxu0 0.0
    %315 = vmatpush2.msra.mxu0 0.0
    %316 = vmatprep.subr.mxu0 0.0
    %317 = vmatpush2.msra.mxu0 0.0
    %318 = vmatprep.subr.mxu0 0.0
    %319 = vmatpush2.msra.mxu0 0.0
    %320 = vmatprep.subr.mxu0 0.0
    %321 = vmatpush2.msra.mxu0 0.0
    %322 = vmatprep.mubr.f32.mxu0 0.0
    %323 = vmatmul.mubr.f32.gmra.mxu0 %v256
    %v324 = vpop.f32.mrf.mxu0
    %v325 = vadd.f32 0.0, %v324
    %v326 = vpop.f32.mrf.mxu0
    %327 = vdwg.mxu0
    %v328 = vadd.f32 %v254, %v325
    %v329 = vmul.f32 %v328, 0.5
    %v330 = vtanh.pop %v329
    %v331 = vadd.f32 %v330, 1.0
    %v332 = vmul.f32 %v331, 0.5
    %v333 = vtanh.pop %v328
    %335 = vrot.lane.b32.xlu0 %v253, 32
    %v336 = vpop.permute.xlu0 %335
    %v338 = vmul.f32 %v332, %v336
    %340 = vrot.lane.b32.xlu0 %v333, 64
    %v341 = vpop.permute.xlu0 %340
    %v343 = vmul.f32 %v332, %v341
    %345 = vrot.lane.b32.xlu0 %v343, 32
    %v346 = vpop.permute.xlu0 %345
    %v348 = vadd.f32 %v338, %v346
    %v349 = vtanh.pop %v348
    %351 = vrot.lane.b32.xlu0 %v349, 64
    %v352 = vpop.permute.xlu0 %351
    %v354 = vmul.f32 %v332, %v352
    %356 = vrot.lane.b32.xlu0 %v354, 32
    %v357 = vpop.permute.xlu0 %356
    %vm359 = vcmask 257024
    %360 = vst.msk [vmem:[#allocation15] sm:$0xf] %vm359, %v357
    %362 = vrot.lane.b32.xlu0 %v348, 96
    %v363 = vpop.permute.xlu0 %362
    %365 = vst.msk [vmem:[#allocation16] sm:$0xf] %vm359, %v363
    %s366 = scalar_lea.vmem [#allocation2], 4
    %v367 = vld [vmem:[%s366] sm:$0xf]
    %v368 = vsel %vm150, %v357, 0
    %370 = vmatprep.subr.mxu0 0.0
    %371 = vmatpush1.msra.mxu0 0.0
    %372 = vmatprep.subr.mxu0 0.0
    %373 = vmatpush1.msra.mxu0 0.0
    %374 = vmatprep.subr.mxu0 0.0
    %375 = vmatpush1.msra.mxu0 0.0
    %376 = vmatprep.subr.mxu0 0.0
    %377 = vmatpush1.msra.mxu0 0.0
    %378 = vmatprep.subr.mxu0 0.0
    %379 = vmatpush1.msra.mxu0 0.0
    %380 = vmatprep.subr.mxu0 0.0
    %381 = vmatpush1.msra.mxu0 0.0
    %382 = vmatprep.subr.mxu0 0.0
    %383 = vmatpush1.msra.mxu0 0.0
    %384 = vmatprep.subr.mxu0 0.0
    %385 = vmatpush1.msra.mxu0 0.0
    %386 = vmatprep.subr.mxu0 0.0
    %387 = vmatpush1.msra.mxu0 0.0
    %388 = vmatprep.subr.mxu0 0.0
    %389 = vmatpush1.msra.mxu0 0.0
    %390 = vmatprep.subr.mxu0 0.0
    %391 = vmatpush1.msra.mxu0 0.0
    %392 = vmatprep.subr.mxu0 0.0
    %393 = vmatpush1.msra.mxu0 0.0
    %394 = vmatprep.subr.mxu0 0.0
    %395 = vmatpush1.msra.mxu0 %v138
    %396 = vmatprep.subr.mxu0 0.0
    %397 = vmatpush1.msra.mxu0 %v137
    %398 = vmatprep.subr.mxu0 0.0
    %399 = vmatpush1.msra.mxu0 %v136
    %400 = vmatprep.subr.mxu0 0.0
    %401 = vmatpush1.msra.mxu0 %v135
    %402 = vmatprep.subr.mxu0 0.0
    %403 = vmatpush2.msra.mxu0 0.0
    %404 = vmatprep.subr.mxu0 0.0
    %405 = vmatpush2.msra.mxu0 0.0
    %406 = vmatprep.subr.mxu0 0.0
    %407 = vmatpush2.msra.mxu0 0.0
    %408 = vmatprep.subr.mxu0 0.0
    %409 = vmatpush2.msra.mxu0 0.0
    %410 = vmatprep.subr.mxu0 0.0
    %411 = vmatpush2.msra.mxu0 0.0
    %412 = vmatprep.subr.mxu0 0.0
    %413 = vmatpush2.msra.mxu0 0.0
    %414 = vmatprep.subr.mxu0 0.0
    %415 = vmatpush2.msra.mxu0 0.0
    %416 = vmatprep.subr.mxu0 0.0
    %417 = vmatpush2.msra.mxu0 0.0
    %418 = vmatprep.subr.mxu0 0.0
    %419 = vmatpush2.msra.mxu0 0.0
    %420 = vmatprep.subr.mxu0 0.0
    %421 = vmatpush2.msra.mxu0 0.0
    %422 = vmatprep.subr.mxu0 0.0
    %423 = vmatpush2.msra.mxu0 0.0
    %424 = vmatprep.subr.mxu0 0.0
    %425 = vmatpush2.msra.mxu0 0.0
    %426 = vmatprep.subr.mxu0 0.0
    %427 = vmatpush2.msra.mxu0 0.0
    %428 = vmatprep.subr.mxu0 0.0
    %429 = vmatpush2.msra.mxu0 0.0
    %430 = vmatprep.subr.mxu0 0.0
    %431 = vmatpush2.msra.mxu0 0.0
    %432 = vmatprep.subr.mxu0 0.0
    %433 = vmatpush2.msra.mxu0 0.0
    %434 = vmatprep.mubr.f32.mxu0 0.0
    %435 = vmatmul.mubr.f32.gmra.mxu0 %v368
    %v436 = vpop.f32.mrf.mxu0
    %v437 = vadd.f32 0.0, %v436
    %v438 = vpop.f32.mrf.mxu0
    %439 = vdwg.mxu0
    %v440 = vadd.f32 %v367, %v437
    %v441 = vmul.f32 %v440, 0.5
    %v442 = vtanh.pop %v441
    %v443 = vadd.f32 %v442, 1.0
    %v444 = vmul.f32 %v443, 0.5
    %v445 = vtanh.pop %v440
    %v446 = vmul.f32 %v444, %v348
    %448 = vrot.lane.b32.xlu0 %v445, 64
    %v449 = vpop.permute.xlu0 %448
    %v451 = vmul.f32 %v444, %v449
    %453 = vrot.lane.b32.xlu0 %v451, 32
    %v454 = vpop.permute.xlu0 %453
    %v456 = vadd.f32 %v446, %v454
    %v457 = vtanh.pop %v456
    %459 = vrot.lane.b32.xlu0 %v457, 64
    %v460 = vpop.permute.xlu0 %459
    %v462 = vmul.f32 %v444, %v460
    %464 = vrot.lane.b32.xlu0 %v462, 32
    %v465 = vpop.permute.xlu0 %464
    %s467 = scalar_lea.vmem [#allocation15], 4
    %468 = vst.msk [vmem:[%s467] sm:$0xf] %vm359, %v465
    %470 = vrot.lane.b32.xlu0 %v456, 96
    %v471 = vpop.permute.xlu0 %470
    %s473 = scalar_lea.vmem [#allocation16], 4
    %474 = vst.msk [vmem:[%s473] sm:$0xf] %vm359, %v471
    %s475 = scalar_lea.vmem [#allocation2], 8
    %v476 = vld [vmem:[%s475] sm:$0xf]
    %v477 = vsel %vm150, %v465, 0
    %479 = vmatprep.subr.mxu0 0.0
    %480 = vmatpush1.msra.mxu0 0.0
    %481 = vmatprep.subr.mxu0 0.0
    %482 = vmatpush1.msra.mxu0 0.0
    %483 = vmatprep.subr.mxu0 0.0
    %484 = vmatpush1.msra.mxu0 0.0
    %485 = vmatprep.subr.mxu0 0.0
    %486 = vmatpush1.msra.mxu0 0.0
    %487 = vmatprep.subr.mxu0 0.0
    %488 = vmatpush1.msra.mxu0 0.0
    %489 = vmatprep.subr.mxu0 0.0
    %490 = vmatpush1.msra.mxu0 0.0
    %491 = vmatprep.subr.mxu0 0.0
    %492 = vmatpush1.msra.mxu0 0.0
    %493 = vmatprep.subr.mxu0 0.0
    %494 = vmatpush1.msra.mxu0 0.0
    %495 = vmatprep.subr.mxu0 0.0
    %496 = vmatpush1.msra.mxu0 0.0
    %497 = vmatprep.subr.mxu0 0.0
    %498 = vmatpush1.msra.mxu0 0.0
    %499 = vmatprep.subr.mxu0 0.0
    %500 = vmatpush1.msra.mxu0 0.0
    %501 = vmatprep.subr.mxu0 0.0
    %502 = vmatpush1.msra.mxu0 0.0
    %503 = vmatprep.subr.mxu0 0.0
    %504 = vmatpush1.msra.mxu0 %v138
    %505 = vmatprep.subr.mxu0 0.0
    %506 = vmatpush1.msra.mxu0 %v137
    %507 = vmatprep.subr.mxu0 0.0
    %508 = vmatpush1.msra.mxu0 %v136
    %509 = vmatprep.subr.mxu0 0.0
    %510 = vmatpush1.msra.mxu0 %v135
    %511 = vmatprep.subr.mxu0 0.0
    %512 = vmatpush2.msra.mxu0 0.0
    %513 = vmatprep.subr.mxu0 0.0
    %514 = vmatpush2.msra.mxu0 0.0
    %515 = vmatprep.subr.mxu0 0.0
    %516 = vmatpush2.msra.mxu0 0.0
    %517 = vmatprep.subr.mxu0 0.0
    %518 = vmatpush2.msra.mxu0 0.0
    %519 = vmatprep.subr.mxu0 0.0
    %520 = vmatpush2.msra.mxu0 0.0
    %521 = vmatprep.subr.mxu0 0.0
    %522 = vmatpush2.msra.mxu0 0.0
    %523 = vmatprep.subr.mxu0 0.0
    %524 = vmatpush2.msra.mxu0 0.0
    %525 = vmatprep.subr.mxu0 0.0
    %526 = vmatpush2.msra.mxu0 0.0
    %527 = vmatprep.subr.mxu0 0.0
    %528 = vmatpush2.msra.mxu0 0.0
    %529 = vmatprep.subr.mxu0 0.0
    %530 = vmatpush2.msra.mxu0 0.0
    %531 = vmatprep.subr.mxu0 0.0
    %532 = vmatpush2.msra.mxu0 0.0
    %533 = vmatprep.subr.mxu0 0.0
    %534 = vmatpush2.msra.mxu0 0.0
    %535 = vmatprep.subr.mxu0 0.0
    %536 = vmatpush2.msra.mxu0 0.0
    %537 = vmatprep.subr.mxu0 0.0
    %538 = vmatpush2.msra.mxu0 0.0
    %539 = vmatprep.subr.mxu0 0.0
    %540 = vmatpush2.msra.mxu0 0.0
    %541 = vmatprep.subr.mxu0 0.0
    %542 = vmatpush2.msra.mxu0 0.0
    %543 = vmatprep.mubr.f32.mxu0 0.0
    %544 = vmatmul.mubr.f32.gmra.mxu0 %v477
    %v545 = vpop.f32.mrf.mxu0
    %v546 = vadd.f32 0.0, %v545
    %v547 = vpop.f32.mrf.mxu0
    %548 = vdwg.mxu0
    %v549 = vadd.f32 %v476, %v546
    %v550 = vmul.f32 %v549, 0.5
    %v551 = vtanh.pop %v550
    %v552 = vadd.f32 %v551, 1.0
    %v553 = vmul.f32 %v552, 0.5
    %v554 = vtanh.pop %v549
    %v555 = vmul.f32 %v553, %v456
    %557 = vrot.lane.b32.xlu0 %v554, 64
    %v558 = vpop.permute.xlu0 %557
    %v560 = vmul.f32 %v553, %v558
    %562 = vrot.lane.b32.xlu0 %v560, 32
    %v563 = vpop.permute.xlu0 %562
    %v565 = vadd.f32 %v555, %v563
    %v566 = vtanh.pop %v565
    %568 = vrot.lane.b32.xlu0 %v566, 64
    %v569 = vpop.permute.xlu0 %568
    %v571 = vmul.f32 %v553, %v569
    %573 = vrot.lane.b32.xlu0 %v571, 32
    %v574 = vpop.permute.xlu0 %573
    %s576 = scalar_lea.vmem [#allocation15], 8
    %577 = vst.msk [vmem:[%s576] sm:$0xf] %vm359, %v574
    %579 = vrot.lane.b32.xlu0 %v565, 96
    %v580 = vpop.permute.xlu0 %579
    %s582 = scalar_lea.vmem [#allocation16], 8
    %583 = vst.msk [vmem:[%s582] sm:$0xf] %vm359, %v580
    %s584 = scalar_lea.vmem [#allocation2], 12
    %v585 = vld [vmem:[%s584] sm:$0xf]
    %v586 = vsel %vm150, %v574, 0
    %588 = vmatprep.subr.mxu0 0.0
    %589 = vmatpush1.msra.mxu0 0.0
    %590 = vmatprep.subr.mxu0 0.0
    %591 = vmatpush1.msra.mxu0 0.0
    %592 = vmatprep.subr.mxu0 0.0
    %593 = vmatpush1.msra.mxu0 0.0
    %594 = vmatprep.subr.mxu0 0.0
    %595 = vmatpush1.msra.mxu0 0.0
    %596 = vmatprep.subr.mxu0 0.0
    %597 = vmatpush1.msra.mxu0 0.0
    %598 = vmatprep.subr.mxu0 0.0
    %599 = vmatpush1.msra.mxu0 0.0
    %600 = vmatprep.subr.mxu0 0.0
    %601 = vmatpush1.msra.mxu0 0.0
    %602 = vmatprep.subr.mxu0 0.0
    %603 = vmatpush1.msra.mxu0 0.0
    %604 = vmatprep.subr.mxu0 0.0
    %605 = vmatpush1.msra.mxu0 0.0
    %606 = vmatprep.subr.mxu0 0.0
    %607 = vmatpush1.msra.mxu0 0.0
    %608 = vmatprep.subr.mxu0 0.0
    %609 = vmatpush1.msra.mxu0 0.0
    %610 = vmatprep.subr.mxu0 0.0
    %611 = vmatpush1.msra.mxu0 0.0
    %612 = vmatprep.subr.mxu0 0.0
    %613 = vmatpush1.msra.mxu0 %v138
    %614 = vmatprep.subr.mxu0 0.0
    %615 = vmatpush1.msra.mxu0 %v137
    %616 = vmatprep.subr.mxu0 0.0
    %617 = vmatpush1.msra.mxu0 %v136
    %618 = vmatprep.subr.mxu0 0.0
    %619 = vmatpush1.msra.mxu0 %v135
    %620 = vmatprep.subr.mxu0 0.0
    %621 = vmatpush2.msra.mxu0 0.0
    %622 = vmatprep.subr.mxu0 0.0
    %623 = vmatpush2.msra.mxu0 0.0
    %624 = vmatprep.subr.mxu0 0.0
    %625 = vmatpush2.msra.mxu0 0.0
    %626 = vmatprep.subr.mxu0 0.0
    %627 = vmatpush2.msra.mxu0 0.0
    %628 = vmatprep.subr.mxu0 0.0
    %629 = vmatpush2.msra.mxu0 0.0
    %630 = vmatprep.subr.mxu0 0.0
    %631 = vmatpush2.msra.mxu0 0.0
    %632 = vmatprep.subr.mxu0 0.0
    %633 = vmatpush2.msra.mxu0 0.0
    %634 = vmatprep.subr.mxu0 0.0
    %635 = vmatpush2.msra.mxu0 0.0
    %636 = vmatprep.subr.mxu0 0.0
    %637 = vmatpush2.msra.mxu0 0.0
    %638 = vmatprep.subr.mxu0 0.0
    %639 = vmatpush2.msra.mxu0 0.0
    %640 = vmatprep.subr.mxu0 0.0
    %641 = vmatpush2.msra.mxu0 0.0
    %642 = vmatprep.subr.mxu0 0.0
    %643 = vmatpush2.msra.mxu0 0.0
    %644 = vmatprep.subr.mxu0 0.0
    %645 = vmatpush2.msra.mxu0 0.0
    %646 = vmatprep.subr.mxu0 0.0
    %647 = vmatpush2.msra.mxu0 0.0
    %648 = vmatprep.subr.mxu0 0.0
    %649 = vmatpush2.msra.mxu0 0.0
    %650 = vmatprep.subr.mxu0 0.0
    %651 = vmatpush2.msra.mxu0 0.0
    %652 = vmatprep.mubr.f32.mxu0 0.0
    %653 = vmatmul.mubr.f32.gmra.mxu0 %v586
    %v654 = vpop.f32.mrf.mxu0
    %v655 = vadd.f32 0.0, %v654
    %v656 = vpop.f32.mrf.mxu0
    %657 = vdwg.mxu0
    %v658 = vadd.f32 %v585, %v655
    %v659 = vmul.f32 %v658, 0.5
    %v660 = vtanh.pop %v659
    %v661 = vadd.f32 %v660, 1.0
    %v662 = vmul.f32 %v661, 0.5
    %v663 = vtanh.pop %v658
    %v664 = vmul.f32 %v662, %v565
    %666 = vrot.lane.b32.xlu0 %v663, 64
    %v667 = vpop.permute.xlu0 %666
    %v669 = vmul.f32 %v662, %v667
    %671 = vrot.lane.b32.xlu0 %v669, 32
    %v672 = vpop.permute.xlu0 %671
    %v674 = vadd.f32 %v664, %v672
    %v675 = vtanh.pop %v674
    %677 = vrot.lane.b32.xlu0 %v675, 64
    %v678 = vpop.permute.xlu0 %677
    %v680 = vmul.f32 %v662, %v678
    %682 = vrot.lane.b32.xlu0 %v680, 32
    %v683 = vpop.permute.xlu0 %682
    %s685 = scalar_lea.vmem [#allocation15], 12
    %686 = vst.msk [vmem:[%s685] sm:$0xf] %vm359, %v683
    %688 = vrot.lane.b32.xlu0 %v674, 96
    %v689 = vpop.permute.xlu0 %688
    %s691 = scalar_lea.vmem [#allocation16], 12
    %692 = vst.msk [vmem:[%s691] sm:$0xf] %vm359, %v689
    %s693 = scalar_lea.vmem [#allocation2], 16
    %v694 = vld [vmem:[%s693] sm:$0xf]
    %v695 = vsel %vm150, %v683, 0
    %697 = vmatprep.subr.mxu0 0.0
    %698 = vmatpush1.msra.mxu0 0.0
    %699 = vmatprep.subr.mxu0 0.0
    %700 = vmatpush1.msra.mxu0 0.0
    %701 = vmatprep.subr.mxu0 0.0
    %702 = vmatpush1.msra.mxu0 0.0
    %703 = vmatprep.subr.mxu0 0.0
    %704 = vmatpush1.msra.mxu0 0.0
    %705 = vmatprep.subr.mxu0 0.0
    %706 = vmatpush1.msra.mxu0 0.0
    %707 = vmatprep.subr.mxu0 0.0
    %708 = vmatpush1.msra.mxu0 0.0
    %709 = vmatprep.subr.mxu0 0.0
    %710 = vmatpush1.msra.mxu0 0.0
    %711 = vmatprep.subr.mxu0 0.0
    %712 = vmatpush1.msra.mxu0 0.0
    %713 = vmatprep.subr.mxu0 0.0
    %714 = vmatpush1.msra.mxu0 0.0
    %715 = vmatprep.subr.mxu0 0.0
    %716 = vmatpush1.msra.mxu0 0.0
    %717 = vmatprep.subr.mxu0 0.0
    %718 = vmatpush1.msra.mxu0 0.0
    %719 = vmatprep.subr.mxu0 0.0
    %720 = vmatpush1.msra.mxu0 0.0
    %721 = vmatprep.subr.mxu0 0.0
    %722 = vmatpush1.msra.mxu0 %v138
    %723 = vmatprep.subr.mxu0 0.0
    %724 = vmatpush1.msra.mxu0 %v137
    %725 = vmatprep.subr.mxu0 0.0
    %726 = vmatpush1.msra.mxu0 %v136
    %727 = vmatprep.subr.mxu0 0.0
    %728 = vmatpush1.msra.mxu0 %v135
    %729 = vmatprep.subr.mxu0 0.0
    %730 = vmatpush2.msra.mxu0 0.0
    %731 = vmatprep.subr.mxu0 0.0
    %732 = vmatpush2.msra.mxu0 0.0
    %733 = vmatprep.subr.mxu0 0.0
    %734 = vmatpush2.msra.mxu0 0.0
    %735 = vmatprep.subr.mxu0 0.0
    %736 = vmatpush2.msra.mxu0 0.0
    %737 = vmatprep.subr.mxu0 0.0
    %738 = vmatpush2.msra.mxu0 0.0
    %739 = vmatprep.subr.mxu0 0.0
    %740 = vmatpush2.msra.mxu0 0.0
    %741 = vmatprep.subr.mxu0 0.0
    %742 = vmatpush2.msra.mxu0 0.0
    %743 = vmatprep.subr.mxu0 0.0
    %744 = vmatpush2.msra.mxu0 0.0
    %745 = vmatprep.subr.mxu0 0.0
    %746 = vmatpush2.msra.mxu0 0.0
    %747 = vmatprep.subr.mxu0 0.0
    %748 = vmatpush2.msra.mxu0 0.0
    %749 = vmatprep.subr.mxu0 0.0
    %750 = vmatpush2.msra.mxu0 0.0
    %751 = vmatprep.subr.mxu0 0.0
    %752 = vmatpush2.msra.mxu0 0.0
    %753 = vmatprep.subr.mxu0 0.0
    %754 = vmatpush2.msra.mxu0 0.0
    %755 = vmatprep.subr.mxu0 0.0
    %756 = vmatpush2.msra.mxu0 0.0
    %757 = vmatprep.subr.mxu0 0.0
    %758 = vmatpush2.msra.mxu0 0.0
    %759 = vmatprep.subr.mxu0 0.0
    %760 = vmatpush2.msra.mxu0 0.0
    %761 = vmatprep.mubr.f32.mxu0 0.0
    %762 = vmatmul.mubr.f32.gmra.mxu0 %v695
    %v763 = vpop.f32.mrf.mxu0
    %v764 = vadd.f32 0.0, %v763
    %v765 = vpop.f32.mrf.mxu0
    %766 = vdwg.mxu0
    %v767 = vadd.f32 %v694, %v764
    %v768 = vmul.f32 %v767, 0.5
    %v769 = vtanh.pop %v768
    %v770 = vadd.f32 %v769, 1.0
    %v771 = vmul.f32 %v770, 0.5
    %v772 = vtanh.pop %v767
    %v773 = vmul.f32 %v771, %v674
    %775 = vrot.lane.b32.xlu0 %v772, 64
    %v776 = vpop.permute.xlu0 %775
    %v778 = vmul.f32 %v771, %v776
    %780 = vrot.lane.b32.xlu0 %v778, 32
    %v781 = vpop.permute.xlu0 %780
    %v783 = vadd.f32 %v773, %v781
    %v784 = vtanh.pop %v783
    %786 = vrot.lane.b32.xlu0 %v784, 64
    %v787 = vpop.permute.xlu0 %786
    %v789 = vmul.f32 %v771, %v787
    %791 = vrot.lane.b32.xlu0 %v789, 32
    %v792 = vpop.permute.xlu0 %791
    %s794 = scalar_lea.vmem [#allocation15], 16
    %795 = vst.msk [vmem:[%s794] sm:$0xf] %vm359, %v792
    %797 = vrot.lane.b32.xlu0 %v783, 96
    %v798 = vpop.permute.xlu0 %797
    %s800 = scalar_lea.vmem [#allocation16], 16
    %801 = vst.msk [vmem:[%s800] sm:$0xf] %vm359, %v798
    %s802 = scalar_lea.vmem [#allocation2], 20
    %v803 = vld [vmem:[%s802] sm:$0xf]
    %v804 = vsel %vm150, %v792, 0
    %806 = vmatprep.subr.mxu0 0.0
    %807 = vmatpush1.msra.mxu0 0.0
    %808 = vmatprep.subr.mxu0 0.0
    %809 = vmatpush1.msra.mxu0 0.0
    %810 = vmatprep.subr.mxu0 0.0
    %811 = vmatpush1.msra.mxu0 0.0
    %812 = vmatprep.subr.mxu0 0.0
    %813 = vmatpush1.msra.mxu0 0.0
    %814 = vmatprep.subr.mxu0 0.0
    %815 = vmatpush1.msra.mxu0 0.0
    %816 = vmatprep.subr.mxu0 0.0
    %817 = vmatpush1.msra.mxu0 0.0
    %818 = vmatprep.subr.mxu0 0.0
    %819 = vmatpush1.msra.mxu0 0.0
    %820 = vmatprep.subr.mxu0 0.0
    %821 = vmatpush1.msra.mxu0 0.0
    %822 = vmatprep.subr.mxu0 0.0
    %823 = vmatpush1.msra.mxu0 0.0
    %824 = vmatprep.subr.mxu0 0.0
    %825 = vmatpush1.msra.mxu0 0.0
    %826 = vmatprep.subr.mxu0 0.0
    %827 = vmatpush1.msra.mxu0 0.0
    %828 = vmatprep.subr.mxu0 0.0
    %829 = vmatpush1.msra.mxu0 0.0
    %830 = vmatprep.subr.mxu0 0.0
    %831 = vmatpush1.msra.mxu0 %v138
    %832 = vmatprep.subr.mxu0 0.0
    %833 = vmatpush1.msra.mxu0 %v137
    %834 = vmatprep.subr.mxu0 0.0
    %835 = vmatpush1.msra.mxu0 %v136
    %836 = vmatprep.subr.mxu0 0.0
    %837 = vmatpush1.msra.mxu0 %v135
    %838 = vmatprep.subr.mxu0 0.0
    %839 = vmatpush2.msra.mxu0 0.0
    %840 = vmatprep.subr.mxu0 0.0
    %841 = vmatpush2.msra.mxu0 0.0
    %842 = vmatprep.subr.mxu0 0.0
    %843 = vmatpush2.msra.mxu0 0.0
    %844 = vmatprep.subr.mxu0 0.0
    %845 = vmatpush2.msra.mxu0 0.0
    %846 = vmatprep.subr.mxu0 0.0
    %847 = vmatpush2.msra.mxu0 0.0
    %848 = vmatprep.subr.mxu0 0.0
    %849 = vmatpush2.msra.mxu0 0.0
    %850 = vmatprep.subr.mxu0 0.0
    %851 = vmatpush2.msra.mxu0 0.0
    %852 = vmatprep.subr.mxu0 0.0
    %853 = vmatpush2.msra.mxu0 0.0
    %854 = vmatprep.subr.mxu0 0.0
    %855 = vmatpush2.msra.mxu0 0.0
    %856 = vmatprep.subr.mxu0 0.0
    %857 = vmatpush2.msra.mxu0 0.0
    %858 = vmatprep.subr.mxu0 0.0
    %859 = vmatpush2.msra.mxu0 0.0
    %860 = vmatprep.subr.mxu0 0.0
    %861 = vmatpush2.msra.mxu0 0.0
    %862 = vmatprep.subr.mxu0 0.0
    %863 = vmatpush2.msra.mxu0 0.0
    %864 = vmatprep.subr.mxu0 0.0
    %865 = vmatpush2.msra.mxu0 0.0
    %866 = vmatprep.subr.mxu0 0.0
    %867 = vmatpush2.msra.mxu0 0.0
    %868 = vmatprep.subr.mxu0 0.0
    %869 = vmatpush2.msra.mxu0 0.0
    %870 = vmatprep.mubr.f32.mxu0 0.0
    %871 = vmatmul.mubr.f32.gmra.mxu0 %v804
    %v872 = vpop.f32.mrf.mxu0
    %v873 = vadd.f32 0.0, %v872
    %v874 = vpop.f32.mrf.mxu0
    %875 = vdwg.mxu0
    %v876 = vadd.f32 %v803, %v873
    %v877 = vmul.f32 %v876, 0.5
    %v878 = vtanh.pop %v877
    %v879 = vadd.f32 %v878, 1.0
    %v880 = vmul.f32 %v879, 0.5
    %v881 = vtanh.pop %v876
    %v882 = vmul.f32 %v880, %v783
    %884 = vrot.lane.b32.xlu0 %v881, 64
    %v885 = vpop.permute.xlu0 %884
    %v887 = vmul.f32 %v880, %v885
    %889 = vrot.lane.b32.xlu0 %v887, 32
    %v890 = vpop.permute.xlu0 %889
    %v892 = vadd.f32 %v882, %v890
    %v893 = vtanh.pop %v892
    %895 = vrot.lane.b32.xlu0 %v893, 64
    %v896 = vpop.permute.xlu0 %895
    %v898 = vmul.f32 %v880, %v896
    %900 = vrot.lane.b32.xlu0 %v898, 32
    %v901 = vpop.permute.xlu0 %900
    %s903 = scalar_lea.vmem [#allocation15], 20
    %904 = vst.msk [vmem:[%s903] sm:$0xf] %vm359, %v901
    %906 = vrot.lane.b32.xlu0 %v892, 96
    %v907 = vpop.permute.xlu0 %906
    %s909 = scalar_lea.vmem [#allocation16], 20
    %910 = vst.msk [vmem:[%s909] sm:$0xf] %vm359, %v907
    %s911 = scalar_lea.vmem [#allocation2], 24
    %v912 = vld [vmem:[%s911] sm:$0xf]
    %v913 = vsel %vm150, %v901, 0
    %915 = vmatprep.subr.mxu0 0.0
    %916 = vmatpush1.msra.mxu0 0.0
    %917 = vmatprep.subr.mxu0 0.0
    %918 = vmatpush1.msra.mxu0 0.0
    %919 = vmatprep.subr.mxu0 0.0
    %920 = vmatpush1.msra.mxu0 0.0
    %921 = vmatprep.subr.mxu0 0.0
    %922 = vmatpush1.msra.mxu0 0.0
    %923 = vmatprep.subr.mxu0 0.0
    %924 = vmatpush1.msra.mxu0 0.0
    %925 = vmatprep.subr.mxu0 0.0
    %926 = vmatpush1.msra.mxu0 0.0
    %927 = vmatprep.subr.mxu0 0.0
    %928 = vmatpush1.msra.mxu0 0.0
    %929 = vmatprep.subr.mxu0 0.0
    %930 = vmatpush1.msra.mxu0 0.0
    %931 = vmatprep.subr.mxu0 0.0
    %932 = vmatpush1.msra.mxu0 0.0
    %933 = vmatprep.subr.mxu0 0.0
    %934 = vmatpush1.msra.mxu0 0.0
    %935 = vmatprep.subr.mxu0 0.0
    %936 = vmatpush1.msra.mxu0 0.0
    %937 = vmatprep.subr.mxu0 0.0
    %938 = vmatpush1.msra.mxu0 0.0
    %939 = vmatprep.subr.mxu0 0.0
    %940 = vmatpush1.msra.mxu0 %v138
    %941 = vmatprep.subr.mxu0 0.0
    %942 = vmatpush1.msra.mxu0 %v137
    %943 = vmatprep.subr.mxu0 0.0
    %944 = vmatpush1.msra.mxu0 %v136
    %945 = vmatprep.subr.mxu0 0.0
    %946 = vmatpush1.msra.mxu0 %v135
    %947 = vmatprep.subr.mxu0 0.0
    %948 = vmatpush2.msra.mxu0 0.0
    %949 = vmatprep.subr.mxu0 0.0
    %950 = vmatpush2.msra.mxu0 0.0
    %951 = vmatprep.subr.mxu0 0.0
    %952 = vmatpush2.msra.mxu0 0.0
    %953 = vmatprep.subr.mxu0 0.0
    %954 = vmatpush2.msra.mxu0 0.0
    %955 = vmatprep.subr.mxu0 0.0
    %956 = vmatpush2.msra.mxu0 0.0
    %957 = vmatprep.subr.mxu0 0.0
    %958 = vmatpush2.msra.mxu0 0.0
    %959 = vmatprep.subr.mxu0 0.0
    %960 = vmatpush2.msra.mxu0 0.0
    %961 = vmatprep.subr.mxu0 0.0
    %962 = vmatpush2.msra.mxu0 0.0
    %963 = vmatprep.subr.mxu0 0.0
    %964 = vmatpush2.msra.mxu0 0.0
    %965 = vmatprep.subr.mxu0 0.0
    %966 = vmatpush2.msra.mxu0 0.0
    %967 = vmatprep.subr.mxu0 0.0
    %968 = vmatpush2.msra.mxu0 0.0
    %969 = vmatprep.subr.mxu0 0.0
    %970 = vmatpush2.msra.mxu0 0.0
    %971 = vmatprep.subr.mxu0 0.0
    %972 = vmatpush2.msra.mxu0 0.0
    %973 = vmatprep.subr.mxu0 0.0
    %974 = vmatpush2.msra.mxu0 0.0
    %975 = vmatprep.subr.mxu0 0.0
    %976 = vmatpush2.msra.mxu0 0.0
    %977 = vmatprep.subr.mxu0 0.0
    %978 = vmatpush2.msra.mxu0 0.0
    %979 = vmatprep.mubr.f32.mxu0 0.0
    %980 = vmatmul.mubr.f32.gmra.mxu0 %v913
    %v981 = vpop.f32.mrf.mxu0
    %v982 = vadd.f32 0.0, %v981
    %v983 = vpop.f32.mrf.mxu0
    %984 = vdwg.mxu0
    %v985 = vadd.f32 %v912, %v982
    %v986 = vmul.f32 %v985, 0.5
    %v987 = vtanh.pop %v986
    %v988 = vadd.f32 %v987, 1.0
    %v989 = vmul.f32 %v988, 0.5
    %v990 = vtanh.pop %v985
    %v991 = vmul.f32 %v989, %v892
    %993 = vrot.lane.b32.xlu0 %v990, 64
    %v994 = vpop.permute.xlu0 %993
    %v996 = vmul.f32 %v989, %v994
    %998 = vrot.lane.b32.xlu0 %v996, 32
    %v999 = vpop.permute.xlu0 %998
    %v1001 = vadd.f32 %v991, %v999
    %v1002 = vtanh.pop %v1001
    %1004 = vrot.lane.b32.xlu0 %v1002, 64
    %v1005 = vpop.permute.xlu0 %1004
    %v1007 = vmul.f32 %v989, %v1005
    %1009 = vrot.lane.b32.xlu0 %v1007, 32
    %v1010 = vpop.permute.xlu0 %1009
    %s1012 = scalar_lea.vmem [#allocation15], 24
    %1013 = vst.msk [vmem:[%s1012] sm:$0xf] %vm359, %v1010
    %1015 = vrot.lane.b32.xlu0 %v1001, 96
    %v1016 = vpop.permute.xlu0 %1015
    %s1018 = scalar_lea.vmem [#allocation16], 24
    %1019 = vst.msk [vmem:[%s1018] sm:$0xf] %vm359, %v1016
    %s1020 = scalar_lea.vmem [#allocation2], 28
    %v1021 = vld [vmem:[%s1020] sm:$0xf]
    %v1022 = vsel %vm150, %v1010, 0
    %1024 = vmatprep.subr.mxu0 0.0
    %1025 = vmatpush1.msra.mxu0 0.0
    %1026 = vmatprep.subr.mxu0 0.0
    %1027 = vmatpush1.msra.mxu0 0.0
    %1028 = vmatprep.subr.mxu0 0.0
    %1029 = vmatpush1.msra.mxu0 0.0
    %1030 = vmatprep.subr.mxu0 0.0
    %1031 = vmatpush1.msra.mxu0 0.0
    %1032 = vmatprep.subr.mxu0 0.0
    %1033 = vmatpush1.msra.mxu0 0.0
    %1034 = vmatprep.subr.mxu0 0.0
    %1035 = vmatpush1.msra.mxu0 0.0
    %1036 = vmatprep.subr.mxu0 0.0
    %1037 = vmatpush1.msra.mxu0 0.0
    %1038 = vmatprep.subr.mxu0 0.0
    %1039 = vmatpush1.msra.mxu0 0.0
    %1040 = vmatprep.subr.mxu0 0.0
    %1041 = vmatpush1.msra.mxu0 0.0
    %1042 = vmatprep.subr.mxu0 0.0
    %1043 = vmatpush1.msra.mxu0 0.0
    %1044 = vmatprep.subr.mxu0 0.0
    %1045 = vmatpush1.msra.mxu0 0.0
    %1046 = vmatprep.subr.mxu0 0.0
    %1047 = vmatpush1.msra.mxu0 0.0
    %1048 = vmatprep.subr.mxu0 0.0
    %1049 = vmatpush1.msra.mxu0 %v138
    %1050 = vmatprep.subr.mxu0 0.0
    %1051 = vmatpush1.msra.mxu0 %v137
    %1052 = vmatprep.subr.mxu0 0.0
    %1053 = vmatpush1.msra.mxu0 %v136
    %1054 = vmatprep.subr.mxu0 0.0
    %1055 = vmatpush1.msra.mxu0 %v135
    %1056 = vmatprep.subr.mxu0 0.0
    %1057 = vmatpush2.msra.mxu0 0.0
    %1058 = vmatprep.subr.mxu0 0.0
    %1059 = vmatpush2.msra.mxu0 0.0
    %1060 = vmatprep.subr.mxu0 0.0
    %1061 = vmatpush2.msra.mxu0 0.0
    %1062 = vmatprep.subr.mxu0 0.0
    %1063 = vmatpush2.msra.mxu0 0.0
    %1064 = vmatprep.subr.mxu0 0.0
    %1065 = vmatpush2.msra.mxu0 0.0
    %1066 = vmatprep.subr.mxu0 0.0
    %1067 = vmatpush2.msra.mxu0 0.0
    %1068 = vmatprep.subr.mxu0 0.0
    %1069 = vmatpush2.msra.mxu0 0.0
    %1070 = vmatprep.subr.mxu0 0.0
    %1071 = vmatpush2.msra.mxu0 0.0
    %1072 = vmatprep.subr.mxu0 0.0
    %1073 = vmatpush2.msra.mxu0 0.0
    %1074 = vmatprep.subr.mxu0 0.0
    %1075 = vmatpush2.msra.mxu0 0.0
    %1076 = vmatprep.subr.mxu0 0.0
    %1077 = vmatpush2.msra.mxu0 0.0
    %1078 = vmatprep.subr.mxu0 0.0
    %1079 = vmatpush2.msra.mxu0 0.0
    %1080 = vmatprep.subr.mxu0 0.0
    %1081 = vmatpush2.msra.mxu0 0.0
    %1082 = vmatprep.subr.mxu0 0.0
    %1083 = vmatpush2.msra.mxu0 0.0
    %1084 = vmatprep.subr.mxu0 0.0
    %1085 = vmatpush2.msra.mxu0 0.0
    %1086 = vmatprep.subr.mxu0 0.0
    %1087 = vmatpush2.msra.mxu0 0.0
    %1088 = vmatprep.mubr.f32.mxu0 0.0
    %1089 = vmatmul.mubr.f32.gmra.mxu0 %v1022
    %v1090 = vpop.f32.mrf.mxu0
    %v1091 = vadd.f32 0.0, %v1090
    %v1092 = vpop.f32.mrf.mxu0
    %1093 = vdwg.mxu0
    %v1094 = vadd.f32 %v1021, %v1091
    %v1095 = vmul.f32 %v1094, 0.5
    %v1096 = vtanh.pop %v1095
    %v1097 = vadd.f32 %v1096, 1.0
    %v1098 = vmul.f32 %v1097, 0.5
    %v1099 = vtanh.pop %v1094
    %v1100 = vmul.f32 %v1098, %v1001
    %1102 = vrot.lane.b32.xlu0 %v1099, 64
    %v1103 = vpop.permute.xlu0 %1102
    %v1105 = vmul.f32 %v1098, %v1103
    %1107 = vrot.lane.b32.xlu0 %v1105, 32
    %v1108 = vpop.permute.xlu0 %1107
    %v1110 = vadd.f32 %v1100, %v1108
    %v1111 = vtanh.pop %v1110
    %1113 = vrot.lane.b32.xlu0 %v1111, 64
    %v1114 = vpop.permute.xlu0 %1113
    %v1116 = vmul.f32 %v1098, %v1114
    %1118 = vrot.lane.b32.xlu0 %v1116, 32
    %v1119 = vpop.permute.xlu0 %1118
    %s1121 = scalar_lea.vmem [#allocation15], 28
    %1122 = vst.msk [vmem:[%s1121] sm:$0xf] %vm359, %v1119
    %1124 = vrot.lane.b32.xlu0 %v1110, 96
    %v1125 = vpop.permute.xlu0 %1124
    %s1127 = scalar_lea.vmem [#allocation16], 28
    %1128 = vst.msk [vmem:[%s1127] sm:$0xf] %vm359, %v1125
    %v1129 = vld [vmem:[#allocation12] sm:$0xff]
    %v1130 = vld [vmem:[#allocation12 + $0x8] sm:$0xff]
    %v1131 = vld [vmem:[#allocation12 + $0x10] sm:$0xff]
    %v1132 = vld [vmem:[#allocation12 + $0x18] sm:$0xff]
    %v1133 = vld [vmem:[#allocation14] sm:$0xff]
    %v1134 = vld [vmem:[#allocation14 + $0x8] sm:$0xff]
    %v1135 = vld [vmem:[#allocation14 + $0x10] sm:$0xff]
    %v1136 = vld [vmem:[#allocation14 + $0x18] sm:$0xff]
    %v1137 = vld [vmem:[%s8] sm:$0x1]
    %v1138 = vld [vmem:[#allocation15] sm:$0xff]
    %v1139 = vld [vmem:[#allocation15 + $0x8] sm:$0xff]
    %v1140 = vld [vmem:[#allocation15 + $0x10] sm:$0xff]
    %v1141 = vld [vmem:[#allocation15 + $0x18] sm:$0xff]
    %v1143 = vlaneseq
    %v1144 = vshrl.u32 %v1143, 7
    %v1145 = vsub.s32 0, %v1144
    %v1146 = vrot.slane %v1137, %v1145
    %v1149 = vsel %vm150, %v1138, 0
    %v1152 = vsel %vm150, %v1139, 0
    %v1155 = vsel %vm150, %v1140, 0
    %v1158 = vsel %vm150, %v1141, 0
    %1160 = vmatprep.subr.mxu0 0.0
    %1161 = vmatpush1.msra.mxu0 0.0
    %1162 = vmatprep.subr.mxu0 0.0
    %1163 = vmatpush1.msra.mxu0 0.0
    %1164 = vmatprep.subr.mxu0 0.0
    %1165 = vmatpush1.msra.mxu0 0.0
    %1166 = vmatprep.subr.mxu0 0.0
    %1167 = vmatpush1.msra.mxu0 0.0
    %1168 = vmatprep.subr.mxu0 0.0
    %1169 = vmatpush1.msra.mxu0 0.0
    %1170 = vmatprep.subr.mxu0 0.0
    %1171 = vmatpush1.msra.mxu0 0.0
    %1172 = vmatprep.subr.mxu0 0.0
    %1173 = vmatpush1.msra.mxu0 0.0
    %1174 = vmatprep.subr.mxu0 0.0
    %1175 = vmatpush1.msra.mxu0 0.0
    %1176 = vmatprep.subr.mxu0 0.0
    %1177 = vmatpush1.msra.mxu0 0.0
    %1178 = vmatprep.subr.mxu0 0.0
    %1179 = vmatpush1.msra.mxu0 0.0
    %1180 = vmatprep.subr.mxu0 0.0
    %1181 = vmatpush1.msra.mxu0 0.0
    %1182 = vmatprep.subr.mxu0 0.0
    %1183 = vmatpush1.msra.mxu0 0.0
    %1184 = vmatprep.subr.mxu0 0.0
    %1185 = vmatpush1.msra.mxu0 %v1132
    %1186 = vmatprep.subr.mxu0 0.0
    %1187 = vmatpush1.msra.mxu0 %v1131
    %1188 = vmatprep.subr.mxu0 0.0
    %1189 = vmatpush1.msra.mxu0 %v1130
    %1190 = vmatprep.subr.mxu0 0.0
    %1191 = vmatpush1.msra.mxu0 %v1129
    %1192 = vmatprep.subr.mxu0 0.0
    %1193 = vmatpush2.msra.mxu0 0.0
    %1194 = vmatprep.subr.mxu0 0.0
    %1195 = vmatpush2.msra.mxu0 0.0
    %1196 = vmatprep.subr.mxu0 0.0
    %1197 = vmatpush2.msra.mxu0 0.0
    %1198 = vmatprep.subr.mxu0 0.0
    %1199 = vmatpush2.msra.mxu0 0.0
    %1200 = vmatprep.subr.mxu0 0.0
    %1201 = vmatpush2.msra.mxu0 0.0
    %1202 = vmatprep.subr.mxu0 0.0
    %1203 = vmatpush2.msra.mxu0 0.0
    %1204 = vmatprep.subr.mxu0 0.0
    %1205 = vmatpush2.msra.mxu0 0.0
    %1206 = vmatprep.subr.mxu0 0.0
    %1207 = vmatpush2.msra.mxu0 0.0
    %1208 = vmatprep.subr.mxu0 0.0
    %1209 = vmatpush2.msra.mxu0 0.0
    %1210 = vmatprep.subr.mxu0 0.0
    %1211 = vmatpush2.msra.mxu0 0.0
    %1212 = vmatprep.subr.mxu0 0.0
    %1213 = vmatpush2.msra.mxu0 0.0
    %1214 = vmatprep.subr.mxu0 0.0
    %1215 = vmatpush2.msra.mxu0 0.0
    %1216 = vmatprep.subr.mxu0 0.0
    %1217 = vmatpush2.msra.mxu0 0.0
    %1218 = vmatprep.subr.mxu0 0.0
    %1219 = vmatpush2.msra.mxu0 0.0
    %1220 = vmatprep.subr.mxu0 0.0
    %1221 = vmatpush2.msra.mxu0 0.0
    %1222 = vmatprep.subr.mxu0 0.0
    %1223 = vmatpush2.msra.mxu0 0.0
    %1224 = vmatprep.mubr.f32.mxu0 0.0
    %1225 = vmatmul.mubr.f32.gmra.mxu0 %v1149
    %v1226 = vpop.f32.mrf.mxu0
    %v1227 = vadd.f32 %v1146, %v1226
    %v1228 = vpop.f32.mrf.mxu0
    %1229 = vmatprep.mubr.f32.mxu0 0.0
    %1230 = vmatmul.mubr.f32.gmra.mxu0 %v1152
    %v1231 = vpop.f32.mrf.mxu0
    %v1232 = vadd.f32 %v1146, %v1231
    %v1233 = vpop.f32.mrf.mxu0
    %1234 = vmatprep.mubr.f32.mxu0 0.0
    %1235 = vmatmul.mubr.f32.gmra.mxu0 %v1155
    %v1236 = vpop.f32.mrf.mxu0
    %v1237 = vadd.f32 %v1146, %v1236
    %v1238 = vpop.f32.mrf.mxu0
    %1239 = vmatprep.mubr.f32.mxu0 0.0
    %1240 = vmatmul.mubr.f32.gmra.mxu0 %v1158
    %v1241 = vpop.f32.mrf.mxu0
    %v1242 = vadd.f32 %v1146, %v1241
    %v1243 = vpop.f32.mrf.mxu0
    %1244 = vdwg.mxu0
    %1245 = vst [vmem:[#allocation2] sm:$0xff] %v1227
    %1246 = vst [vmem:[#allocation2 + $0x8] sm:$0xff] %v1232
    %1247 = vst [vmem:[#allocation2 + $0x10] sm:$0xff] %v1237
    %1248 = vst [vmem:[#allocation2 + $0x18] sm:$0xff] %v1242
    %s1249 = scalar_lea.vmem [#allocation6], 4
    %v1250 = vld [vmem:[%s1249] sm:$0xf]
    %s1251 = scalar_lea.vmem [#allocation8], 4
    %v1252 = vld [vmem:[%s1251] sm:$0xf]
    %v1253 = vld [vmem:[#allocation2] sm:$0xf]
    %v1255 = vsel %vm150, %v1250, 0
    %1257 = vmatprep.subr.mxu0 0.0
    %1258 = vmatpush1.msra.mxu0 0.0
    %1259 = vmatprep.subr.mxu0 0.0
    %1260 = vmatpush1.msra.mxu0 0.0
    %1261 = vmatprep.subr.mxu0 0.0
    %1262 = vmatpush1.msra.mxu0 0.0
    %1263 = vmatprep.subr.mxu0 0.0
    %1264 = vmatpush1.msra.mxu0 0.0
    %1265 = vmatprep.subr.mxu0 0.0
    %1266 = vmatpush1.msra.mxu0 0.0
    %1267 = vmatprep.subr.mxu0 0.0
    %1268 = vmatpush1.msra.mxu0 0.0
    %1269 = vmatprep.subr.mxu0 0.0
    %1270 = vmatpush1.msra.mxu0 0.0
    %1271 = vmatprep.subr.mxu0 0.0
    %1272 = vmatpush1.msra.mxu0 0.0
    %1273 = vmatprep.subr.mxu0 0.0
    %1274 = vmatpush1.msra.mxu0 0.0
    %1275 = vmatprep.subr.mxu0 0.0
    %1276 = vmatpush1.msra.mxu0 0.0
    %1277 = vmatprep.subr.mxu0 0.0
    %1278 = vmatpush1.msra.mxu0 0.0
    %1279 = vmatprep.subr.mxu0 0.0
    %1280 = vmatpush1.msra.mxu0 0.0
    %1281 = vmatprep.subr.mxu0 0.0
    %1282 = vmatpush1.msra.mxu0 %v1136
    %1283 = vmatprep.subr.mxu0 0.0
    %1284 = vmatpush1.msra.mxu0 %v1135
    %1285 = vmatprep.subr.mxu0 0.0
    %1286 = vmatpush1.msra.mxu0 %v1134
    %1287 = vmatprep.subr.mxu0 0.0
    %1288 = vmatpush1.msra.mxu0 %v1133
    %1289 = vmatprep.subr.mxu0 0.0
    %1290 = vmatpush2.msra.mxu0 0.0
    %1291 = vmatprep.subr.mxu0 0.0
    %1292 = vmatpush2.msra.mxu0 0.0
    %1293 = vmatprep.subr.mxu0 0.0
    %1294 = vmatpush2.msra.mxu0 0.0
    %1295 = vmatprep.subr.mxu0 0.0
    %1296 = vmatpush2.msra.mxu0 0.0
    %1297 = vmatprep.subr.mxu0 0.0
    %1298 = vmatpush2.msra.mxu0 0.0
    %1299 = vmatprep.subr.mxu0 0.0
    %1300 = vmatpush2.msra.mxu0 0.0
    %1301 = vmatprep.subr.mxu0 0.0
    %1302 = vmatpush2.msra.mxu0 0.0
    %1303 = vmatprep.subr.mxu0 0.0
    %1304 = vmatpush2.msra.mxu0 0.0
    %1305 = vmatprep.subr.mxu0 0.0
    %1306 = vmatpush2.msra.mxu0 0.0
    %1307 = vmatprep.subr.mxu0 0.0
    %1308 = vmatpush2.msra.mxu0 0.0
    %1309 = vmatprep.subr.mxu0 0.0
    %1310 = vmatpush2.msra.mxu0 0.0
    %1311 = vmatprep.subr.mxu0 0.0
    %1312 = vmatpush2.msra.mxu0 0.0
    %1313 = vmatprep.subr.mxu0 0.0
    %1314 = vmatpush2.msra.mxu0 0.0
    %1315 = vmatprep.subr.mxu0 0.0
    %1316 = vmatpush2.msra.mxu0 0.0
    %1317 = vmatprep.subr.mxu0 0.0
    %1318 = vmatpush2.msra.mxu0 0.0
    %1319 = vmatprep.subr.mxu0 0.0
    %1320 = vmatpush2.msra.mxu0 0.0
    %1321 = vmatprep.mubr.f32.mxu0 0.0
    %1322 = vmatmul.mubr.f32.gmra.mxu0 %v1255
    %v1323 = vpop.f32.mrf.mxu0
    %v1324 = vadd.f32 0.0, %v1323
    %v1325 = vpop.f32.mrf.mxu0
    %1326 = vdwg.mxu0
    %v1327 = vadd.f32 %v1253, %v1324
    %v1328 = vmul.f32 %v1327, 0.5
    %v1329 = vtanh.pop %v1328
    %v1330 = vadd.f32 %v1329, 1.0
    %v1331 = vmul.f32 %v1330, 0.5
    %v1332 = vtanh.pop %v1327
    %1334 = vrot.lane.b32.xlu0 %v1252, 32
    %v1335 = vpop.permute.xlu0 %1334
    %v1337 = vmul.f32 %v1331, %v1335
    %1339 = vrot.lane.b32.xlu0 %v1332, 64
    %v1340 = vpop.permute.xlu0 %1339
    %v1342 = vmul.f32 %v1331, %v1340
    %1344 = vrot.lane.b32.xlu0 %v1342, 32
    %v1345 = vpop.permute.xlu0 %1344
    %v1347 = vadd.f32 %v1337, %v1345
    %v1348 = vtanh.pop %v1347
    %1350 = vrot.lane.b32.xlu0 %v1348, 64
    %v1351 = vpop.permute.xlu0 %1350
    %v1353 = vmul.f32 %v1331, %v1351
    %1355 = vrot.lane.b32.xlu0 %v1353, 32
    %v1356 = vpop.permute.xlu0 %1355
    %s1358 = sadd.s32 0, 32
    %s1359 = scalar_lea.vmem [#allocation15], %s1358
    %1360 = vst.msk [vmem:[%s1359] sm:$0xf] %vm359, %v1356
    %1362 = vrot.lane.b32.xlu0 %v1347, 96
    %v1363 = vpop.permute.xlu0 %1362
    %s1365 = scalar_lea.vmem [#allocation16], %s1358
    %1366 = vst.msk [vmem:[%s1365] sm:$0xf] %vm359, %v1363
    %v1367 = vld [vmem:[%s366] sm:$0xf]
    %v1368 = vsel %vm150, %v1356, 0
    %1370 = vmatprep.subr.mxu0 0.0
    %1371 = vmatpush1.msra.mxu0 0.0
    %1372 = vmatprep.subr.mxu0 0.0
    %1373 = vmatpush1.msra.mxu0 0.0
    %1374 = vmatprep.subr.mxu0 0.0
    %1375 = vmatpush1.msra.mxu0 0.0
    %1376 = vmatprep.subr.mxu0 0.0
    %1377 = vmatpush1.msra.mxu0 0.0
    %1378 = vmatprep.subr.mxu0 0.0
    %1379 = vmatpush1.msra.mxu0 0.0
    %1380 = vmatprep.subr.mxu0 0.0
    %1381 = vmatpush1.msra.mxu0 0.0
    %1382 = vmatprep.subr.mxu0 0.0
    %1383 = vmatpush1.msra.mxu0 0.0
    %1384 = vmatprep.subr.mxu0 0.0
    %1385 = vmatpush1.msra.mxu0 0.0
    %1386 = vmatprep.subr.mxu0 0.0
    %1387 = vmatpush1.msra.mxu0 0.0
    %1388 = vmatprep.subr.mxu0 0.0
    %1389 = vmatpush1.msra.mxu0 0.0
    %1390 = vmatprep.subr.mxu0 0.0
    %1391 = vmatpush1.msra.mxu0 0.0
    %1392 = vmatprep.subr.mxu0 0.0
    %1393 = vmatpush1.msra.mxu0 0.0
    %1394 = vmatprep.subr.mxu0 0.0
    %1395 = vmatpush1.msra.mxu0 %v1136
    %1396 = vmatprep.subr.mxu0 0.0
    %1397 = vmatpush1.msra.mxu0 %v1135
    %1398 = vmatprep.subr.mxu0 0.0
    %1399 = vmatpush1.msra.mxu0 %v1134
    %1400 = vmatprep.subr.mxu0 0.0
    %1401 = vmatpush1.msra.mxu0 %v1133
    %1402 = vmatprep.subr.mxu0 0.0
    %1403 = vmatpush2.msra.mxu0 0.0
    %1404 = vmatprep.subr.mxu0 0.0
    %1405 = vmatpush2.msra.mxu0 0.0
    %1406 = vmatprep.subr.mxu0 0.0
    %1407 = vmatpush2.msra.mxu0 0.0
    %1408 = vmatprep.subr.mxu0 0.0
    %1409 = vmatpush2.msra.mxu0 0.0
    %1410 = vmatprep.subr.mxu0 0.0
    %1411 = vmatpush2.msra.mxu0 0.0
    %1412 = vmatprep.subr.mxu0 0.0
    %1413 = vmatpush2.msra.mxu0 0.0
    %1414 = vmatprep.subr.mxu0 0.0
    %1415 = vmatpush2.msra.mxu0 0.0
    %1416 = vmatprep.subr.mxu0 0.0
    %1417 = vmatpush2.msra.mxu0 0.0
    %1418 = vmatprep.subr.mxu0 0.0
    %1419 = vmatpush2.msra.mxu0 0.0
    %1420 = vmatprep.subr.mxu0 0.0
    %1421 = vmatpush2.msra.mxu0 0.0
    %1422 = vmatprep.subr.mxu0 0.0
    %1423 = vmatpush2.msra.mxu0 0.0
    %1424 = vmatprep.subr.mxu0 0.0
    %1425 = vmatpush2.msra.mxu0 0.0
    %1426 = vmatprep.subr.mxu0 0.0
    %1427 = vmatpush2.msra.mxu0 0.0
    %1428 = vmatprep.subr.mxu0 0.0
    %1429 = vmatpush2.msra.mxu0 0.0
    %1430 = vmatprep.subr.mxu0 0.0
    %1431 = vmatpush2.msra.mxu0 0.0
    %1432 = vmatprep.subr.mxu0 0.0
    %1433 = vmatpush2.msra.mxu0 0.0
    %1434 = vmatprep.mubr.f32.mxu0 0.0
    %1435 = vmatmul.mubr.f32.gmra.mxu0 %v1368
    %v1436 = vpop.f32.mrf.mxu0
    %v1437 = vadd.f32 0.0, %v1436
    %v1438 = vpop.f32.mrf.mxu0
    %1439 = vdwg.mxu0
    %v1440 = vadd.f32 %v1367, %v1437
    %v1441 = vmul.f32 %v1440, 0.5
    %v1442 = vtanh.pop %v1441
    %v1443 = vadd.f32 %v1442, 1.0
    %v1444 = vmul.f32 %v1443, 0.5
    %v1445 = vtanh.pop %v1440
    %v1446 = vmul.f32 %v1444, %v1347
    %1448 = vrot.lane.b32.xlu0 %v1445, 64
    %v1449 = vpop.permute.xlu0 %1448
    %v1451 = vmul.f32 %v1444, %v1449
    %1453 = vrot.lane.b32.xlu0 %v1451, 32
    %v1454 = vpop.permute.xlu0 %1453
    %v1456 = vadd.f32 %v1446, %v1454
    %v1457 = vtanh.pop %v1456
    %1459 = vrot.lane.b32.xlu0 %v1457, 64
    %v1460 = vpop.permute.xlu0 %1459
    %v1462 = vmul.f32 %v1444, %v1460
    %1464 = vrot.lane.b32.xlu0 %v1462, 32
    %v1465 = vpop.permute.xlu0 %1464
    %s1467 = sadd.s32 4, 32
    %s1468 = scalar_lea.vmem [#allocation15], %s1467
    %1469 = vst.msk [vmem:[%s1468] sm:$0xf] %vm359, %v1465
    %1471 = vrot.lane.b32.xlu0 %v1456, 96
    %v1472 = vpop.permute.xlu0 %1471
    %s1474 = scalar_lea.vmem [#allocation16], %s1467
    %1475 = vst.msk [vmem:[%s1474] sm:$0xf] %vm359, %v1472
    %v1476 = vld [vmem:[%s475] sm:$0xf]
    %v1477 = vsel %vm150, %v1465, 0
    %1479 = vmatprep.subr.mxu0 0.0
    %1480 = vmatpush1.msra.mxu0 0.0
    %1481 = vmatprep.subr.mxu0 0.0
    %1482 = vmatpush1.msra.mxu0 0.0
    %1483 = vmatprep.subr.mxu0 0.0
    %1484 = vmatpush1.msra.mxu0 0.0
    %1485 = vmatprep.subr.mxu0 0.0
    %1486 = vmatpush1.msra.mxu0 0.0
    %1487 = vmatprep.subr.mxu0 0.0
    %1488 = vmatpush1.msra.mxu0 0.0
    %1489 = vmatprep.subr.mxu0 0.0
    %1490 = vmatpush1.msra.mxu0 0.0
    %1491 = vmatprep.subr.mxu0 0.0
    %1492 = vmatpush1.msra.mxu0 0.0
    %1493 = vmatprep.subr.mxu0 0.0
    %1494 = vmatpush1.msra.mxu0 0.0
    %1495 = vmatprep.subr.mxu0 0.0
    %1496 = vmatpush1.msra.mxu0 0.0
    %1497 = vmatprep.subr.mxu0 0.0
    %1498 = vmatpush1.msra.mxu0 0.0
    %1499 = vmatprep.subr.mxu0 0.0
    %1500 = vmatpush1.msra.mxu0 0.0
    %1501 = vmatprep.subr.mxu0 0.0
    %1502 = vmatpush1.msra.mxu0 0.0
    %1503 = vmatprep.subr.mxu0 0.0
    %1504 = vmatpush1.msra.mxu0 %v1136
    %1505 = vmatprep.subr.mxu0 0.0
    %1506 = vmatpush1.msra.mxu0 %v1135
    %1507 = vmatprep.subr.mxu0 0.0
    %1508 = vmatpush1.msra.mxu0 %v1134
    %1509 = vmatprep.subr.mxu0 0.0
    %1510 = vmatpush1.msra.mxu0 %v1133
    %1511 = vmatprep.subr.mxu0 0.0
    %1512 = vmatpush2.msra.mxu0 0.0
    %1513 = vmatprep.subr.mxu0 0.0
    %1514 = vmatpush2.msra.mxu0 0.0
    %1515 = vmatprep.subr.mxu0 0.0
    %1516 = vmatpush2.msra.mxu0 0.0
    %1517 = vmatprep.subr.mxu0 0.0
    %1518 = vmatpush2.msra.mxu0 0.0
    %1519 = vmatprep.subr.mxu0 0.0
    %1520 = vmatpush2.msra.mxu0 0.0
    %1521 = vmatprep.subr.mxu0 0.0
    %1522 = vmatpush2.msra.mxu0 0.0
    %1523 = vmatprep.subr.mxu0 0.0
    %1524 = vmatpush2.msra.mxu0 0.0
    %1525 = vmatprep.subr.mxu0 0.0
    %1526 = vmatpush2.msra.mxu0 0.0
    %1527 = vmatprep.subr.mxu0 0.0
    %1528 = vmatpush2.msra.mxu0 0.0
    %1529 = vmatprep.subr.mxu0 0.0
    %1530 = vmatpush2.msra.mxu0 0.0
    %1531 = vmatprep.subr.mxu0 0.0
    %1532 = vmatpush2.msra.mxu0 0.0
    %1533 = vmatprep.subr.mxu0 0.0
    %1534 = vmatpush2.msra.mxu0 0.0
    %1535 = vmatprep.subr.mxu0 0.0
    %1536 = vmatpush2.msra.mxu0 0.0
    %1537 = vmatprep.subr.mxu0 0.0
    %1538 = vmatpush2.msra.mxu0 0.0
    %1539 = vmatprep.subr.mxu0 0.0
    %1540 = vmatpush2.msra.mxu0 0.0
    %1541 = vmatprep.subr.mxu0 0.0
    %1542 = vmatpush2.msra.mxu0 0.0
    %1543 = vmatprep.mubr.f32.mxu0 0.0
    %1544 = vmatmul.mubr.f32.gmra.mxu0 %v1477
    %v1545 = vpop.f32.mrf.mxu0
    %v1546 = vadd.f32 0.0, %v1545
    %v1547 = vpop.f32.mrf.mxu0
    %1548 = vdwg.mxu0
    %v1549 = vadd.f32 %v1476, %v1546
    %v1550 = vmul.f32 %v1549, 0.5
    %v1551 = vtanh.pop %v1550
    %v1552 = vadd.f32 %v1551, 1.0
    %v1553 = vmul.f32 %v1552, 0.5
    %v1554 = vtanh.pop %v1549
    %v1555 = vmul.f32 %v1553, %v1456
    %1557 = vrot.lane.b32.xlu0 %v1554, 64
    %v1558 = vpop.permute.xlu0 %1557
    %v1560 = vmul.f32 %v1553, %v1558
    %1562 = vrot.lane.b32.xlu0 %v1560, 32
    %v1563 = vpop.permute.xlu0 %1562
    %v1565 = vadd.f32 %v1555, %v1563
    %v1566 = vtanh.pop %v1565
    %1568 = vrot.lane.b32.xlu0 %v1566, 64
    %v1569 = vpop.permute.xlu0 %1568
    %v1571 = vmul.f32 %v1553, %v1569
    %1573 = vrot.lane.b32.xlu0 %v1571, 32
    %v1574 = vpop.permute.xlu0 %1573
    %s1576 = sadd.s32 8, 32
    %s1577 = scalar_lea.vmem [#allocation15], %s1576
    %1578 = vst.msk [vmem:[%s1577] sm:$0xf] %vm359, %v1574
    %1580 = vrot.lane.b32.xlu0 %v1565, 96
    %v1581 = vpop.permute.xlu0 %1580
    %s1583 = scalar_lea.vmem [#allocation16], %s1576
    %1584 = vst.msk [vmem:[%s1583] sm:$0xf] %vm359, %v1581
    %v1585 = vld [vmem:[%s584] sm:$0xf]
    %v1586 = vsel %vm150, %v1574, 0
    %1588 = vmatprep.subr.mxu0 0.0
    %1589 = vmatpush1.msra.mxu0 0.0
    %1590 = vmatprep.subr.mxu0 0.0
    %1591 = vmatpush1.msra.mxu0 0.0
    %1592 = vmatprep.subr.mxu0 0.0
    %1593 = vmatpush1.msra.mxu0 0.0
    %1594 = vmatprep.subr.mxu0 0.0
    %1595 = vmatpush1.msra.mxu0 0.0
    %1596 = vmatprep.subr.mxu0 0.0
    %1597 = vmatpush1.msra.mxu0 0.0
    %1598 = vmatprep.subr.mxu0 0.0
    %1599 = vmatpush1.msra.mxu0 0.0
    %1600 = vmatprep.subr.mxu0 0.0
    %1601 = vmatpush1.msra.mxu0 0.0
    %1602 = vmatprep.subr.mxu0 0.0
    %1603 = vmatpush1.msra.mxu0 0.0
    %1604 = vmatprep.subr.mxu0 0.0
    %1605 = vmatpush1.msra.mxu0 0.0
    %1606 = vmatprep.subr.mxu0 0.0
    %1607 = vmatpush1.msra.mxu0 0.0
    %1608 = vmatprep.subr.mxu0 0.0
    %1609 = vmatpush1.msra.mxu0 0.0
    %1610 = vmatprep.subr.mxu0 0.0
    %1611 = vmatpush1.msra.mxu0 0.0
    %1612 = vmatprep.subr.mxu0 0.0
    %1613 = vmatpush1.msra.mxu0 %v1136
    %1614 = vmatprep.subr.mxu0 0.0
    %1615 = vmatpush1.msra.mxu0 %v1135
    %1616 = vmatprep.subr.mxu0 0.0
    %1617 = vmatpush1.msra.mxu0 %v1134
    %1618 = vmatprep.subr.mxu0 0.0
    %1619 = vmatpush1.msra.mxu0 %v1133
    %1620 = vmatprep.subr.mxu0 0.0
    %1621 = vmatpush2.msra.mxu0 0.0
    %1622 = vmatprep.subr.mxu0 0.0
    %1623 = vmatpush2.msra.mxu0 0.0
    %1624 = vmatprep.subr.mxu0 0.0
    %1625 = vmatpush2.msra.mxu0 0.0
    %1626 = vmatprep.subr.mxu0 0.0
    %1627 = vmatpush2.msra.mxu0 0.0
    %1628 = vmatprep.subr.mxu0 0.0
    %1629 = vmatpush2.msra.mxu0 0.0
    %1630 = vmatprep.subr.mxu0 0.0
    %1631 = vmatpush2.msra.mxu0 0.0
    %1632 = vmatprep.subr.mxu0 0.0
    %1633 = vmatpush2.msra.mxu0 0.0
    %1634 = vmatprep.subr.mxu0 0.0
    %1635 = vmatpush2.msra.mxu0 0.0
    %1636 = vmatprep.subr.mxu0 0.0
    %1637 = vmatpush2.msra.mxu0 0.0
    %1638 = vmatprep.subr.mxu0 0.0
    %1639 = vmatpush2.msra.mxu0 0.0
    %1640 = vmatprep.subr.mxu0 0.0
    %1641 = vmatpush2.msra.mxu0 0.0
    %1642 = vmatprep.subr.mxu0 0.0
    %1643 = vmatpush2.msra.mxu0 0.0
    %1644 = vmatprep.subr.mxu0 0.0
    %1645 = vmatpush2.msra.mxu0 0.0
    %1646 = vmatprep.subr.mxu0 0.0
    %1647 = vmatpush2.msra.mxu0 0.0
    %1648 = vmatprep.subr.mxu0 0.0
    %1649 = vmatpush2.msra.mxu0 0.0
    %1650 = vmatprep.subr.mxu0 0.0
    %1651 = vmatpush2.msra.mxu0 0.0
    %1652 = vmatprep.mubr.f32.mxu0 0.0
    %1653 = vmatmul.mubr.f32.gmra.mxu0 %v1586
    %v1654 = vpop.f32.mrf.mxu0
    %v1655 = vadd.f32 0.0, %v1654
    %v1656 = vpop.f32.mrf.mxu0
    %1657 = vdwg.mxu0
    %v1658 = vadd.f32 %v1585, %v1655
    %v1659 = vmul.f32 %v1658, 0.5
    %v1660 = vtanh.pop %v1659
    %v1661 = vadd.f32 %v1660, 1.0
    %v1662 = vmul.f32 %v1661, 0.5
    %v1663 = vtanh.pop %v1658
    %v1664 = vmul.f32 %v1662, %v1565
    %1666 = vrot.lane.b32.xlu0 %v1663, 64
    %v1667 = vpop.permute.xlu0 %1666
    %v1669 = vmul.f32 %v1662, %v1667
    %1671 = vrot.lane.b32.xlu0 %v1669, 32
    %v1672 = vpop.permute.xlu0 %1671
    %v1674 = vadd.f32 %v1664, %v1672
    %v1675 = vtanh.pop %v1674
    %1677 = vrot.lane.b32.xlu0 %v1675, 64
    %v1678 = vpop.permute.xlu0 %1677
    %v1680 = vmul.f32 %v1662, %v1678
    %1682 = vrot.lane.b32.xlu0 %v1680, 32
    %v1683 = vpop.permute.xlu0 %1682
    %s1685 = sadd.s32 12, 32
    %s1686 = scalar_lea.vmem [#allocation15], %s1685
    %1687 = vst.msk [vmem:[%s1686] sm:$0xf] %vm359, %v1683
    %1689 = vrot.lane.b32.xlu0 %v1674, 96
    %v1690 = vpop.permute.xlu0 %1689
    %s1692 = scalar_lea.vmem [#allocation16], %s1685
    %1693 = vst.msk [vmem:[%s1692] sm:$0xf] %vm359, %v1690
    %v1694 = vld [vmem:[%s693] sm:$0xf]
    %v1695 = vsel %vm150, %v1683, 0
    %1697 = vmatprep.subr.mxu0 0.0
    %1698 = vmatpush1.msra.mxu0 0.0
    %1699 = vmatprep.subr.mxu0 0.0
    %1700 = vmatpush1.msra.mxu0 0.0
    %1701 = vmatprep.subr.mxu0 0.0
    %1702 = vmatpush1.msra.mxu0 0.0
    %1703 = vmatprep.subr.mxu0 0.0
    %1704 = vmatpush1.msra.mxu0 0.0
    %1705 = vmatprep.subr.mxu0 0.0
    %1706 = vmatpush1.msra.mxu0 0.0
    %1707 = vmatprep.subr.mxu0 0.0
    %1708 = vmatpush1.msra.mxu0 0.0
    %1709 = vmatprep.subr.mxu0 0.0
    %1710 = vmatpush1.msra.mxu0 0.0
    %1711 = vmatprep.subr.mxu0 0.0
    %1712 = vmatpush1.msra.mxu0 0.0
    %1713 = vmatprep.subr.mxu0 0.0
    %1714 = vmatpush1.msra.mxu0 0.0
    %1715 = vmatprep.subr.mxu0 0.0
    %1716 = vmatpush1.msra.mxu0 0.0
    %1717 = vmatprep.subr.mxu0 0.0
    %1718 = vmatpush1.msra.mxu0 0.0
    %1719 = vmatprep.subr.mxu0 0.0
    %1720 = vmatpush1.msra.mxu0 0.0
    %1721 = vmatprep.subr.mxu0 0.0
    %1722 = vmatpush1.msra.mxu0 %v1136
    %1723 = vmatprep.subr.mxu0 0.0
    %1724 = vmatpush1.msra.mxu0 %v1135
    %1725 = vmatprep.subr.mxu0 0.0
    %1726 = vmatpush1.msra.mxu0 %v1134
    %1727 = vmatprep.subr.mxu0 0.0
    %1728 = vmatpush1.msra.mxu0 %v1133
    %1729 = vmatprep.subr.mxu0 0.0
    %1730 = vmatpush2.msra.mxu0 0.0
    %1731 = vmatprep.subr.mxu0 0.0
    %1732 = vmatpush2.msra.mxu0 0.0
    %1733 = vmatprep.subr.mxu0 0.0
    %1734 = vmatpush2.msra.mxu0 0.0
    %1735 = vmatprep.subr.mxu0 0.0
    %1736 = vmatpush2.msra.mxu0 0.0
    %1737 = vmatprep.subr.mxu0 0.0
    %1738 = vmatpush2.msra.mxu0 0.0
    %1739 = vmatprep.subr.mxu0 0.0
    %1740 = vmatpush2.msra.mxu0 0.0
    %1741 = vmatprep.subr.mxu0 0.0
    %1742 = vmatpush2.msra.mxu0 0.0
    %1743 = vmatprep.subr.mxu0 0.0
    %1744 = vmatpush2.msra.mxu0 0.0
    %1745 = vmatprep.subr.mxu0 0.0
    %1746 = vmatpush2.msra.mxu0 0.0
    %1747 = vmatprep.subr.mxu0 0.0
    %1748 = vmatpush2.msra.mxu0 0.0
    %1749 = vmatprep.subr.mxu0 0.0
    %1750 = vmatpush2.msra.mxu0 0.0
    %1751 = vmatprep.subr.mxu0 0.0
    %1752 = vmatpush2.msra.mxu0 0.0
    %1753 = vmatprep.subr.mxu0 0.0
    %1754 = vmatpush2.msra.mxu0 0.0
    %1755 = vmatprep.subr.mxu0 0.0
    %1756 = vmatpush2.msra.mxu0 0.0
    %1757 = vmatprep.subr.mxu0 0.0
    %1758 = vmatpush2.msra.mxu0 0.0
    %1759 = vmatprep.subr.mxu0 0.0
    %1760 = vmatpush2.msra.mxu0 0.0
    %1761 = vmatprep.mubr.f32.mxu0 0.0
    %1762 = vmatmul.mubr.f32.gmra.mxu0 %v1695
    %v1763 = vpop.f32.mrf.mxu0
    %v1764 = vadd.f32 0.0, %v1763
    %v1765 = vpop.f32.mrf.mxu0
    %1766 = vdwg.mxu0
    %v1767 = vadd.f32 %v1694, %v1764
    %v1768 = vmul.f32 %v1767, 0.5
    %v1769 = vtanh.pop %v1768
    %v1770 = vadd.f32 %v1769, 1.0
    %v1771 = vmul.f32 %v1770, 0.5
    %v1772 = vtanh.pop %v1767
    %v1773 = vmul.f32 %v1771, %v1674
    %1775 = vrot.lane.b32.xlu0 %v1772, 64
    %v1776 = vpop.permute.xlu0 %1775
    %v1778 = vmul.f32 %v1771, %v1776
    %1780 = vrot.lane.b32.xlu0 %v1778, 32
    %v1781 = vpop.permute.xlu0 %1780
    %v1783 = vadd.f32 %v1773, %v1781
    %v1784 = vtanh.pop %v1783
    %1786 = vrot.lane.b32.xlu0 %v1784, 64
    %v1787 = vpop.permute.xlu0 %1786
    %v1789 = vmul.f32 %v1771, %v1787
    %1791 = vrot.lane.b32.xlu0 %v1789, 32
    %v1792 = vpop.permute.xlu0 %1791
    %s1794 = sadd.s32 16, 32
    %s1795 = scalar_lea.vmem [#allocation15], %s1794
    %1796 = vst.msk [vmem:[%s1795] sm:$0xf] %vm359, %v1792
    %1798 = vrot.lane.b32.xlu0 %v1783, 96
    %v1799 = vpop.permute.xlu0 %1798
    %s1801 = scalar_lea.vmem [#allocation16], %s1794
    %1802 = vst.msk [vmem:[%s1801] sm:$0xf] %vm359, %v1799
    %v1803 = vld [vmem:[%s802] sm:$0xf]
    %v1804 = vsel %vm150, %v1792, 0
    %1806 = vmatprep.subr.mxu0 0.0
    %1807 = vmatpush1.msra.mxu0 0.0
    %1808 = vmatprep.subr.mxu0 0.0
    %1809 = vmatpush1.msra.mxu0 0.0
    %1810 = vmatprep.subr.mxu0 0.0
    %1811 = vmatpush1.msra.mxu0 0.0
    %1812 = vmatprep.subr.mxu0 0.0
    %1813 = vmatpush1.msra.mxu0 0.0
    %1814 = vmatprep.subr.mxu0 0.0
    %1815 = vmatpush1.msra.mxu0 0.0
    %1816 = vmatprep.subr.mxu0 0.0
    %1817 = vmatpush1.msra.mxu0 0.0
    %1818 = vmatprep.subr.mxu0 0.0
    %1819 = vmatpush1.msra.mxu0 0.0
    %1820 = vmatprep.subr.mxu0 0.0
    %1821 = vmatpush1.msra.mxu0 0.0
    %1822 = vmatprep.subr.mxu0 0.0
    %1823 = vmatpush1.msra.mxu0 0.0
    %1824 = vmatprep.subr.mxu0 0.0
    %1825 = vmatpush1.msra.mxu0 0.0
    %1826 = vmatprep.subr.mxu0 0.0
    %1827 = vmatpush1.msra.mxu0 0.0
    %1828 = vmatprep.subr.mxu0 0.0
    %1829 = vmatpush1.msra.mxu0 0.0
    %1830 = vmatprep.subr.mxu0 0.0
    %1831 = vmatpush1.msra.mxu0 %v1136
    %1832 = vmatprep.subr.mxu0 0.0
    %1833 = vmatpush1.msra.mxu0 %v1135
    %1834 = vmatprep.subr.mxu0 0.0
    %1835 = vmatpush1.msra.mxu0 %v1134
    %1836 = vmatprep.subr.mxu0 0.0
    %1837 = vmatpush1.msra.mxu0 %v1133
    %1838 = vmatprep.subr.mxu0 0.0
    %1839 = vmatpush2.msra.mxu0 0.0
    %1840 = vmatprep.subr.mxu0 0.0
    %1841 = vmatpush2.msra.mxu0 0.0
    %1842 = vmatprep.subr.mxu0 0.0
    %1843 = vmatpush2.msra.mxu0 0.0
    %1844 = vmatprep.subr.mxu0 0.0
    %1845 = vmatpush2.msra.mxu0 0.0
    %1846 = vmatprep.subr.mxu0 0.0
    %1847 = vmatpush2.msra.mxu0 0.0
    %1848 = vmatprep.subr.mxu0 0.0
    %1849 = vmatpush2.msra.mxu0 0.0
    %1850 = vmatprep.subr.mxu0 0.0
    %1851 = vmatpush2.msra.mxu0 0.0
    %1852 = vmatprep.subr.mxu0 0.0
    %1853 = vmatpush2.msra.mxu0 0.0
    %1854 = vmatprep.subr.mxu0 0.0
    %1855 = vmatpush2.msra.mxu0 0.0
    %1856 = vmatprep.subr.mxu0 0.0
    %1857 = vmatpush2.msra.mxu0 0.0
    %1858 = vmatprep.subr.mxu0 0.0
    %1859 = vmatpush2.msra.mxu0 0.0
    %1860 = vmatprep.subr.mxu0 0.0
    %1861 = vmatpush2.msra.mxu0 0.0
    %1862 = vmatprep.subr.mxu0 0.0
    %1863 = vmatpush2.msra.mxu0 0.0
    %1864 = vmatprep.subr.mxu0 0.0
    %1865 = vmatpush2.msra.mxu0 0.0
    %1866 = vmatprep.subr.mxu0 0.0
    %1867 = vmatpush2.msra.mxu0 0.0
    %1868 = vmatprep.subr.mxu0 0.0
    %1869 = vmatpush2.msra.mxu0 0.0
    %1870 = vmatprep.mubr.f32.mxu0 0.0
    %1871 = vmatmul.mubr.f32.gmra.mxu0 %v1804
    %v1872 = vpop.f32.mrf.mxu0
    %v1873 = vadd.f32 0.0, %v1872
    %v1874 = vpop.f32.mrf.mxu0
    %1875 = vdwg.mxu0
    %v1876 = vadd.f32 %v1803, %v1873
    %v1877 = vmul.f32 %v1876, 0.5
    %v1878 = vtanh.pop %v1877
    %v1879 = vadd.f32 %v1878, 1.0
    %v1880 = vmul.f32 %v1879, 0.5
    %v1881 = vtanh.pop %v1876
    %v1882 = vmul.f32 %v1880, %v1783
    %1884 = vrot.lane.b32.xlu0 %v1881, 64
    %v1885 = vpop.permute.xlu0 %1884
    %v1887 = vmul.f32 %v1880, %v1885
    %1889 = vrot.lane.b32.xlu0 %v1887, 32
    %v1890 = vpop.permute.xlu0 %1889
    %v1892 = vadd.f32 %v1882, %v1890
    %v1893 = vtanh.pop %v1892
    %1895 = vrot.lane.b32.xlu0 %v1893, 64
    %v1896 = vpop.permute.xlu0 %1895
    %v1898 = vmul.f32 %v1880, %v1896
    %1900 = vrot.lane.b32.xlu0 %v1898, 32
    %v1901 = vpop.permute.xlu0 %1900
    %s1903 = sadd.s32 20, 32
    %s1904 = scalar_lea.vmem [#allocation15], %s1903
    %1905 = vst.msk [vmem:[%s1904] sm:$0xf] %vm359, %v1901
    %1907 = vrot.lane.b32.xlu0 %v1892, 96
    %v1908 = vpop.permute.xlu0 %1907
    %s1910 = scalar_lea.vmem [#allocation16], %s1903
    %1911 = vst.msk [vmem:[%s1910] sm:$0xf] %vm359, %v1908
    %v1912 = vld [vmem:[%s911] sm:$0xf]
    %v1913 = vsel %vm150, %v1901, 0
    %1915 = vmatprep.subr.mxu0 0.0
    %1916 = vmatpush1.msra.mxu0 0.0
    %1917 = vmatprep.subr.mxu0 0.0
    %1918 = vmatpush1.msra.mxu0 0.0
    %1919 = vmatprep.subr.mxu0 0.0
    %1920 = vmatpush1.msra.mxu0 0.0
    %1921 = vmatprep.subr.mxu0 0.0
    %1922 = vmatpush1.msra.mxu0 0.0
    %1923 = vmatprep.subr.mxu0 0.0
    %1924 = vmatpush1.msra.mxu0 0.0
    %1925 = vmatprep.subr.mxu0 0.0
    %1926 = vmatpush1.msra.mxu0 0.0
    %1927 = vmatprep.subr.mxu0 0.0
    %1928 = vmatpush1.msra.mxu0 0.0
    %1929 = vmatprep.subr.mxu0 0.0
    %1930 = vmatpush1.msra.mxu0 0.0
    %1931 = vmatprep.subr.mxu0 0.0
    %1932 = vmatpush1.msra.mxu0 0.0
    %1933 = vmatprep.subr.mxu0 0.0
    %1934 = vmatpush1.msra.mxu0 0.0
    %1935 = vmatprep.subr.mxu0 0.0
    %1936 = vmatpush1.msra.mxu0 0.0
    %1937 = vmatprep.subr.mxu0 0.0
    %1938 = vmatpush1.msra.mxu0 0.0
    %1939 = vmatprep.subr.mxu0 0.0
    %1940 = vmatpush1.msra.mxu0 %v1136
    %1941 = vmatprep.subr.mxu0 0.0
    %1942 = vmatpush1.msra.mxu0 %v1135
    %1943 = vmatprep.subr.mxu0 0.0
    %1944 = vmatpush1.msra.mxu0 %v1134
    %1945 = vmatprep.subr.mxu0 0.0
    %1946 = vmatpush1.msra.mxu0 %v1133
    %1947 = vmatprep.subr.mxu0 0.0
    %1948 = vmatpush2.msra.mxu0 0.0
    %1949 = vmatprep.subr.mxu0 0.0
    %1950 = vmatpush2.msra.mxu0 0.0
    %1951 = vmatprep.subr.mxu0 0.0
    %1952 = vmatpush2.msra.mxu0 0.0
    %1953 = vmatprep.subr.mxu0 0.0
    %1954 = vmatpush2.msra.mxu0 0.0
    %1955 = vmatprep.subr.mxu0 0.0
    %1956 = vmatpush2.msra.mxu0 0.0
    %1957 = vmatprep.subr.mxu0 0.0
    %1958 = vmatpush2.msra.mxu0 0.0
    %1959 = vmatprep.subr.mxu0 0.0
    %1960 = vmatpush2.msra.mxu0 0.0
    %1961 = vmatprep.subr.mxu0 0.0
    %1962 = vmatpush2.msra.mxu0 0.0
    %1963 = vmatprep.subr.mxu0 0.0
    %1964 = vmatpush2.msra.mxu0 0.0
    %1965 = vmatprep.subr.mxu0 0.0
    %1966 = vmatpush2.msra.mxu0 0.0
    %1967 = vmatprep.subr.mxu0 0.0
    %1968 = vmatpush2.msra.mxu0 0.0
    %1969 = vmatprep.subr.mxu0 0.0
    %1970 = vmatpush2.msra.mxu0 0.0
    %1971 = vmatprep.subr.mxu0 0.0
    %1972 = vmatpush2.msra.mxu0 0.0
    %1973 = vmatprep.subr.mxu0 0.0
    %1974 = vmatpush2.msra.mxu0 0.0
    %1975 = vmatprep.subr.mxu0 0.0
    %1976 = vmatpush2.msra.mxu0 0.0
    %1977 = vmatprep.subr.mxu0 0.0
    %1978 = vmatpush2.msra.mxu0 0.0
    %1979 = vmatprep.mubr.f32.mxu0 0.0
    %1980 = vmatmul.mubr.f32.gmra.mxu0 %v1913
    %v1981 = vpop.f32.mrf.mxu0
    %v1982 = vadd.f32 0.0, %v1981
    %v1983 = vpop.f32.mrf.mxu0
    %1984 = vdwg.mxu0
    %v1985 = vadd.f32 %v1912, %v1982
    %v1986 = vmul.f32 %v1985, 0.5
    %v1987 = vtanh.pop %v1986
    %v1988 = vadd.f32 %v1987, 1.0
    %v1989 = vmul.f32 %v1988, 0.5
    %v1990 = vtanh.pop %v1985
    %v1991 = vmul.f32 %v1989, %v1892
    %1993 = vrot.lane.b32.xlu0 %v1990, 64
    %v1994 = vpop.permute.xlu0 %1993
    %v1996 = vmul.f32 %v1989, %v1994
    %1998 = vrot.lane.b32.xlu0 %v1996, 32
    %v1999 = vpop.permute.xlu0 %1998
    %v2001 = vadd.f32 %v1991, %v1999
    %v2002 = vtanh.pop %v2001
    %2004 = vrot.lane.b32.xlu0 %v2002, 64
    %v2005 = vpop.permute.xlu0 %2004
    %v2007 = vmul.f32 %v1989, %v2005
    %2009 = vrot.lane.b32.xlu0 %v2007, 32
    %v2010 = vpop.permute.xlu0 %2009
    %s2012 = sadd.s32 24, 32
    %s2013 = scalar_lea.vmem [#allocation15], %s2012
    %2014 = vst.msk [vmem:[%s2013] sm:$0xf] %vm359, %v2010
    %2016 = vrot.lane.b32.xlu0 %v2001, 96
    %v2017 = vpop.permute.xlu0 %2016
    %s2019 = scalar_lea.vmem [#allocation16], %s2012
    %2020 = vst.msk [vmem:[%s2019] sm:$0xf] %vm359, %v2017
    %v2021 = vld [vmem:[%s1020] sm:$0xf]
    %v2022 = vsel %vm150, %v2010, 0
    %2024 = vmatprep.subr.mxu0 0.0
    %2025 = vmatpush1.msra.mxu0 0.0
    %2026 = vmatprep.subr.mxu0 0.0
    %2027 = vmatpush1.msra.mxu0 0.0
    %2028 = vmatprep.subr.mxu0 0.0
    %2029 = vmatpush1.msra.mxu0 0.0
    %2030 = vmatprep.subr.mxu0 0.0
    %2031 = vmatpush1.msra.mxu0 0.0
    %2032 = vmatprep.subr.mxu0 0.0
    %2033 = vmatpush1.msra.mxu0 0.0
    %2034 = vmatprep.subr.mxu0 0.0
    %2035 = vmatpush1.msra.mxu0 0.0
    %2036 = vmatprep.subr.mxu0 0.0
    %2037 = vmatpush1.msra.mxu0 0.0
    %2038 = vmatprep.subr.mxu0 0.0
    %2039 = vmatpush1.msra.mxu0 0.0
    %2040 = vmatprep.subr.mxu0 0.0
    %2041 = vmatpush1.msra.mxu0 0.0
    %2042 = vmatprep.subr.mxu0 0.0
    %2043 = vmatpush1.msra.mxu0 0.0
    %2044 = vmatprep.subr.mxu0 0.0
    %2045 = vmatpush1.msra.mxu0 0.0
    %2046 = vmatprep.subr.mxu0 0.0
    %2047 = vmatpush1.msra.mxu0 0.0
    %2048 = vmatprep.subr.mxu0 0.0
    %2049 = vmatpush1.msra.mxu0 %v1136
    %2050 = vmatprep.subr.mxu0 0.0
    %2051 = vmatpush1.msra.mxu0 %v1135
    %2052 = vmatprep.subr.mxu0 0.0
    %2053 = vmatpush1.msra.mxu0 %v1134
    %2054 = vmatprep.subr.mxu0 0.0
    %2055 = vmatpush1.msra.mxu0 %v1133
    %2056 = vmatprep.subr.mxu0 0.0
    %2057 = vmatpush2.msra.mxu0 0.0
    %2058 = vmatprep.subr.mxu0 0.0
    %2059 = vmatpush2.msra.mxu0 0.0
    %2060 = vmatprep.subr.mxu0 0.0
    %2061 = vmatpush2.msra.mxu0 0.0
    %2062 = vmatprep.subr.mxu0 0.0
    %2063 = vmatpush2.msra.mxu0 0.0
    %2064 = vmatprep.subr.mxu0 0.0
    %2065 = vmatpush2.msra.mxu0 0.0
    %2066 = vmatprep.subr.mxu0 0.0
    %2067 = vmatpush2.msra.mxu0 0.0
    %2068 = vmatprep.subr.mxu0 0.0
    %2069 = vmatpush2.msra.mxu0 0.0
    %2070 = vmatprep.subr.mxu0 0.0
    %2071 = vmatpush2.msra.mxu0 0.0
    %2072 = vmatprep.subr.mxu0 0.0
    %2073 = vmatpush2.msra.mxu0 0.0
    %2074 = vmatprep.subr.mxu0 0.0
    %2075 = vmatpush2.msra.mxu0 0.0
    %2076 = vmatprep.subr.mxu0 0.0
    %2077 = vmatpush2.msra.mxu0 0.0
    %2078 = vmatprep.subr.mxu0 0.0
    %2079 = vmatpush2.msra.mxu0 0.0
    %2080 = vmatprep.subr.mxu0 0.0
    %2081 = vmatpush2.msra.mxu0 0.0
    %2082 = vmatprep.subr.mxu0 0.0
    %2083 = vmatpush2.msra.mxu0 0.0
    %2084 = vmatprep.subr.mxu0 0.0
    %2085 = vmatpush2.msra.mxu0 0.0
    %2086 = vmatprep.subr.mxu0 0.0
    %2087 = vmatpush2.msra.mxu0 0.0
    %2088 = vmatprep.mubr.f32.mxu0 0.0
    %2089 = vmatmul.mubr.f32.gmra.mxu0 %v2022
    %v2090 = vpop.f32.mrf.mxu0
    %v2091 = vadd.f32 0.0, %v2090
    %v2092 = vpop.f32.mrf.mxu0
    %2093 = vdwg.mxu0
    %v2094 = vadd.f32 %v2021, %v2091
    %v2095 = vmul.f32 %v2094, 0.5
    %v2096 = vtanh.pop %v2095
    %v2097 = vadd.f32 %v2096, 1.0
    %v2098 = vmul.f32 %v2097, 0.5
    %v2099 = vtanh.pop %v2094
    %v2100 = vmul.f32 %v2098, %v2001
    %2102 = vrot.lane.b32.xlu0 %v2099, 64
    %v2103 = vpop.permute.xlu0 %2102
    %v2105 = vmul.f32 %v2098, %v2103
    %2107 = vrot.lane.b32.xlu0 %v2105, 32
    %v2108 = vpop.permute.xlu0 %2107
    %v2110 = vadd.f32 %v2100, %v2108
    %v2111 = vtanh.pop %v2110
    %2113 = vrot.lane.b32.xlu0 %v2111, 64
    %v2114 = vpop.permute.xlu0 %2113
    %v2116 = vmul.f32 %v2098, %v2114
    %2118 = vrot.lane.b32.xlu0 %v2116, 32
    %v2119 = vpop.permute.xlu0 %2118
    %s2121 = sadd.s32 28, 32
    %s2122 = scalar_lea.vmem [#allocation15], %s2121
    %2123 = vst.msk [vmem:[%s2122] sm:$0xf] %vm359, %v2119
    %2125 = vrot.lane.b32.xlu0 %v2110, 96
    %v2126 = vpop.permute.xlu0 %2125
    %s2128 = scalar_lea.vmem [#allocation16], %s2121
    %2129 = vst.msk [vmem:[%s2128] sm:$0xf] %vm359, %v2126
    // Predicated region
    $region66: #{tpu_custom_call.1} parent=1 // pred_check
      _
    $region67: #{tpu_custom_call.1} parent=1 // pred_check_branch
      %2131 = sbr.rel (0) target = $region69
    $region68: #{tpu_custom_call.1} parent=1 // pred_region
      %s2133 = ssub.s32 1024, 1024
      %2134 = vsyncadd [#allocation5], %s2133
      %s2135 = sshll.u32 [#allocation15], 4
      %s2136 = int_to_ptr.vmem [resolvable:$true] %s2135
      %2141 = dma.vmem_to_hbm [thread:$0]  %s2136, 1024, %s9, [#allocation5], 128, 128, 8
    $region69: #{tpu_custom_call.1} parent=1 // pred_fallthru
      _
    // Predicated region
    $region70: #{tpu_custom_call.1} parent=1 // pred_check
      _
    $region71: #{tpu_custom_call.1} parent=1 // pred_check_branch
      %2143 = sbr.rel (0) target = $region73
    $region72: #{tpu_custom_call.1} parent=1 // pred_region
      %s2145 = ssub.s32 1024, 1024
      %2146 = vsyncadd [#allocation17], %s2145
      %s2147 = sshll.u32 [#allocation16], 4
      %s2148 = int_to_ptr.vmem [resolvable:$true] %s2147
      %2153 = dma.vmem_to_hbm [thread:$0]  %s2148, 1024, %s10, [#allocation17], 128, 128, 8
    $region73: #{tpu_custom_call.1} parent=1 // pred_fallthru
      _
    // Predicated region
    $region74: #{tpu_custom_call.1} parent=1 // pred_check
      _
    $region75: #{tpu_custom_call.1} parent=1 // pred_check_branch
      %2155 = sbr.rel (0) target = $region77
    $region76: #{tpu_custom_call.1} parent=1 // pred_region
      %2156 = dma.done [#allocation5], 1024
    $region77: #{tpu_custom_call.1} parent=1 // pred_fallthru
      _
    // Predicated region
    $region78: #{tpu_custom_call.1} parent=1 // pred_check
      _
    $region79: #{tpu_custom_call.1} parent=1 // pred_check_branch
      %2158 = sbr.rel (0) target = $region81
    $region80: #{tpu_custom_call.1} parent=1 // pred_region
      %2159 = dma.done [#allocation17], 1024
    $region81: #{tpu_custom_call.1} parent=1 // pred_fallthru
      _
    %2160 = vsyncpa [#allocation4], 1
    %2161 = vsyncpa [#allocation7], 1
    %2162 = vsyncpa [#allocation10], 1
    %2163 = vsyncpa [#allocation13], 1
    %2164 = vsyncpa [#allocation5], 1
    %2165 = vsyncpa [#allocation17], 1

</llo_original>
